<compile_context>
chip_gen: v7x
topology: tpu7x:2x2x1
jax: 0.10.0
libtpu: 0.0.40
codegen_flags: <defaults>
</compile_context>

<pallas_src>
import functools

import jax
import jax.numpy as jnp
from jax.experimental import pallas as pl
from jax.experimental.pallas import tpu as pltpu


# -----------------------------------------------------------------------------
# Fused Pallas kernel: 5 x (convT-as-matmul -> BatchNorm -> ReLU), final Tanh.
#
# refs layout:
#   refs[0]            : x slab       (R, Cin0*W)        f32
#   refs[1 + 3l + 0]   : conv matrix  (Cin_l*Hin_l, cols_l)   bf16
#   refs[1 + 3l + 1]   : pool matrix  (cols_l, Cout_l)        bf16 (0/1)
#   refs[1 + 3l + 2]   : gamma/beta   (2, Cout_l)             f32
#   refs[-1]           : output slab  (R, cols_last_padded)   f32
# -----------------------------------------------------------------------------
def _generator_fused_kernel(*refs, eps, num_layers):
    x_ref = refs[0]
    o_ref = refs[-1]
    layer_refs = refs[1:-1]
    rows = x_ref.shape[0]

    h = x_ref[...].astype(jnp.bfloat16)
    for l in range(num_layers):
        m_ref = layer_refs[3 * l]
        p_ref = layer_refs[3 * l + 1]
        gb_ref = layer_refs[3 * l + 2]

        # Transposed convolution as one MXU matmul (bf16 in, f32 accumulate).
        y = jnp.dot(h, m_ref[...], preferred_element_type=jnp.float32)  # (R, cols)
        cols = y.shape[1]

        pool = p_ref[...].astype(jnp.float32)                           # (cols, Co)
        gb = gb_ref[...]                                                # (2, Co)

        # BatchNorm batch stats: column-wise sums, then pool columns into
        # channels with a single stacked matmul: rows = [count, sum, sumsq].
        colsum = jnp.sum(y, axis=0, keepdims=True)                      # (1, cols)
        colsq = jnp.sum(y * y, axis=0, keepdims=True)                   # (1, cols)
        ones = jnp.ones((1, cols), jnp.float32)
        stats_cols = jnp.concatenate([ones, colsum, colsq], axis=0)     # (3, cols)
        stats_ch = jnp.dot(stats_cols, pool,
                           preferred_element_type=jnp.float32)          # (3, Co)

        n = stats_ch[0:1] * float(rows)                                 # N*H*W per ch
        mean = stats_ch[1:2] / n
        var = jnp.maximum(stats_ch[2:3] / n - mean * mean, 0.0)         # biased, >=0
        inv = jax.lax.rsqrt(var + eps)

        scale_ch = gb[0:1] * inv                                        # (1, Co)
        shift_ch = gb[1:2] - mean * scale_ch                            # (1, Co)

        # Broadcast per-channel affine back to columns with the SAME pool
        # matrix (contract over the channel axis -> no broadcast matrix).
        ss_ch = jnp.concatenate([scale_ch, shift_ch], axis=0)           # (2, Co)
        ss_cols = jax.lax.dot_general(
            ss_ch, pool,
            dimension_numbers=(((1,), (1,)), ((), ())),
            preferred_element_type=jnp.float32)                         # (2, cols)

        z = jnp.maximum(y * ss_cols[0:1] + ss_cols[1:2], 0.0)           # BN + ReLU
        if l == num_layers - 1:
            o_ref[...] = jnp.tanh(z).astype(o_ref.dtype)                # final Tanh
        else:
            h = z.astype(jnp.bfloat16)


def _run_fused(x2d, mats, pools, gbs):
    """Single pallas_call over the whole generator (tiny sizes, no grid).

    TODO(synk): at production channel counts (features_g ~ 64) add a
    channel-tiled grid with dimension_semantics=("parallel",) per layer (v7x
    second TensorCore) and tile/eliminate the pool matrices to respect the
    64 MiB v7x VMEM budget; not needed at these test sizes.
    """
    rows = x2d.shape[0]
    cols_out = mats[-1].shape[1]
    operands = [x2d]
    for m, p, gb in zip(mats, pools, gbs):
        operands += [m, p, gb]

    kern = functools.partial(_generator_fused_kernel, eps=1e-5,
                             num_layers=len(mats))
    return pl.pallas_call(
        kern,
        out_shape=jax.ShapeDtypeStruct((rows, cols_out), jnp.float32),
        in_specs=[pl.BlockSpec(memory_space=pltpu.MemorySpace.VMEM)]
                 * len(operands),
        out_specs=pl.BlockSpec(memory_space=pltpu.MemorySpace.VMEM),
    )(*operands)


# -----------------------------------------------------------------------------
# One-time constant preparation (conv matrices, pool matrices, gamma/beta).
# -----------------------------------------------------------------------------
def _build_convT_matrix(w, h_in, h_out):
    """w: (Cin, Cout, KH, 1) ConvTranspose2d weight ->
       M: (Cin*Hin, Cout*Hout) with M[(ci,ih),(co,oh)] = w[ci,co,oh-ih,0]."""
    cin, cout, kh, _ = w.shape
    ih = jnp.arange(h_in)[:, None]
    oh = jnp.arange(h_out)[None, :]
    k = oh - ih                                                     # (Hin, Hout)
    valid = (k >= 0) & (k < kh)
    kc = jnp.clip(k, 0, kh - 1)
    wk = w[:, :, :, 0][:, :, kc]                                    # (Ci,Co,Hin,Hout)
    wk = jnp.where(valid[None, None], wk, 0.0)
    return jnp.transpose(wk, (0, 2, 1, 3)).reshape(cin * h_in, cout * h_out)


def _pool_matrix(cout, per_ch, total_cols):
    """0/1 matrix mapping (co, oh) columns -> channel co; padded cols map to 0."""
    cols = cout * per_ch
    col_ch = jnp.arange(cols, dtype=jnp.int32)[:, None] // per_ch
    ch = jnp.arange(cout, dtype=jnp.int32)[None, :]
    pool = (col_ch == ch).astype(jnp.bfloat16)                      # (cols, Co)
    if total_cols > cols:
        pool = jnp.pad(pool, ((0, total_cols - cols), (0, 0)))
    return pool


def prepare_generator(params, *, width=5, lane=128):
    """Build kernel-ready constants from PyTorch-layout params. Run once."""
    w1 = params["w1"]                                               # (Ci0,C1,5,5)
    ci0, c1, kh1, kw1 = w1.shape
    assert kw1 == width
    # M1[(ci, iw), (co, oh)] = w1[ci, co, oh, iw]
    m1 = jnp.transpose(w1, (0, 3, 1, 2)).reshape(ci0 * kw1, c1 * kh1)

    mats, houts, couts = [m1], [kh1], [c1]
    h = kh1
    for idx in (2, 3, 4, 5):
        w = params[f"w{idx}"]                                       # (Ci,Co,10,1)
        _, co, kh, _ = w.shape
        h_out = h + kh - 1
        mats.append(_build_convT_matrix(w, h, h_out))
        houts.append(h_out)
        couts.append(co)
        h = h_out

    # Lane-pad the final layer's output columns to a multiple of 128.
    real_cols_last = couts[-1] * houts[-1]
    padded_cols_last = ((real_cols_last + lane - 1) // lane) * lane
    mats[-1] = jnp.pad(mats[-1], ((0, 0),
                                  (0, padded_cols_last - real_cols_last)))

    pools, gbs = [], []
    for i, (co, ho) in enumerate(zip(couts, houts)):
        pools.append(_pool_matrix(co, ho, mats[i].shape[1]))
        gbs.append(jnp.stack([params[f"g{i + 1}"],
                              params[f"b{i + 1}"]]).astype(jnp.float32))

    prepared = {
        "emb": params["emb"].astype(jnp.float32),
        "mats": [m.astype(jnp.bfloat16) for m in mats],
        "pools": pools,
        "gbs": gbs,
    }
    meta = {"width": width, "c_out_final": couts[-1], "h_out_final": houts[-1]}
    return prepared, meta


# -----------------------------------------------------------------------------
# Generator forward
# -----------------------------------------------------------------------------
def generator_forward(prepared, x, label, *, meta):
    """x: (B, channels_noise, 1, 1) f32, label: (B,) int32 -> (B, ic, 41, 5)."""
    B = x.shape[0]
    W = meta["width"]

    # Embedding lookup + channel concat (plain-JAX glue).
    emb = jnp.take(prepared["emb"], label, axis=0)                  # (B, l_dim)
    x0 = jnp.concatenate([x[:, :, 0, 0], emb], axis=1)              # (B, Cin0)

    # One-hot spread over the output-width axis so every block is one matmul
    # on a (N*W, C*H) slab: X[(b,w),(ci,iw)] = x0[b,ci] * (iw == w).
    eye_w = jnp.eye(W, dtype=x0.dtype)
    x2d = jnp.einsum("bc,wv->bwcv", x0, eye_w).reshape(B * W, x0.shape[1] * W)

    y = _run_fused(x2d, prepared["mats"], prepared["pools"], prepared["gbs"])

    cfin, hfin = meta["c_out_final"], meta["h_out_final"]
    y = y[:, : cfin * hfin].reshape(B, W, cfin, hfin)
    return jnp.transpose(y, (0, 2, 3, 1))                           # NCHW


# -----------------------------------------------------------------------------
# Deterministic parameter construction (synthetic weights, not a checkpoint).
# -----------------------------------------------------------------------------
def init_params(key, channels_noise, image_channels, features_g, classes,
                l_dim=20):
    ks = jax.random.split(key, 16)
    cin0 = channels_noise + l_dim
    dims = [cin0, features_g * 16, features_g * 8, features_g * 4,
            features_g * 2, image_channels]

    def w(k, ci, co, kh, kw, fan):
        return jax.random.normal(k, (ci, co, kh, kw), jnp.float32) / jnp.sqrt(fan)

    params = {
        "emb": 0.5 * jax.random.normal(ks[0], (classes, l_dim), jnp.float32),
        "w1": w(ks[1], dims[0], dims[1], 5, 5, dims[0] * 25),
        "w2": w(ks[2], dims[1], dims[2], 10, 1, dims[1] * 10),
        "w3": w(ks[3], dims[2], dims[3], 10, 1, dims[2] * 10),
        "w4": w(ks[4], dims[3], dims[4], 10, 1, dims[3] * 10),
        "w5": w(ks[5], dims[4], dims[5], 10, 1, dims[4] * 10),
    }
    for i, c in enumerate(dims[1:], start=1):
        params[f"g{i}"] = 1.0 + 0.1 * jax.random.normal(ks[5 + i], (c,), jnp.float32)
        params[f"b{i}"] = 0.05 * jax.random.normal(ks[10 + i], (c,), jnp.float32)
    return params


if __name__ == "__main__":
    # Small, forward-consistent shapes.
    B = 2
    channels_noise = 8      # z_dim
    image_channels = 1
    features_g = 4
    classes = 5
    l_dim = 20

    key = jax.random.PRNGKey(0)
    k_p, k_x, k_l = jax.random.split(key, 3)

    params = init_params(k_p, channels_noise, image_channels, features_g,
                         classes, l_dim)
    prepared, meta = prepare_generator(params)

    x = jax.random.normal(k_x, (B, channels_noise, 1, 1), jnp.float32)
    label = jax.random.randint(k_l, (B,), 0, classes, jnp.int32)

    fwd = jax.jit(functools.partial(generator_forward, meta=meta))
    out = fwd(prepared, x, label)
    out = jax.block_until_ready(out)

    expected_shape = (B, image_channels, 41, 5)
    assert out.shape == expected_shape, (out.shape, expected_shape)
    assert bool(jnp.all(jnp.isfinite(out)))
    # Output of (BN -> ReLU -> Tanh) must lie in [0, 1].
    assert bool(jnp.all(out >= 0.0)) and bool(jnp.all(out <= 1.0))
    print("KERNEL_OK")
</pallas_src>

<mosaic_0001>
module attributes {stable_mosaic.version = 11 : i64} {
  func.func @_generator_fused_kernel(%arg0: memref<10x140xf32, #tpu.memory_space<vmem>>, %arg1: memref<140x320xbf16, #tpu.memory_space<vmem>>, %arg2: memref<320x64xbf16, #tpu.memory_space<vmem>>, %arg3: memref<2x64xf32, #tpu.memory_space<vmem>>, %arg4: memref<320x448xbf16, #tpu.memory_space<vmem>>, %arg5: memref<448x32xbf16, #tpu.memory_space<vmem>>, %arg6: memref<2x32xf32, #tpu.memory_space<vmem>>, %arg7: memref<448x368xbf16, #tpu.memory_space<vmem>>, %arg8: memref<368x16xbf16, #tpu.memory_space<vmem>>, %arg9: memref<2x16xf32, #tpu.memory_space<vmem>>, %arg10: memref<368x256xbf16, #tpu.memory_space<vmem>>, %arg11: memref<256x8xbf16, #tpu.memory_space<vmem>>, %arg12: memref<2x8xf32, #tpu.memory_space<vmem>>, %arg13: memref<256x128xbf16, #tpu.memory_space<vmem>>, %arg14: memref<128x1xbf16, #tpu.memory_space<vmem>>, %arg15: memref<2x1xf32, #tpu.memory_space<vmem>>, %arg16: memref<10x128xf32, #tpu.memory_space<vmem>>) attributes {dimension_semantics = [], scalar_prefetch = 0 : i64, scratch_operands = 0 : i64, tpu.core_type = #tpu.core_type<tc>} {
    %c0 = arith.constant 0 : index
    %c0_0 = arith.constant 0 : index
    %0 = vector.load %arg0[%c0, %c0_0] : memref<10x140xf32, #tpu.memory_space<vmem>>, vector<10x140xf32>
    %1 = arith.truncf %0 : vector<10x140xf32> to vector<10x140xbf16>
    %c0_1 = arith.constant 0 : index
    %c0_2 = arith.constant 0 : index
    %2 = vector.load %arg1[%c0_1, %c0_2] : memref<140x320xbf16, #tpu.memory_space<vmem>>, vector<140x320xbf16>
    %cst = arith.constant dense<0.000000e+00> : vector<10x320xf32>
    %3 = tpu.matmul %1, %2, %cst {dimension_numbers = #tpu.dot_dimension_numbers<[1], [0], [0], [1], [0, 0, 1, 1], [], []>} : vector<10x140xbf16>, vector<140x320xbf16>, vector<10x320xf32> -> vector<10x320xf32>
    %c0_3 = arith.constant 0 : index
    %c0_4 = arith.constant 0 : index
    %4 = vector.load %arg2[%c0_3, %c0_4] : memref<320x64xbf16, #tpu.memory_space<vmem>>, vector<320x64xbf16>
    %5 = arith.extf %4 : vector<320x64xbf16> to vector<320x64xf32>
    %c0_5 = arith.constant 0 : index
    %c0_6 = arith.constant 0 : index
    %6 = vector.load %arg3[%c0_5, %c0_6] : memref<2x64xf32, #tpu.memory_space<vmem>>, vector<2x64xf32>
    %cst_7 = arith.constant dense<0.000000e+00> : vector<320xf32>
    %7 = vector.multi_reduction <add>, %3, %cst_7 [0] : vector<10x320xf32> to vector<320xf32>
    %8 = vector.shape_cast %7 : vector<320xf32> to vector<1x320xf32>
    %9 = arith.mulf %3, %3 : vector<10x320xf32>
    %cst_8 = arith.constant dense<0.000000e+00> : vector<320xf32>
    %10 = vector.multi_reduction <add>, %9, %cst_8 [0] : vector<10x320xf32> to vector<320xf32>
    %11 = vector.shape_cast %10 : vector<320xf32> to vector<1x320xf32>
    %cst_9 = arith.constant 1.000000e+00 : f32
    %12 = vector.broadcast %cst_9 : f32 to vector<1x320xf32>
    %13 = tpu.concatenate %12, %8, %11 in 0 : vector<1x320xf32>, vector<1x320xf32>, vector<1x320xf32> -> vector<3x320xf32>
    %cst_10 = arith.constant dense<0.000000e+00> : vector<3x64xf32>
    %14 = tpu.matmul %13, %5, %cst_10 {dimension_numbers = #tpu.dot_dimension_numbers<[1], [0], [0], [1], [0, 0, 1, 1], [], []>} : vector<3x320xf32>, vector<320x64xf32>, vector<3x64xf32> -> vector<3x64xf32>
    %15 = vector.extract_strided_slice %14 {offsets = [0, 0], sizes = [1, 64], strides = [1, 1]} : vector<3x64xf32> to vector<1x64xf32>
    %cst_11 = arith.constant 1.000000e+01 : f32
    %16 = vector.broadcast %cst_11 : f32 to vector<1x64xf32>
    %17 = arith.mulf %15, %16 : vector<1x64xf32>
    %18 = vector.extract_strided_slice %14 {offsets = [1, 0], sizes = [1, 64], strides = [1, 1]} : vector<3x64xf32> to vector<1x64xf32>
    %19 = arith.divf %18, %17 : vector<1x64xf32>
    %20 = vector.extract_strided_slice %14 {offsets = [2, 0], sizes = [1, 64], strides = [1, 1]} : vector<3x64xf32> to vector<1x64xf32>
    %21 = arith.divf %20, %17 : vector<1x64xf32>
    %22 = arith.mulf %19, %19 : vector<1x64xf32>
    %23 = arith.subf %21, %22 : vector<1x64xf32>
    %cst_12 = arith.constant 0.000000e+00 : f32
    %24 = vector.broadcast %cst_12 : f32 to vector<1x64xf32>
    %25 = arith.maximumf %23, %24 : vector<1x64xf32>
    %cst_13 = arith.constant 9.99999974E-6 : f32
    %26 = vector.broadcast %cst_13 : f32 to vector<1x64xf32>
    %27 = arith.addf %25, %26 : vector<1x64xf32>
    %28 = math.rsqrt %27 : vector<1x64xf32>
    %29 = vector.extract_strided_slice %6 {offsets = [0, 0], sizes = [1, 64], strides = [1, 1]} : vector<2x64xf32> to vector<1x64xf32>
    %30 = arith.mulf %29, %28 : vector<1x64xf32>
    %31 = vector.extract_strided_slice %6 {offsets = [1, 0], sizes = [1, 64], strides = [1, 1]} : vector<2x64xf32> to vector<1x64xf32>
    %32 = arith.mulf %19, %30 : vector<1x64xf32>
    %33 = arith.subf %31, %32 : vector<1x64xf32>
    %34 = tpu.concatenate %30, %33 in 0 : vector<1x64xf32>, vector<1x64xf32> -> vector<2x64xf32>
    %cst_14 = arith.constant dense<0.000000e+00> : vector<2x320xf32>
    %35 = tpu.matmul %34, %5, %cst_14 {dimension_numbers = #tpu.dot_dimension_numbers<[1], [1], [0], [0], [0, 0, 1, 0], [], []>} : vector<2x64xf32>, vector<320x64xf32>, vector<2x320xf32> -> vector<2x320xf32>
    %36 = vector.extract_strided_slice %35 {offsets = [0, 0], sizes = [1, 320], strides = [1, 1]} : vector<2x320xf32> to vector<1x320xf32>
    %37 = vector.broadcast %36 : vector<1x320xf32> to vector<10x320xf32>
    %38 = arith.mulf %3, %37 : vector<10x320xf32>
    %39 = vector.extract_strided_slice %35 {offsets = [1, 0], sizes = [1, 320], strides = [1, 1]} : vector<2x320xf32> to vector<1x320xf32>
    %40 = vector.broadcast %39 : vector<1x320xf32> to vector<10x320xf32>
    %41 = arith.addf %38, %40 : vector<10x320xf32>
    %cst_15 = arith.constant 0.000000e+00 : f32
    %42 = vector.broadcast %cst_15 : f32 to vector<10x320xf32>
    %43 = arith.maximumf %41, %42 : vector<10x320xf32>
    %44 = arith.truncf %43 : vector<10x320xf32> to vector<10x320xbf16>
    %c0_16 = arith.constant 0 : index
    %c0_17 = arith.constant 0 : index
    %45 = vector.load %arg4[%c0_16, %c0_17] : memref<320x448xbf16, #tpu.memory_space<vmem>>, vector<320x448xbf16>
    %cst_18 = arith.constant dense<0.000000e+00> : vector<10x448xf32>
    %46 = tpu.matmul %44, %45, %cst_18 {dimension_numbers = #tpu.dot_dimension_numbers<[1], [0], [0], [1], [0, 0, 1, 1], [], []>} : vector<10x320xbf16>, vector<320x448xbf16>, vector<10x448xf32> -> vector<10x448xf32>
    %c0_19 = arith.constant 0 : index
    %c0_20 = arith.constant 0 : index
    %47 = vector.load %arg5[%c0_19, %c0_20] : memref<448x32xbf16, #tpu.memory_space<vmem>>, vector<448x32xbf16>
    %48 = arith.extf %47 : vector<448x32xbf16> to vector<448x32xf32>
    %c0_21 = arith.constant 0 : index
    %c0_22 = arith.constant 0 : index
    %49 = vector.load %arg6[%c0_21, %c0_22] : memref<2x32xf32, #tpu.memory_space<vmem>>, vector<2x32xf32>
    %cst_23 = arith.constant dense<0.000000e+00> : vector<448xf32>
    %50 = vector.multi_reduction <add>, %46, %cst_23 [0] : vector<10x448xf32> to vector<448xf32>
    %51 = vector.shape_cast %50 : vector<448xf32> to vector<1x448xf32>
    %52 = arith.mulf %46, %46 : vector<10x448xf32>
    %cst_24 = arith.constant dense<0.000000e+00> : vector<448xf32>
    %53 = vector.multi_reduction <add>, %52, %cst_24 [0] : vector<10x448xf32> to vector<448xf32>
    %54 = vector.shape_cast %53 : vector<448xf32> to vector<1x448xf32>
    %cst_25 = arith.constant 1.000000e+00 : f32
    %55 = vector.broadcast %cst_25 : f32 to vector<1x448xf32>
    %56 = tpu.concatenate %55, %51, %54 in 0 : vector<1x448xf32>, vector<1x448xf32>, vector<1x448xf32> -> vector<3x448xf32>
    %cst_26 = arith.constant dense<0.000000e+00> : vector<3x32xf32>
    %57 = tpu.matmul %56, %48, %cst_26 {dimension_numbers = #tpu.dot_dimension_numbers<[1], [0], [0], [1], [0, 0, 1, 1], [], []>} : vector<3x448xf32>, vector<448x32xf32>, vector<3x32xf32> -> vector<3x32xf32>
    %58 = vector.extract_strided_slice %57 {offsets = [0, 0], sizes = [1, 32], strides = [1, 1]} : vector<3x32xf32> to vector<1x32xf32>
    %cst_27 = arith.constant 1.000000e+01 : f32
    %59 = vector.broadcast %cst_27 : f32 to vector<1x32xf32>
    %60 = arith.mulf %58, %59 : vector<1x32xf32>
    %61 = vector.extract_strided_slice %57 {offsets = [1, 0], sizes = [1, 32], strides = [1, 1]} : vector<3x32xf32> to vector<1x32xf32>
    %62 = arith.divf %61, %60 : vector<1x32xf32>
    %63 = vector.extract_strided_slice %57 {offsets = [2, 0], sizes = [1, 32], strides = [1, 1]} : vector<3x32xf32> to vector<1x32xf32>
    %64 = arith.divf %63, %60 : vector<1x32xf32>
    %65 = arith.mulf %62, %62 : vector<1x32xf32>
    %66 = arith.subf %64, %65 : vector<1x32xf32>
    %cst_28 = arith.constant 0.000000e+00 : f32
    %67 = vector.broadcast %cst_28 : f32 to vector<1x32xf32>
    %68 = arith.maximumf %66, %67 : vector<1x32xf32>
    %cst_29 = arith.constant 9.99999974E-6 : f32
    %69 = vector.broadcast %cst_29 : f32 to vector<1x32xf32>
    %70 = arith.addf %68, %69 : vector<1x32xf32>
    %71 = math.rsqrt %70 : vector<1x32xf32>
    %72 = vector.extract_strided_slice %49 {offsets = [0, 0], sizes = [1, 32], strides = [1, 1]} : vector<2x32xf32> to vector<1x32xf32>
    %73 = arith.mulf %72, %71 : vector<1x32xf32>
    %74 = vector.extract_strided_slice %49 {offsets = [1, 0], sizes = [1, 32], strides = [1, 1]} : vector<2x32xf32> to vector<1x32xf32>
    %75 = arith.mulf %62, %73 : vector<1x32xf32>
    %76 = arith.subf %74, %75 : vector<1x32xf32>
    %77 = tpu.concatenate %73, %76 in 0 : vector<1x32xf32>, vector<1x32xf32> -> vector<2x32xf32>
    %cst_30 = arith.constant dense<0.000000e+00> : vector<2x448xf32>
    %78 = tpu.matmul %77, %48, %cst_30 {dimension_numbers = #tpu.dot_dimension_numbers<[1], [1], [0], [0], [0, 0, 1, 0], [], []>} : vector<2x32xf32>, vector<448x32xf32>, vector<2x448xf32> -> vector<2x448xf32>
    %79 = vector.extract_strided_slice %78 {offsets = [0, 0], sizes = [1, 448], strides = [1, 1]} : vector<2x448xf32> to vector<1x448xf32>
    %80 = vector.broadcast %79 : vector<1x448xf32> to vector<10x448xf32>
    %81 = arith.mulf %46, %80 : vector<10x448xf32>
    %82 = vector.extract_strided_slice %78 {offsets = [1, 0], sizes = [1, 448], strides = [1, 1]} : vector<2x448xf32> to vector<1x448xf32>
    %83 = vector.broadcast %82 : vector<1x448xf32> to vector<10x448xf32>
    %84 = arith.addf %81, %83 : vector<10x448xf32>
    %cst_31 = arith.constant 0.000000e+00 : f32
    %85 = vector.broadcast %cst_31 : f32 to vector<10x448xf32>
    %86 = arith.maximumf %84, %85 : vector<10x448xf32>
    %87 = arith.truncf %86 : vector<10x448xf32> to vector<10x448xbf16>
    %c0_32 = arith.constant 0 : index
    %c0_33 = arith.constant 0 : index
    %88 = vector.load %arg7[%c0_32, %c0_33] : memref<448x368xbf16, #tpu.memory_space<vmem>>, vector<448x368xbf16>
    %cst_34 = arith.constant dense<0.000000e+00> : vector<10x368xf32>
    %89 = tpu.matmul %87, %88, %cst_34 {dimension_numbers = #tpu.dot_dimension_numbers<[1], [0], [0], [1], [0, 0, 1, 1], [], []>} : vector<10x448xbf16>, vector<448x368xbf16>, vector<10x368xf32> -> vector<10x368xf32>
    %c0_35 = arith.constant 0 : index
    %c0_36 = arith.constant 0 : index
    %90 = vector.load %arg8[%c0_35, %c0_36] : memref<368x16xbf16, #tpu.memory_space<vmem>>, vector<368x16xbf16>
    %91 = arith.extf %90 : vector<368x16xbf16> to vector<368x16xf32>
    %c0_37 = arith.constant 0 : index
    %c0_38 = arith.constant 0 : index
    %92 = vector.load %arg9[%c0_37, %c0_38] : memref<2x16xf32, #tpu.memory_space<vmem>>, vector<2x16xf32>
    %cst_39 = arith.constant dense<0.000000e+00> : vector<368xf32>
    %93 = vector.multi_reduction <add>, %89, %cst_39 [0] : vector<10x368xf32> to vector<368xf32>
    %94 = vector.shape_cast %93 : vector<368xf32> to vector<1x368xf32>
    %95 = arith.mulf %89, %89 : vector<10x368xf32>
    %cst_40 = arith.constant dense<0.000000e+00> : vector<368xf32>
    %96 = vector.multi_reduction <add>, %95, %cst_40 [0] : vector<10x368xf32> to vector<368xf32>
    %97 = vector.shape_cast %96 : vector<368xf32> to vector<1x368xf32>
    %cst_41 = arith.constant 1.000000e+00 : f32
    %98 = vector.broadcast %cst_41 : f32 to vector<1x368xf32>
    %99 = tpu.concatenate %98, %94, %97 in 0 : vector<1x368xf32>, vector<1x368xf32>, vector<1x368xf32> -> vector<3x368xf32>
    %cst_42 = arith.constant dense<0.000000e+00> : vector<3x16xf32>
    %100 = tpu.matmul %99, %91, %cst_42 {dimension_numbers = #tpu.dot_dimension_numbers<[1], [0], [0], [1], [0, 0, 1, 1], [], []>} : vector<3x368xf32>, vector<368x16xf32>, vector<3x16xf32> -> vector<3x16xf32>
    %101 = vector.extract_strided_slice %100 {offsets = [0, 0], sizes = [1, 16], strides = [1, 1]} : vector<3x16xf32> to vector<1x16xf32>
    %cst_43 = arith.constant 1.000000e+01 : f32
    %102 = vector.broadcast %cst_43 : f32 to vector<1x16xf32>
    %103 = arith.mulf %101, %102 : vector<1x16xf32>
    %104 = vector.extract_strided_slice %100 {offsets = [1, 0], sizes = [1, 16], strides = [1, 1]} : vector<3x16xf32> to vector<1x16xf32>
    %105 = arith.divf %104, %103 : vector<1x16xf32>
    %106 = vector.extract_strided_slice %100 {offsets = [2, 0], sizes = [1, 16], strides = [1, 1]} : vector<3x16xf32> to vector<1x16xf32>
    %107 = arith.divf %106, %103 : vector<1x16xf32>
    %108 = arith.mulf %105, %105 : vector<1x16xf32>
    %109 = arith.subf %107, %108 : vector<1x16xf32>
    %cst_44 = arith.constant 0.000000e+00 : f32
    %110 = vector.broadcast %cst_44 : f32 to vector<1x16xf32>
    %111 = arith.maximumf %109, %110 : vector<1x16xf32>
    %cst_45 = arith.constant 9.99999974E-6 : f32
    %112 = vector.broadcast %cst_45 : f32 to vector<1x16xf32>
    %113 = arith.addf %111, %112 : vector<1x16xf32>
    %114 = math.rsqrt %113 : vector<1x16xf32>
    %115 = vector.extract_strided_slice %92 {offsets = [0, 0], sizes = [1, 16], strides = [1, 1]} : vector<2x16xf32> to vector<1x16xf32>
    %116 = arith.mulf %115, %114 : vector<1x16xf32>
    %117 = vector.extract_strided_slice %92 {offsets = [1, 0], sizes = [1, 16], strides = [1, 1]} : vector<2x16xf32> to vector<1x16xf32>
    %118 = arith.mulf %105, %116 : vector<1x16xf32>
    %119 = arith.subf %117, %118 : vector<1x16xf32>
    %120 = tpu.concatenate %116, %119 in 0 : vector<1x16xf32>, vector<1x16xf32> -> vector<2x16xf32>
    %cst_46 = arith.constant dense<0.000000e+00> : vector<2x368xf32>
    %121 = tpu.matmul %120, %91, %cst_46 {dimension_numbers = #tpu.dot_dimension_numbers<[1], [1], [0], [0], [0, 0, 1, 0], [], []>} : vector<2x16xf32>, vector<368x16xf32>, vector<2x368xf32> -> vector<2x368xf32>
    %122 = vector.extract_strided_slice %121 {offsets = [0, 0], sizes = [1, 368], strides = [1, 1]} : vector<2x368xf32> to vector<1x368xf32>
    %123 = vector.broadcast %122 : vector<1x368xf32> to vector<10x368xf32>
    %124 = arith.mulf %89, %123 : vector<10x368xf32>
    %125 = vector.extract_strided_slice %121 {offsets = [1, 0], sizes = [1, 368], strides = [1, 1]} : vector<2x368xf32> to vector<1x368xf32>
    %126 = vector.broadcast %125 : vector<1x368xf32> to vector<10x368xf32>
    %127 = arith.addf %124, %126 : vector<10x368xf32>
    %cst_47 = arith.constant 0.000000e+00 : f32
    %128 = vector.broadcast %cst_47 : f32 to vector<10x368xf32>
    %129 = arith.maximumf %127, %128 : vector<10x368xf32>
    %130 = arith.truncf %129 : vector<10x368xf32> to vector<10x368xbf16>
    %c0_48 = arith.constant 0 : index
    %c0_49 = arith.constant 0 : index
    %131 = vector.load %arg10[%c0_48, %c0_49] : memref<368x256xbf16, #tpu.memory_space<vmem>>, vector<368x256xbf16>
    %cst_50 = arith.constant dense<0.000000e+00> : vector<10x256xf32>
    %132 = tpu.matmul %130, %131, %cst_50 {dimension_numbers = #tpu.dot_dimension_numbers<[1], [0], [0], [1], [0, 0, 1, 1], [], []>} : vector<10x368xbf16>, vector<368x256xbf16>, vector<10x256xf32> -> vector<10x256xf32>
    %c0_51 = arith.constant 0 : index
    %c0_52 = arith.constant 0 : index
    %133 = vector.load %arg11[%c0_51, %c0_52] : memref<256x8xbf16, #tpu.memory_space<vmem>>, vector<256x8xbf16>
    %134 = arith.extf %133 : vector<256x8xbf16> to vector<256x8xf32>
    %c0_53 = arith.constant 0 : index
    %c0_54 = arith.constant 0 : index
    %135 = vector.load %arg12[%c0_53, %c0_54] : memref<2x8xf32, #tpu.memory_space<vmem>>, vector<2x8xf32>
    %cst_55 = arith.constant dense<0.000000e+00> : vector<256xf32>
    %136 = vector.multi_reduction <add>, %132, %cst_55 [0] : vector<10x256xf32> to vector<256xf32>
    %137 = vector.shape_cast %136 : vector<256xf32> to vector<1x256xf32>
    %138 = arith.mulf %132, %132 : vector<10x256xf32>
    %cst_56 = arith.constant dense<0.000000e+00> : vector<256xf32>
    %139 = vector.multi_reduction <add>, %138, %cst_56 [0] : vector<10x256xf32> to vector<256xf32>
    %140 = vector.shape_cast %139 : vector<256xf32> to vector<1x256xf32>
    %cst_57 = arith.constant 1.000000e+00 : f32
    %141 = vector.broadcast %cst_57 : f32 to vector<1x256xf32>
    %142 = tpu.concatenate %141, %137, %140 in 0 : vector<1x256xf32>, vector<1x256xf32>, vector<1x256xf32> -> vector<3x256xf32>
    %cst_58 = arith.constant dense<0.000000e+00> : vector<3x8xf32>
    %143 = tpu.matmul %142, %134, %cst_58 {dimension_numbers = #tpu.dot_dimension_numbers<[1], [0], [0], [1], [0, 0, 1, 1], [], []>} : vector<3x256xf32>, vector<256x8xf32>, vector<3x8xf32> -> vector<3x8xf32>
    %144 = vector.extract_strided_slice %143 {offsets = [0, 0], sizes = [1, 8], strides = [1, 1]} : vector<3x8xf32> to vector<1x8xf32>
    %cst_59 = arith.constant 1.000000e+01 : f32
    %145 = vector.broadcast %cst_59 : f32 to vector<1x8xf32>
    %146 = arith.mulf %144, %145 : vector<1x8xf32>
    %147 = vector.extract_strided_slice %143 {offsets = [1, 0], sizes = [1, 8], strides = [1, 1]} : vector<3x8xf32> to vector<1x8xf32>
    %148 = arith.divf %147, %146 : vector<1x8xf32>
    %149 = vector.extract_strided_slice %143 {offsets = [2, 0], sizes = [1, 8], strides = [1, 1]} : vector<3x8xf32> to vector<1x8xf32>
    %150 = arith.divf %149, %146 : vector<1x8xf32>
    %151 = arith.mulf %148, %148 : vector<1x8xf32>
    %152 = arith.subf %150, %151 : vector<1x8xf32>
    %cst_60 = arith.constant 0.000000e+00 : f32
    %153 = vector.broadcast %cst_60 : f32 to vector<1x8xf32>
    %154 = arith.maximumf %152, %153 : vector<1x8xf32>
    %cst_61 = arith.constant 9.99999974E-6 : f32
    %155 = vector.broadcast %cst_61 : f32 to vector<1x8xf32>
    %156 = arith.addf %154, %155 : vector<1x8xf32>
    %157 = math.rsqrt %156 : vector<1x8xf32>
    %158 = vector.extract_strided_slice %135 {offsets = [0, 0], sizes = [1, 8], strides = [1, 1]} : vector<2x8xf32> to vector<1x8xf32>
    %159 = arith.mulf %158, %157 : vector<1x8xf32>
    %160 = vector.extract_strided_slice %135 {offsets = [1, 0], sizes = [1, 8], strides = [1, 1]} : vector<2x8xf32> to vector<1x8xf32>
    %161 = arith.mulf %148, %159 : vector<1x8xf32>
    %162 = arith.subf %160, %161 : vector<1x8xf32>
    %163 = tpu.concatenate %159, %162 in 0 : vector<1x8xf32>, vector<1x8xf32> -> vector<2x8xf32>
    %cst_62 = arith.constant dense<0.000000e+00> : vector<2x256xf32>
    %164 = tpu.matmul %163, %134, %cst_62 {dimension_numbers = #tpu.dot_dimension_numbers<[1], [1], [0], [0], [0, 0, 1, 0], [], []>} : vector<2x8xf32>, vector<256x8xf32>, vector<2x256xf32> -> vector<2x256xf32>
    %165 = vector.extract_strided_slice %164 {offsets = [0, 0], sizes = [1, 256], strides = [1, 1]} : vector<2x256xf32> to vector<1x256xf32>
    %166 = vector.broadcast %165 : vector<1x256xf32> to vector<10x256xf32>
    %167 = arith.mulf %132, %166 : vector<10x256xf32>
    %168 = vector.extract_strided_slice %164 {offsets = [1, 0], sizes = [1, 256], strides = [1, 1]} : vector<2x256xf32> to vector<1x256xf32>
    %169 = vector.broadcast %168 : vector<1x256xf32> to vector<10x256xf32>
    %170 = arith.addf %167, %169 : vector<10x256xf32>
    %cst_63 = arith.constant 0.000000e+00 : f32
    %171 = vector.broadcast %cst_63 : f32 to vector<10x256xf32>
    %172 = arith.maximumf %170, %171 : vector<10x256xf32>
    %173 = arith.truncf %172 : vector<10x256xf32> to vector<10x256xbf16>
    %c0_64 = arith.constant 0 : index
    %c0_65 = arith.constant 0 : index
    %174 = vector.load %arg13[%c0_64, %c0_65] : memref<256x128xbf16, #tpu.memory_space<vmem>>, vector<256x128xbf16>
    %cst_66 = arith.constant dense<0.000000e+00> : vector<10x128xf32>
    %175 = tpu.matmul %173, %174, %cst_66 {dimension_numbers = #tpu.dot_dimension_numbers<[1], [0], [0], [1], [0, 0, 1, 1], [], []>} : vector<10x256xbf16>, vector<256x128xbf16>, vector<10x128xf32> -> vector<10x128xf32>
    %c0_67 = arith.constant 0 : index
    %c0_68 = arith.constant 0 : index
    %176 = vector.load %arg14[%c0_67, %c0_68] : memref<128x1xbf16, #tpu.memory_space<vmem>>, vector<128x1xbf16>
    %177 = arith.extf %176 : vector<128x1xbf16> to vector<128x1xf32>
    %c0_69 = arith.constant 0 : index
    %c0_70 = arith.constant 0 : index
    %178 = vector.load %arg15[%c0_69, %c0_70] : memref<2x1xf32, #tpu.memory_space<vmem>>, vector<2x1xf32>
    %cst_71 = arith.constant dense<0.000000e+00> : vector<128xf32>
    %179 = vector.multi_reduction <add>, %175, %cst_71 [0] : vector<10x128xf32> to vector<128xf32>
    %180 = vector.shape_cast %179 : vector<128xf32> to vector<1x128xf32>
    %181 = arith.mulf %175, %175 : vector<10x128xf32>
    %cst_72 = arith.constant dense<0.000000e+00> : vector<128xf32>
    %182 = vector.multi_reduction <add>, %181, %cst_72 [0] : vector<10x128xf32> to vector<128xf32>
    %183 = vector.shape_cast %182 : vector<128xf32> to vector<1x128xf32>
    %cst_73 = arith.constant 1.000000e+00 : f32
    %184 = vector.broadcast %cst_73 : f32 to vector<1x128xf32>
    %185 = tpu.concatenate %184, %180, %183 in 0 : vector<1x128xf32>, vector<1x128xf32>, vector<1x128xf32> -> vector<3x128xf32>
    %cst_74 = arith.constant dense<0.000000e+00> : vector<3x1xf32>
    %186 = tpu.matmul %185, %177, %cst_74 {dimension_numbers = #tpu.dot_dimension_numbers<[1], [0], [0], [1], [0, 0, 1, 1], [], []>} : vector<3x128xf32>, vector<128x1xf32>, vector<3x1xf32> -> vector<3x1xf32>
    %187 = vector.extract_strided_slice %186 {offsets = [0, 0], sizes = [1, 1], strides = [1, 1]} : vector<3x1xf32> to vector<1x1xf32>
    %cst_75 = arith.constant 1.000000e+01 : f32
    %188 = vector.broadcast %cst_75 : f32 to vector<1x1xf32>
    %189 = arith.mulf %187, %188 : vector<1x1xf32>
    %190 = vector.extract_strided_slice %186 {offsets = [1, 0], sizes = [1, 1], strides = [1, 1]} : vector<3x1xf32> to vector<1x1xf32>
    %191 = arith.divf %190, %189 : vector<1x1xf32>
    %192 = vector.extract_strided_slice %186 {offsets = [2, 0], sizes = [1, 1], strides = [1, 1]} : vector<3x1xf32> to vector<1x1xf32>
    %193 = arith.divf %192, %189 : vector<1x1xf32>
    %194 = arith.mulf %191, %191 : vector<1x1xf32>
    %195 = arith.subf %193, %194 : vector<1x1xf32>
    %cst_76 = arith.constant 0.000000e+00 : f32
    %196 = vector.broadcast %cst_76 : f32 to vector<1x1xf32>
    %197 = arith.maximumf %195, %196 : vector<1x1xf32>
    %cst_77 = arith.constant 9.99999974E-6 : f32
    %198 = vector.broadcast %cst_77 : f32 to vector<1x1xf32>
    %199 = arith.addf %197, %198 : vector<1x1xf32>
    %200 = math.rsqrt %199 : vector<1x1xf32>
    %201 = vector.extract_strided_slice %178 {offsets = [0, 0], sizes = [1, 1], strides = [1, 1]} : vector<2x1xf32> to vector<1x1xf32>
    %202 = arith.mulf %201, %200 : vector<1x1xf32>
    %203 = vector.extract_strided_slice %178 {offsets = [1, 0], sizes = [1, 1], strides = [1, 1]} : vector<2x1xf32> to vector<1x1xf32>
    %204 = arith.mulf %191, %202 : vector<1x1xf32>
    %205 = arith.subf %203, %204 : vector<1x1xf32>
    %206 = tpu.concatenate %202, %205 in 0 : vector<1x1xf32>, vector<1x1xf32> -> vector<2x1xf32>
    %cst_78 = arith.constant dense<0.000000e+00> : vector<2x128xf32>
    %207 = tpu.matmul %206, %177, %cst_78 {dimension_numbers = #tpu.dot_dimension_numbers<[1], [1], [0], [0], [0, 0, 1, 0], [], []>} : vector<2x1xf32>, vector<128x1xf32>, vector<2x128xf32> -> vector<2x128xf32>
    %208 = vector.extract_strided_slice %207 {offsets = [0, 0], sizes = [1, 128], strides = [1, 1]} : vector<2x128xf32> to vector<1x128xf32>
    %209 = vector.broadcast %208 : vector<1x128xf32> to vector<10x128xf32>
    %210 = arith.mulf %175, %209 : vector<10x128xf32>
    %211 = vector.extract_strided_slice %207 {offsets = [1, 0], sizes = [1, 128], strides = [1, 1]} : vector<2x128xf32> to vector<1x128xf32>
    %212 = vector.broadcast %211 : vector<1x128xf32> to vector<10x128xf32>
    %213 = arith.addf %210, %212 : vector<10x128xf32>
    %cst_79 = arith.constant 0.000000e+00 : f32
    %214 = vector.broadcast %cst_79 : f32 to vector<10x128xf32>
    %215 = arith.maximumf %213, %214 : vector<10x128xf32>
    %216 = math.tanh %215 : vector<10x128xf32>
    %c0_80 = arith.constant 0 : index
    %c0_81 = arith.constant 0 : index
    %217 = vector.load %arg16[%c0_80, %c0_81] : memref<10x128xf32, #tpu.memory_space<vmem>>, vector<10x128xf32>
    tpu.vector_store %arg16[%c0_80, %c0_81], %216 {strides = array<i32>} : memref<10x128xf32, #tpu.memory_space<vmem>>, vector<10x128xf32>,
    return
  }
}

</mosaic_0001>

<llo_original>
// kernel: generator_forward.1
$region0: #{generator_forward.1}
  #allocation0 [shape = 'u32[]', space=smem, size = 0x4, offset = 0x4, fixed_abs, tag = 'smem constant byte address 0x4 - core index']
  #allocation1 [shape = 'u32[144,128]{1,0:T(1,128)}', space=vmem, size = 0x12000, scoped, tag = 'internal scratch']
  %s0 = inlined_call_operand.vmem [shape: f32[10,140], index: 0, kind: input, shape index: {}]
  %s1 = inlined_call_operand.hbm [shape: bf16[140,320], index: 1, kind: input, shape index: {}]
  %s2 = inlined_call_operand.vmem [shape: bf16[320,64], index: 2, kind: input, shape index: {}]
  %s3 = inlined_call_operand.vmem [shape: f32[2,64], index: 3, kind: input, shape index: {}]
  %s4 = inlined_call_operand.vmem [shape: bf16[320,448], index: 4, kind: input, shape index: {}]
  %s5 = inlined_call_operand.vmem [shape: bf16[448,32], index: 5, kind: input, shape index: {}]
  %s6 = inlined_call_operand.vmem [shape: f32[2,32], index: 6, kind: input, shape index: {}]
  %s7 = inlined_call_operand.vmem [shape: bf16[448,368], index: 7, kind: input, shape index: {}]
  %s8 = inlined_call_operand.vmem [shape: bf16[368,16], index: 8, kind: input, shape index: {}]
  %s9 = inlined_call_operand.vmem [shape: f32[2,16], index: 9, kind: input, shape index: {}]
  %s10 = inlined_call_operand.vmem [shape: bf16[368,256], index: 10, kind: input, shape index: {}]
  %s11 = inlined_call_operand.vmem [shape: bf16[256,8], index: 11, kind: input, shape index: {}]
  %s12 = inlined_call_operand.hbm [shape: f32[2,8], index: 12, kind: input, shape index: {}]
  %s13 = inlined_call_operand.hbm [shape: bf16[256,128], index: 13, kind: input, shape index: {}]
  %s14 = inlined_call_operand.vmem [shape: bf16[128,1], index: 14, kind: input, shape index: {}]
  %s15 = inlined_call_operand.vmem [shape: f32[2,1], index: 15, kind: input, shape index: {}]
  %s16 = inlined_call_operand.vmem [shape: f32[10,128], index: 16, kind: output, shape index: {}]
  %s17 = sld [smem:[#allocation0]]
  $region86: #{generator_forward.1} parent=0
    _
  %s19 = ssub.s32 1, %s17
  %s20 = scalar_select 0, %s19, %s17
  $region1: #{generator_forward.1} parent=0
    #allocation2 [shape = 'u8[110592]{0}', space=vmem, size = 0x1b000, scoped, tag = 'input window, operand 1, single buffered']
    #allocation3 [shape = 's32[1]{0}', space=sflag, size = 0x4, scoped, tag = 'scoped memory for generator_forward.1']
    #allocation4 [shape = 'u8[1024]{0}', space=vmem, size = 0x400, scoped, tag = 'input window, operand 12, single buffered']
    #allocation5 [shape = 's32[1]{0}', space=sflag, size = 0x4, scoped, tag = 'scoped memory for generator_forward.1']
    #allocation6 [shape = 'u8[65536]{0}', space=vmem, size = 0x10000, scoped, tag = 'input window, operand 13, single buffered']
    %21 = vsyncpa [#allocation3], 0
    %22 = vsyncpa [#allocation5], 0
    // Predicated region
    $region2: #{generator_forward.1} parent=1 // pred_check
      _
    $region3: #{generator_forward.1} parent=1 // pred_check_branch
      %24 = sbr.rel (0) target = $region5
    $region4: #{generator_forward.1} parent=1 // pred_region
      _
    $region5: #{generator_forward.1} parent=1 // pred_fallthru
      _
    // Predicated region
    $region6: #{generator_forward.1} parent=1 // pred_check
      _
    $region7: #{generator_forward.1} parent=1 // pred_check_branch
      %26 = sbr.rel (0) target = $region9
    $region8: #{generator_forward.1} parent=1 // pred_region
      %s28 = ssub.s32 3456, 3456
      %29 = vsyncadd [#allocation3], %s28
      %s30 = sshll.u32 [#allocation2], 4
      %s31 = int_to_ptr.vmem [resolvable:$true] %s30
      %36 = dma.hbm_to_vmem [thread:$0]  %s1, 3456, %s31, [#allocation3], 192, 192, 12
    $region9: #{generator_forward.1} parent=1 // pred_fallthru
      _
    // Predicated region
    $region10: #{generator_forward.1} parent=1 // pred_check
      _
    $region11: #{generator_forward.1} parent=1 // pred_check_branch
      %38 = sbr.rel (0) target = $region13
    $region12: #{generator_forward.1} parent=1 // pred_region
      _
    $region13: #{generator_forward.1} parent=1 // pred_fallthru
      _
    // Predicated region
    $region14: #{generator_forward.1} parent=1 // pred_check
      _
    $region15: #{generator_forward.1} parent=1 // pred_check_branch
      %40 = sbr.rel (0) target = $region17
    $region16: #{generator_forward.1} parent=1 // pred_region
      _
    $region17: #{generator_forward.1} parent=1 // pred_fallthru
      _
    // Predicated region
    $region18: #{generator_forward.1} parent=1 // pred_check
      _
    $region19: #{generator_forward.1} parent=1 // pred_check_branch
      %42 = sbr.rel (0) target = $region21
    $region20: #{generator_forward.1} parent=1 // pred_region
      _
    $region21: #{generator_forward.1} parent=1 // pred_fallthru
      _
    // Predicated region
    $region22: #{generator_forward.1} parent=1 // pred_check
      _
    $region23: #{generator_forward.1} parent=1 // pred_check_branch
      %44 = sbr.rel (0) target = $region25
    $region24: #{generator_forward.1} parent=1 // pred_region
      _
    $region25: #{generator_forward.1} parent=1 // pred_fallthru
      _
    // Predicated region
    $region26: #{generator_forward.1} parent=1 // pred_check
      _
    $region27: #{generator_forward.1} parent=1 // pred_check_branch
      %46 = sbr.rel (0) target = $region29
    $region28: #{generator_forward.1} parent=1 // pred_region
      _
    $region29: #{generator_forward.1} parent=1 // pred_fallthru
      _
    // Predicated region
    $region30: #{generator_forward.1} parent=1 // pred_check
      _
    $region31: #{generator_forward.1} parent=1 // pred_check_branch
      %48 = sbr.rel (0) target = $region33
    $region32: #{generator_forward.1} parent=1 // pred_region
      _
    $region33: #{generator_forward.1} parent=1 // pred_fallthru
      _
    // Predicated region
    $region34: #{generator_forward.1} parent=1 // pred_check
      _
    $region35: #{generator_forward.1} parent=1 // pred_check_branch
      %50 = sbr.rel (0) target = $region37
    $region36: #{generator_forward.1} parent=1 // pred_region
      _
    $region37: #{generator_forward.1} parent=1 // pred_fallthru
      _
    // Predicated region
    $region38: #{generator_forward.1} parent=1 // pred_check
      _
    $region39: #{generator_forward.1} parent=1 // pred_check_branch
      %52 = sbr.rel (0) target = $region41
    $region40: #{generator_forward.1} parent=1 // pred_region
      _
    $region41: #{generator_forward.1} parent=1 // pred_fallthru
      _
    // Predicated region
    $region42: #{generator_forward.1} parent=1 // pred_check
      _
    $region43: #{generator_forward.1} parent=1 // pred_check_branch
      %54 = sbr.rel (0) target = $region45
    $region44: #{generator_forward.1} parent=1 // pred_region
      _
    $region45: #{generator_forward.1} parent=1 // pred_fallthru
      _
    // Predicated region
    $region46: #{generator_forward.1} parent=1 // pred_check
      _
    $region47: #{generator_forward.1} parent=1 // pred_check_branch
      %56 = sbr.rel (0) target = $region49
    $region48: #{generator_forward.1} parent=1 // pred_region
      _
    $region49: #{generator_forward.1} parent=1 // pred_fallthru
      _
    // Predicated region
    $region50: #{generator_forward.1} parent=1 // pred_check
      _
    $region51: #{generator_forward.1} parent=1 // pred_check_branch
      %58 = sbr.rel (0) target = $region53
    $region52: #{generator_forward.1} parent=1 // pred_region
      %s60 = ssub.s32 32, 32
      %61 = vsyncadd [#allocation5], %s60
      %s63 = sshll.u32 [#allocation4], 4
      %s64 = int_to_ptr.vmem [resolvable:$true] %s63
      %66 = dma.hbm_to_vmem [thread:$0]  %s12, 32, %s64, [#allocation5]
    $region53: #{generator_forward.1} parent=1 // pred_fallthru
      _
    // Predicated region
    $region54: #{generator_forward.1} parent=1 // pred_check
      _
    $region55: #{generator_forward.1} parent=1 // pred_check_branch
      %68 = sbr.rel (0) target = $region57
    $region56: #{generator_forward.1} parent=1 // pred_region
      %s70 = ssub.s32 2048, 2048
      %71 = vsyncadd [#allocation5], %s70
      %s72 = sshll.u32 [#allocation6], 4
      %s73 = int_to_ptr.vmem [resolvable:$true] %s72
      %78 = dma.hbm_to_vmem [thread:$0]  %s13, 2048, %s73, [#allocation5], 64, 64, 4
    $region57: #{generator_forward.1} parent=1 // pred_fallthru
      _
    // Predicated region
    $region58: #{generator_forward.1} parent=1 // pred_check
      _
    $region59: #{generator_forward.1} parent=1 // pred_check_branch
      %80 = sbr.rel (0) target = $region61
    $region60: #{generator_forward.1} parent=1 // pred_region
      _
    $region61: #{generator_forward.1} parent=1 // pred_fallthru
      _
    // Predicated region
    $region62: #{generator_forward.1} parent=1 // pred_check
      _
    $region63: #{generator_forward.1} parent=1 // pred_check_branch
      %82 = sbr.rel (0) target = $region65
    $region64: #{generator_forward.1} parent=1 // pred_region
      _
    $region65: #{generator_forward.1} parent=1 // pred_fallthru
      _
    // Predicated region
    $region66: #{generator_forward.1} parent=1 // pred_check
      _
    $region67: #{generator_forward.1} parent=1 // pred_check_branch
      %84 = sbr.rel (0) target = $region69
    $region68: #{generator_forward.1} parent=1 // pred_region
      %85 = dma.done [#allocation3], 3456
    $region69: #{generator_forward.1} parent=1 // pred_fallthru
      _
    // Predicated region
    $region70: #{generator_forward.1} parent=1 // pred_check
      _
    $region71: #{generator_forward.1} parent=1 // pred_check_branch
      %87 = sbr.rel (0) target = $region73
    $region72: #{generator_forward.1} parent=1 // pred_region
      %88 = dma.done [#allocation5], 32
    $region73: #{generator_forward.1} parent=1 // pred_fallthru
      _
    // Predicated region
    $region74: #{generator_forward.1} parent=1 // pred_check
      _
    $region75: #{generator_forward.1} parent=1 // pred_check_branch
      %90 = sbr.rel (0) target = $region77
    $region76: #{generator_forward.1} parent=1 // pred_region
      %91 = dma.done [#allocation5], 2048
    $region77: #{generator_forward.1} parent=1 // pred_fallthru
      _
    %v93 = vld [vmem:[%s0] sm:$0xff]
    %v94 = vld [vmem:[%s0 + $0x8] sm:$0xff]
    %v95 = vld [vmem:[%s0 + $0x10] sm:$0x3]
    %v96 = vld [vmem:[%s0 + $0x18] sm:$0x3]
    %v97 = vpack.c.bf16 %v95, %v93
    %v98 = vpack.c.bf16 %v96, %v94
    %v99 = vld [vmem:[#allocation2] sm:$0xff]
    %v100 = vld [vmem:[#allocation2 + $0x8] sm:$0xf]
    %v101 = vld [vmem:[#allocation2 + $0xc] sm:$0xff]
    %v102 = vld [vmem:[#allocation2 + $0x14] sm:$0xf]
    %v103 = vld [vmem:[#allocation2 + $0x18] sm:$0xff]
    %v104 = vld [vmem:[#allocation2 + $0x20] sm:$0xf]
    %v105 = vld [vmem:[#allocation2 + $0x24] sm:$0xff]
    %v106 = vld [vmem:[#allocation2 + $0x2c] sm:$0xf]
    %v107 = vld [vmem:[#allocation2 + $0x30] sm:$0xff]
    %v108 = vld [vmem:[#allocation2 + $0x38] sm:$0xf]
    %v109 = vld [vmem:[#allocation2 + $0x3c] sm:$0xff]
    %v110 = vld [vmem:[#allocation2 + $0x44] sm:$0xf]
    %v111 = vld [vmem:[#allocation2 + $0x48] sm:$0xff]
    %v112 = vld [vmem:[#allocation2 + $0x50] sm:$0xf]
    %v113 = vld [vmem:[#allocation2 + $0x54] sm:$0xff]
    %v114 = vld [vmem:[#allocation2 + $0x5c] sm:$0xf]
    %v115 = vld [vmem:[#allocation2 + $0x60] sm:$0xff]
    %v116 = vld [vmem:[#allocation2 + $0x68] sm:$0xf]
    %v117 = vld [vmem:[#allocation2 + $0x6c] sm:$0xff]
    %v118 = vld [vmem:[#allocation2 + $0x74] sm:$0xf]
    %v119 = vld [vmem:[#allocation2 + $0x78] sm:$0xff]
    %v120 = vld [vmem:[#allocation2 + $0x80] sm:$0xf]
    %v121 = vld [vmem:[#allocation2 + $0x84] sm:$0xff]
    %v122 = vld [vmem:[#allocation2 + $0x8c] sm:$0xf]
    %v123 = vld [vmem:[#allocation2 + $0x90] sm:$0xff]
    %v124 = vld [vmem:[#allocation2 + $0x98] sm:$0xf]
    %v125 = vld [vmem:[#allocation2 + $0x9c] sm:$0xff]
    %v126 = vld [vmem:[#allocation2 + $0xa4] sm:$0xf]
    %v127 = vld [vmem:[#allocation2 + $0xa8] sm:$0xff]
    %v128 = vld [vmem:[#allocation2 + $0xb0] sm:$0xf]
    %v129 = vld [vmem:[#allocation2 + $0xb4] sm:$0xff]
    %v130 = vld [vmem:[#allocation2 + $0xbc] sm:$0xf]
    %v131 = vld [vmem:[#allocation2 + $0xc0] sm:$0xff]
    %v132 = vld [vmem:[#allocation2 + $0xc8] sm:$0xf]
    %v133 = vld [vmem:[#allocation2 + $0xcc] sm:$0x33]
    %v134 = vld [vmem:[#allocation2 + $0xd4] sm:$0x3]
    %v171 = vunpack.c.l.b16 %v99
    %v172 = vunpack.c.h.b16 %v99
    %v173 = vunpack.c.l.b16 %v100
    %v174 = vunpack.c.l.b16 %v101
    %v175 = vunpack.c.h.b16 %v101
    %v176 = vunpack.c.l.b16 %v102
    %v177 = vunpack.c.l.b16 %v103
    %v178 = vunpack.c.h.b16 %v103
    %v179 = vunpack.c.l.b16 %v104
    %v180 = vunpack.c.l.b16 %v105
    %v181 = vunpack.c.h.b16 %v105
    %v182 = vunpack.c.l.b16 %v106
    %v183 = vunpack.c.l.b16 %v107
    %v184 = vunpack.c.h.b16 %v107
    %v185 = vunpack.c.l.b16 %v108
    %v186 = vunpack.c.l.b16 %v109
    %v187 = vunpack.c.h.b16 %v109
    %v188 = vunpack.c.l.b16 %v110
    %v189 = vunpack.c.l.b16 %v111
    %v190 = vunpack.c.h.b16 %v111
    %v191 = vunpack.c.l.b16 %v112
    %v192 = vunpack.c.l.b16 %v113
    %v193 = vunpack.c.h.b16 %v113
    %v194 = vunpack.c.l.b16 %v114
    %v195 = vunpack.c.l.b16 %v115
    %v196 = vunpack.c.h.b16 %v115
    %v197 = vunpack.c.l.b16 %v116
    %v198 = vunpack.c.l.b16 %v117
    %v199 = vunpack.c.h.b16 %v117
    %v200 = vunpack.c.l.b16 %v118
    %v201 = vunpack.c.l.b16 %v119
    %v202 = vunpack.c.h.b16 %v119
    %v203 = vunpack.c.l.b16 %v120
    %v204 = vunpack.c.l.b16 %v121
    %v205 = vunpack.c.h.b16 %v121
    %v206 = vunpack.c.l.b16 %v122
    %v207 = vunpack.c.l.b16 %v123
    %v208 = vunpack.c.h.b16 %v123
    %v209 = vunpack.c.l.b16 %v124
    %v210 = vunpack.c.l.b16 %v125
    %v211 = vunpack.c.h.b16 %v125
    %v212 = vunpack.c.l.b16 %v126
    %v213 = vunpack.c.l.b16 %v127
    %v214 = vunpack.c.h.b16 %v127
    %v215 = vunpack.c.l.b16 %v128
    %v216 = vunpack.c.l.b16 %v129
    %v217 = vunpack.c.h.b16 %v129
    %v218 = vunpack.c.l.b16 %v130
    %v219 = vunpack.c.l.b16 %v131
    %v220 = vunpack.c.h.b16 %v131
    %v221 = vunpack.c.l.b16 %v132
    %v222 = vunpack.c.l.b16 %v133
    %v223 = vunpack.c.h.b16 %v133
    %v224 = vunpack.c.l.b16 %v134
    %v225 = vpack.c.b16 %v174, %v171
    %v226 = vpack.c.b16 %v175, %v172
    %v227 = vpack.c.b16 %v176, %v173
    %v228 = vpack.c.b16 %v180, %v177
    %v229 = vpack.c.b16 %v181, %v178
    %v230 = vpack.c.b16 %v182, %v179
    %v231 = vpack.c.b16 %v186, %v183
    %v232 = vpack.c.b16 %v187, %v184
    %v233 = vpack.c.b16 %v188, %v185
    %v234 = vpack.c.b16 %v192, %v189
    %v235 = vpack.c.b16 %v193, %v190
    %v236 = vpack.c.b16 %v194, %v191
    %v237 = vpack.c.b16 %v198, %v195
    %v238 = vpack.c.b16 %v199, %v196
    %v239 = vpack.c.b16 %v200, %v197
    %v240 = vpack.c.b16 %v204, %v201
    %v241 = vpack.c.b16 %v205, %v202
    %v242 = vpack.c.b16 %v206, %v203
    %v243 = vpack.c.b16 %v210, %v207
    %v244 = vpack.c.b16 %v211, %v208
    %v245 = vpack.c.b16 %v212, %v209
    %v246 = vpack.c.b16 %v216, %v213
    %v247 = vpack.c.b16 %v217, %v214
    %v248 = vpack.c.b16 %v218, %v215
    %v249 = vpack.c.b16 %v222, %v219
    %v250 = vpack.c.b16 %v223, %v220
    %v251 = vpack.c.b16 %v224, %v221
    %vm276 = vcmask 97280
    %v278 = vsel %vm276, %v98, 0
    %vm280 = vcmask 1045504
    %v282 = vsel %vm280, %v249, 0
    %v285 = vsel %vm280, %v250, 0
    %v288 = vsel %vm280, %v251, 0
    %290 = vmatprep.subr.bf16.mxu0 %v226
    %291 = vmatpush1.bf16.msra.mxu0 %v225
    %292 = vmatprep.subr.bf16.mxu0 %v229
    %293 = vmatpush1.bf16.msra.mxu0 %v228
    %294 = vmatprep.subr.bf16.mxu0 %v232
    %295 = vmatpush1.bf16.msra.mxu0 %v231
    %296 = vmatprep.subr.bf16.mxu0 %v235
    %297 = vmatpush1.bf16.msra.mxu0 %v234
    %298 = vmatprep.subr.bf16.mxu0 %v238
    %299 = vmatpush1.bf16.msra.mxu0 %v237
    %300 = vmatprep.subr.bf16.mxu0 %v241
    %301 = vmatpush1.bf16.msra.mxu0 %v240
    %302 = vmatprep.subr.bf16.mxu0 %v244
    %303 = vmatpush1.bf16.msra.mxu0 %v243
    %304 = vmatprep.subr.bf16.mxu0 %v247
    %305 = vmatpush1.bf16.msra.mxu0 %v246
    %306 = vmatprep.subr.bf16.mxu0 %v285
    %307 = vmatpush1.bf16.msra.mxu0 %v282
    %308 = vmatprep.subr.bf16.mxu0 0
    %309 = vmatpush1.bf16.msra.mxu0 0
    %310 = vmatprep.subr.bf16.mxu0 0
    %311 = vmatpush1.bf16.msra.mxu0 0
    %312 = vmatprep.subr.bf16.mxu0 0
    %313 = vmatpush1.bf16.msra.mxu0 0
    %314 = vmatprep.subr.bf16.mxu0 0
    %315 = vmatpush1.bf16.msra.mxu0 0
    %316 = vmatprep.subr.bf16.mxu0 0
    %317 = vmatpush1.bf16.msra.mxu0 0
    %318 = vmatprep.subr.bf16.mxu0 0
    %319 = vmatpush1.bf16.msra.mxu0 0
    %320 = vmatprep.subr.bf16.mxu0 0
    %321 = vmatpush1.bf16.msra.mxu0 0
    %322 = vmatprep.mubr.bf16.mxu0 %v278
    %323 = vmatmul.mubr.bf16.gmra.mrb[0].mxu0 %v97
    %v324 = vpop.f32.mrb[0].mxu0
    %v325 = vadd.f32 0.0, %v324
    %v326 = vpop.f32.mrb[0].mxu0
    %v327 = vadd.f32 0.0, %v326
    %v328 = vpop.f32.mrb[0].mxu0
    %v329 = vadd.f32 0.0, %v328
    %v330 = vpop.f32.mrb[0].mxu0
    %v331 = vadd.f32 0.0, %v330
    %332 = vdwg.mxu0
    %333 = vmatprep.subr.bf16.mxu0 0
    %334 = vmatpush1.bf16.msra.mxu0 %v227
    %335 = vmatprep.subr.bf16.mxu0 0
    %336 = vmatpush1.bf16.msra.mxu0 %v230
    %337 = vmatprep.subr.bf16.mxu0 0
    %338 = vmatpush1.bf16.msra.mxu0 %v233
    %339 = vmatprep.subr.bf16.mxu0 0
    %340 = vmatpush1.bf16.msra.mxu0 %v236
    %341 = vmatprep.subr.bf16.mxu0 0
    %342 = vmatpush1.bf16.msra.mxu0 %v239
    %343 = vmatprep.subr.bf16.mxu0 0
    %344 = vmatpush1.bf16.msra.mxu0 %v242
    %345 = vmatprep.subr.bf16.mxu0 0
    %346 = vmatpush1.bf16.msra.mxu0 %v245
    %347 = vmatprep.subr.bf16.mxu0 0
    %348 = vmatpush1.bf16.msra.mxu0 %v248
    %349 = vmatprep.subr.bf16.mxu0 0
    %350 = vmatpush1.bf16.msra.mxu0 %v288
    %351 = vmatprep.subr.bf16.mxu0 0
    %352 = vmatpush1.bf16.msra.mxu0 0
    %353 = vmatprep.subr.bf16.mxu0 0
    %354 = vmatpush1.bf16.msra.mxu0 0
    %355 = vmatprep.subr.bf16.mxu0 0
    %356 = vmatpush1.bf16.msra.mxu0 0
    %357 = vmatprep.subr.bf16.mxu0 0
    %358 = vmatpush1.bf16.msra.mxu0 0
    %359 = vmatprep.subr.bf16.mxu0 0
    %360 = vmatpush1.bf16.msra.mxu0 0
    %361 = vmatprep.subr.bf16.mxu0 0
    %362 = vmatpush1.bf16.msra.mxu0 0
    %363 = vmatprep.subr.bf16.mxu0 0
    %364 = vmatpush1.bf16.msra.mxu0 0
    %365 = vmatprep.mubr.bf16.mxu0 %v278
    %366 = vmatmul.mubr.bf16.gmra.mrb[0].mxu0 %v97
    %v367 = vpop.f32.mrb[0].mxu0
    %v368 = vadd.f32 0.0, %v367
    %v369 = vpop.f32.mrb[0].mxu0
    %v370 = vpop.f32.mrb[0].mxu0
    %v371 = vadd.f32 0.0, %v370
    %v372 = vpop.f32.mrb[0].mxu0
    %373 = vdwg.mxu0
    %v374 = vld [vmem:[%s2] sm:$0xf]
    %v375 = vld [vmem:[%s2 + $0x4] sm:$0xf]
    %v376 = vld [vmem:[%s2 + $0x8] sm:$0xf]
    %v377 = vld [vmem:[%s2 + $0xc] sm:$0xf]
    %v378 = vld [vmem:[%s2 + $0x10] sm:$0xf]
    %v379 = vld [vmem:[%s2 + $0x14] sm:$0xf]
    %v380 = vld [vmem:[%s2 + $0x18] sm:$0xf]
    %v381 = vld [vmem:[%s2 + $0x1c] sm:$0xf]
    %v382 = vld [vmem:[%s2 + $0x20] sm:$0xf]
    %v383 = vld [vmem:[%s2 + $0x24] sm:$0xf]
    %v384 = vld [vmem:[%s2 + $0x28] sm:$0xf]
    %v385 = vld [vmem:[%s2 + $0x2c] sm:$0xf]
    %v386 = vld [vmem:[%s2 + $0x30] sm:$0xf]
    %v387 = vld [vmem:[%s2 + $0x34] sm:$0xf]
    %v388 = vld [vmem:[%s2 + $0x38] sm:$0xf]
    %v389 = vld [vmem:[%s2 + $0x3c] sm:$0xf]
    %v390 = vld [vmem:[%s2 + $0x40] sm:$0xf]
    %v391 = vld [vmem:[%s2 + $0x44] sm:$0xf]
    %v392 = vld [vmem:[%s2 + $0x48] sm:$0xf]
    %v393 = vld [vmem:[%s2 + $0x4c] sm:$0xf]
    %v394 = vld [vmem:[%s2 + $0x50] sm:$0xf]
    %v395 = vld [vmem:[%s2 + $0x54] sm:$0xf]
    %v396 = vld [vmem:[%s2 + $0x58] sm:$0xf]
    %v397 = vld [vmem:[%s2 + $0x5c] sm:$0xf]
    %v398 = vld [vmem:[%s2 + $0x60] sm:$0xf]
    %v399 = vld [vmem:[%s2 + $0x64] sm:$0xf]
    %v400 = vld [vmem:[%s2 + $0x68] sm:$0xf]
    %v401 = vld [vmem:[%s2 + $0x6c] sm:$0xf]
    %v402 = vld [vmem:[%s2 + $0x70] sm:$0xf]
    %v403 = vld [vmem:[%s2 + $0x74] sm:$0xf]
    %v404 = vld [vmem:[%s2 + $0x78] sm:$0xf]
    %v405 = vld [vmem:[%s2 + $0x7c] sm:$0xf]
    %v406 = vld [vmem:[%s2 + $0x80] sm:$0xf]
    %v407 = vld [vmem:[%s2 + $0x84] sm:$0xf]
    %v408 = vld [vmem:[%s2 + $0x88] sm:$0xf]
    %v409 = vld [vmem:[%s2 + $0x8c] sm:$0xf]
    %v410 = vld [vmem:[%s2 + $0x90] sm:$0xf]
    %v411 = vld [vmem:[%s2 + $0x94] sm:$0xf]
    %v412 = vld [vmem:[%s2 + $0x98] sm:$0xf]
    %v413 = vld [vmem:[%s2 + $0x9c] sm:$0xf]
    %v414 = vunpack.c.l.bf16 %v374
    %v415 = vunpack.c.l.bf16 %v375
    %v416 = vunpack.c.l.bf16 %v376
    %v417 = vunpack.c.l.bf16 %v377
    %v418 = vunpack.c.l.bf16 %v378
    %v419 = vunpack.c.l.bf16 %v379
    %v420 = vunpack.c.l.bf16 %v380
    %v421 = vunpack.c.l.bf16 %v381
    %v422 = vunpack.c.l.bf16 %v382
    %v423 = vunpack.c.l.bf16 %v383
    %v424 = vunpack.c.l.bf16 %v384
    %v425 = vunpack.c.l.bf16 %v385
    %v426 = vunpack.c.l.bf16 %v386
    %v427 = vunpack.c.l.bf16 %v387
    %v428 = vunpack.c.l.bf16 %v388
    %v429 = vunpack.c.l.bf16 %v389
    %v430 = vunpack.c.l.bf16 %v390
    %v431 = vunpack.c.l.bf16 %v391
    %v432 = vunpack.c.l.bf16 %v392
    %v433 = vunpack.c.l.bf16 %v393
    %v434 = vunpack.c.l.bf16 %v394
    %v435 = vunpack.c.l.bf16 %v395
    %v436 = vunpack.c.l.bf16 %v396
    %v437 = vunpack.c.l.bf16 %v397
    %v438 = vunpack.c.l.bf16 %v398
    %v439 = vunpack.c.l.bf16 %v399
    %v440 = vunpack.c.l.bf16 %v400
    %v441 = vunpack.c.l.bf16 %v401
    %v442 = vunpack.c.l.bf16 %v402
    %v443 = vunpack.c.l.bf16 %v403
    %v444 = vunpack.c.l.bf16 %v404
    %v445 = vunpack.c.l.bf16 %v405
    %v446 = vunpack.c.l.bf16 %v406
    %v447 = vunpack.c.l.bf16 %v407
    %v448 = vunpack.c.l.bf16 %v408
    %v449 = vunpack.c.l.bf16 %v409
    %v450 = vunpack.c.l.bf16 %v410
    %v451 = vunpack.c.l.bf16 %v411
    %v452 = vunpack.c.l.bf16 %v412
    %v453 = vunpack.c.l.bf16 %v413
    %v454 = vld [vmem:[%s3] sm:$0x3]
    %vm455 = vcmask 1041408
    %v456 = vsel %vm455, %v329, 0.0
    %v457 = vadd.f32 %v325, %v456
    %v458 = vrot.slane %v457, 4
    %v459 = vadd.f32 %v457, %v458
    %v460 = vrot.slane %v459, 2
    %v461 = vadd.f32 %v459, %v460
    %v462 = vrot.slane %v461, 1
    %v463 = vadd.f32 %v461, %v462
    %v464 = vsel %vm455, %v331, 0.0
    %v465 = vadd.f32 %v327, %v464
    %v466 = vrot.slane %v465, 4
    %v467 = vadd.f32 %v465, %v466
    %v468 = vrot.slane %v467, 2
    %v469 = vadd.f32 %v467, %v468
    %v470 = vrot.slane %v469, 1
    %v471 = vadd.f32 %v469, %v470
    %vm472 = vcmask 523264
    %v473 = vsel %vm472, %v368, 0.0
    %vm474 = vcmask 517120
    %v475 = vsel %vm474, %v371, 0.0
    %v476 = vadd.f32 %v473, %v475
    %v477 = vrot.slane %v476, 4
    %v478 = vadd.f32 %v476, %v477
    %v479 = vrot.slane %v478, 2
    %v480 = vadd.f32 %v478, %v479
    %v481 = vrot.slane %v480, 1
    %v482 = vadd.f32 %v480, %v481
    %v483 = vmul.f32 %v325, %v325
    %v484 = vmul.f32 %v327, %v327
    %v485 = vmul.f32 %v368, %v368
    %v486 = vmul.f32 %v329, %v329
    %v487 = vmul.f32 %v331, %v331
    %v488 = vmul.f32 %v371, %v371
    %v489 = vsel %vm455, %v486, 0.0
    %v490 = vadd.f32 %v483, %v489
    %v491 = vrot.slane %v490, 4
    %v492 = vadd.f32 %v490, %v491
    %v493 = vrot.slane %v492, 2
    %v494 = vadd.f32 %v492, %v493
    %v495 = vrot.slane %v494, 1
    %v496 = vadd.f32 %v494, %v495
    %v497 = vsel %vm455, %v487, 0.0
    %v498 = vadd.f32 %v484, %v497
    %v499 = vrot.slane %v498, 4
    %v500 = vadd.f32 %v498, %v499
    %v501 = vrot.slane %v500, 2
    %v502 = vadd.f32 %v500, %v501
    %v503 = vrot.slane %v502, 1
    %v504 = vadd.f32 %v502, %v503
    %v505 = vsel %vm472, %v485, 0.0
    %v506 = vsel %vm474, %v488, 0.0
    %v507 = vadd.f32 %v505, %v506
    %v508 = vrot.slane %v507, 4
    %v509 = vadd.f32 %v507, %v508
    %v510 = vrot.slane %v509, 2
    %v511 = vadd.f32 %v509, %v510
    %v512 = vrot.slane %v511, 1
    %v513 = vadd.f32 %v511, %v512
    %vm514 = vcmask 1040384
    %v515 = vsel %vm514, 1.0, %v463
    %v516 = vsel %vm514, 1.0, %v471
    %v517 = vsel %vm514, 1.0, %v482
    %v518 = vsel %vm455, %v515, %v496
    %v519 = vsel %vm455, %v516, %v504
    %v520 = vsel %vm455, %v517, %v513
    %v522 = vsel %vm472, %v520, 0
    %524 = vmatprep.subr.mxu0 0.0
    %525 = vmatpush1.msra.mxu0 %v414
    %526 = vmatprep.subr.mxu0 0.0
    %527 = vmatpush1.msra.mxu0 %v415
    %528 = vmatprep.subr.mxu0 0.0
    %529 = vmatpush1.msra.mxu0 %v416
    %530 = vmatprep.subr.mxu0 0.0
    %531 = vmatpush1.msra.mxu0 %v417
    %532 = vmatprep.subr.mxu0 0.0
    %533 = vmatpush1.msra.mxu0 %v418
    %534 = vmatprep.subr.mxu0 0.0
    %535 = vmatpush1.msra.mxu0 %v419
    %536 = vmatprep.subr.mxu0 0.0
    %537 = vmatpush1.msra.mxu0 %v420
    %538 = vmatprep.subr.mxu0 0.0
    %539 = vmatpush1.msra.mxu0 %v421
    %540 = vmatprep.subr.mxu0 0.0
    %541 = vmatpush1.msra.mxu0 %v422
    %542 = vmatprep.subr.mxu0 0.0
    %543 = vmatpush1.msra.mxu0 %v423
    %544 = vmatprep.subr.mxu0 0.0
    %545 = vmatpush1.msra.mxu0 %v424
    %546 = vmatprep.subr.mxu0 0.0
    %547 = vmatpush1.msra.mxu0 %v425
    %548 = vmatprep.subr.mxu0 0.0
    %549 = vmatpush1.msra.mxu0 %v426
    %550 = vmatprep.subr.mxu0 0.0
    %551 = vmatpush1.msra.mxu0 %v427
    %552 = vmatprep.subr.mxu0 0.0
    %553 = vmatpush1.msra.mxu0 %v428
    %554 = vmatprep.subr.mxu0 0.0
    %555 = vmatpush1.msra.mxu0 %v429
    %556 = vmatprep.subr.mxu0 0.0
    %557 = vmatpush1.msra.mxu0 %v430
    %558 = vmatprep.subr.mxu0 0.0
    %559 = vmatpush1.msra.mxu0 %v431
    %560 = vmatprep.subr.mxu0 0.0
    %561 = vmatpush1.msra.mxu0 %v432
    %562 = vmatprep.subr.mxu0 0.0
    %563 = vmatpush1.msra.mxu0 %v433
    %564 = vmatprep.subr.mxu0 0.0
    %565 = vmatpush1.msra.mxu0 %v434
    %566 = vmatprep.subr.mxu0 0.0
    %567 = vmatpush1.msra.mxu0 %v435
    %568 = vmatprep.subr.mxu0 0.0
    %569 = vmatpush1.msra.mxu0 %v436
    %570 = vmatprep.subr.mxu0 0.0
    %571 = vmatpush1.msra.mxu0 %v437
    %572 = vmatprep.subr.mxu0 0.0
    %573 = vmatpush1.msra.mxu0 %v438
    %574 = vmatprep.subr.mxu0 0.0
    %575 = vmatpush1.msra.mxu0 %v439
    %576 = vmatprep.subr.mxu0 0.0
    %577 = vmatpush1.msra.mxu0 %v440
    %578 = vmatprep.subr.mxu0 0.0
    %579 = vmatpush1.msra.mxu0 %v441
    %580 = vmatprep.subr.mxu0 0.0
    %581 = vmatpush1.msra.mxu0 %v442
    %582 = vmatprep.subr.mxu0 0.0
    %583 = vmatpush1.msra.mxu0 %v443
    %584 = vmatprep.subr.mxu0 0.0
    %585 = vmatpush1.msra.mxu0 %v444
    %586 = vmatprep.subr.mxu0 0.0
    %587 = vmatpush1.msra.mxu0 %v445
    %588 = vmatprep.mubr.f32.mxu0 %v519
    %589 = vmatmul.mubr.f32.gmra.mrb[0].mxu0 %v518
    %v590 = vpop.f32.mrb[0].mxu0
    %v591 = vadd.f32 0.0, %v590
    %v592 = vpop.f32.mrb[0].mxu0
    %593 = vdwg.mxu0
    %594 = vmatprep.subr.mxu0 0.0
    %595 = vmatpush1.msra.mxu0 %v446
    %596 = vmatprep.subr.mxu0 0.0
    %597 = vmatpush1.msra.mxu0 %v447
    %598 = vmatprep.subr.mxu0 0.0
    %599 = vmatpush1.msra.mxu0 %v448
    %600 = vmatprep.subr.mxu0 0.0
    %601 = vmatpush1.msra.mxu0 %v449
    %602 = vmatprep.subr.mxu0 0.0
    %603 = vmatpush1.msra.mxu0 %v450
    %604 = vmatprep.subr.mxu0 0.0
    %605 = vmatpush1.msra.mxu0 %v451
    %606 = vmatprep.subr.mxu0 0.0
    %607 = vmatpush1.msra.mxu0 %v452
    %608 = vmatprep.subr.mxu0 0.0
    %609 = vmatpush1.msra.mxu0 %v453
    %610 = vmatprep.subr.mxu0 0.0
    %611 = vmatpush1.msra.mxu0 0.0
    %612 = vmatprep.subr.mxu0 0.0
    %613 = vmatpush1.msra.mxu0 0.0
    %614 = vmatprep.subr.mxu0 0.0
    %615 = vmatpush1.msra.mxu0 0.0
    %616 = vmatprep.subr.mxu0 0.0
    %617 = vmatpush1.msra.mxu0 0.0
    %618 = vmatprep.subr.mxu0 0.0
    %619 = vmatpush1.msra.mxu0 0.0
    %620 = vmatprep.subr.mxu0 0.0
    %621 = vmatpush1.msra.mxu0 0.0
    %622 = vmatprep.subr.mxu0 0.0
    %623 = vmatpush1.msra.mxu0 0.0
    %624 = vmatprep.subr.mxu0 0.0
    %625 = vmatpush1.msra.mxu0 0.0
    %626 = vmatprep.subr.mxu0 0.0
    %627 = vmatpush1.msra.mxu0 0.0
    %628 = vmatprep.subr.mxu0 0.0
    %629 = vmatpush1.msra.mxu0 0.0
    %630 = vmatprep.subr.mxu0 0.0
    %631 = vmatpush1.msra.mxu0 0.0
    %632 = vmatprep.subr.mxu0 0.0
    %633 = vmatpush1.msra.mxu0 0.0
    %634 = vmatprep.subr.mxu0 0.0
    %635 = vmatpush1.msra.mxu0 0.0
    %636 = vmatprep.subr.mxu0 0.0
    %637 = vmatpush1.msra.mxu0 0.0
    %638 = vmatprep.subr.mxu0 0.0
    %639 = vmatpush1.msra.mxu0 0.0
    %640 = vmatprep.subr.mxu0 0.0
    %641 = vmatpush1.msra.mxu0 0.0
    %642 = vmatprep.subr.mxu0 0.0
    %643 = vmatpush1.msra.mxu0 0.0
    %644 = vmatprep.subr.mxu0 0.0
    %645 = vmatpush1.msra.mxu0 0.0
    %646 = vmatprep.subr.mxu0 0.0
    %647 = vmatpush1.msra.mxu0 0.0
    %648 = vmatprep.subr.mxu0 0.0
    %649 = vmatpush1.msra.mxu0 0.0
    %650 = vmatprep.subr.mxu0 0.0
    %651 = vmatpush1.msra.mxu0 0.0
    %652 = vmatprep.subr.mxu0 0.0
    %653 = vmatpush1.msra.mxu0 0.0
    %654 = vmatprep.subr.mxu0 0.0
    %655 = vmatpush1.msra.mxu0 0.0
    %656 = vmatprep.subr.mxu0 0.0
    %657 = vmatpush1.msra.mxu0 0.0
    %658 = vmatprep.mubr.f32.mxu0 0.0
    %659 = vmatmul.mubr.f32.gmra.mrb[0].mxu0 %v522
    %v660 = vpop.f32.mrb[0].mxu0
    %v661 = vadd.f32 %v591, %v660
    %v662 = vpop.f32.mrb[0].mxu0
    %663 = vdwg.mxu0
    %v664 = vmul.f32 %v661, 10.0
    %v666 = vrot.slane %v664, 7
    %v668 = vrcp.pop %v666
    %v669 = vmul.f32 %v661, %v668
    %v670 = vrot.slane %v664, 6
    %v672 = vrcp.pop %v670
    %v673 = vmul.f32 %v661, %v672
    %v674 = vmul.f32 %v669, %v669
    %v676 = vrot.slane %v674, 7
    %v678 = vsub.f32 %v673, %v676
    %v679 = vmax.f32 %v678, 0.0
    %v680 = vadd.f32 %v679, 1e-05
    %v681 = vrsqrt.pop %v680
    %v683 = vrot.slane %v681, 2
    %v685 = vmul.f32 %v454, %v683
    %v687 = vrot.slane %v685, 7
    %v689 = vmul.f32 %v669, %v687
    %v690 = vsub.f32 %v454, %v689
    %v691 = vsel %vm514, %v685, %v690
    %v693 = vsel %vm472, %v691, 0
    %v696 = vsel %vm472, %v414, 0
    %v699 = vsel %vm472, %v415, 0
    %v702 = vsel %vm472, %v416, 0
    %v705 = vsel %vm472, %v417, 0
    %v708 = vsel %vm472, %v418, 0
    %v711 = vsel %vm472, %v419, 0
    %v714 = vsel %vm472, %v420, 0
    %v717 = vsel %vm472, %v421, 0
    %v720 = vsel %vm472, %v422, 0
    %v723 = vsel %vm472, %v423, 0
    %v726 = vsel %vm472, %v424, 0
    %v729 = vsel %vm472, %v425, 0
    %v732 = vsel %vm472, %v426, 0
    %v735 = vsel %vm472, %v427, 0
    %v738 = vsel %vm472, %v428, 0
    %v741 = vsel %vm472, %v429, 0
    %v744 = vsel %vm472, %v430, 0
    %v747 = vsel %vm472, %v431, 0
    %v750 = vsel %vm472, %v432, 0
    %v753 = vsel %vm472, %v433, 0
    %v756 = vsel %vm472, %v434, 0
    %v759 = vsel %vm472, %v435, 0
    %v762 = vsel %vm472, %v436, 0
    %v765 = vsel %vm472, %v437, 0
    %v768 = vsel %vm472, %v438, 0
    %v771 = vsel %vm472, %v439, 0
    %v774 = vsel %vm472, %v440, 0
    %v777 = vsel %vm472, %v441, 0
    %v780 = vsel %vm472, %v442, 0
    %v783 = vsel %vm472, %v443, 0
    %v786 = vsel %vm472, %v444, 0
    %v789 = vsel %vm472, %v445, 0
    %v792 = vsel %vm472, %v446, 0
    %v795 = vsel %vm472, %v447, 0
    %v798 = vsel %vm472, %v448, 0
    %v801 = vsel %vm472, %v449, 0
    %v804 = vsel %vm472, %v450, 0
    %v807 = vsel %vm472, %v451, 0
    %v810 = vsel %vm472, %v452, 0
    %v813 = vsel %vm472, %v453, 0
    %815 = vmatprep.subr.mxu0 0.0
    %816 = vmatpush1.xpose.msra.mxu0 %v696
    %817 = vmatprep.subr.mxu0 0.0
    %818 = vmatpush1.xpose.msra.mxu0 %v699
    %819 = vmatprep.subr.mxu0 0.0
    %820 = vmatpush1.xpose.msra.mxu0 %v702
    %821 = vmatprep.subr.mxu0 0.0
    %822 = vmatpush1.xpose.msra.mxu0 %v705
    %823 = vmatprep.subr.mxu0 0.0
    %824 = vmatpush1.xpose.msra.mxu0 %v708
    %825 = vmatprep.subr.mxu0 0.0
    %826 = vmatpush1.xpose.msra.mxu0 %v711
    %827 = vmatprep.subr.mxu0 0.0
    %828 = vmatpush1.xpose.msra.mxu0 %v714
    %829 = vmatprep.subr.mxu0 0.0
    %830 = vmatpush1.xpose.msra.mxu0 %v717
    %831 = vmatprep.subr.mxu0 0.0
    %832 = vmatpush1.xpose.msra.mxu0 %v720
    %833 = vmatprep.subr.mxu0 0.0
    %834 = vmatpush1.xpose.msra.mxu0 %v723
    %835 = vmatprep.subr.mxu0 0.0
    %836 = vmatpush1.xpose.msra.mxu0 %v726
    %837 = vmatprep.subr.mxu0 0.0
    %838 = vmatpush1.xpose.msra.mxu0 %v729
    %839 = vmatprep.subr.mxu0 0.0
    %840 = vmatpush1.xpose.msra.mxu0 %v732
    %841 = vmatprep.subr.mxu0 0.0
    %842 = vmatpush1.xpose.msra.mxu0 %v735
    %843 = vmatprep.subr.mxu0 0.0
    %844 = vmatpush1.xpose.msra.mxu0 %v738
    %845 = vmatprep.subr.mxu0 0.0
    %846 = vmatpush1.xpose.msra.mxu0 %v741
    %847 = vmatprep.subr.mxu0 0.0
    %848 = vmatpush1.xpose.msra.mxu0 %v744
    %849 = vmatprep.subr.mxu0 0.0
    %850 = vmatpush1.xpose.msra.mxu0 %v747
    %851 = vmatprep.subr.mxu0 0.0
    %852 = vmatpush1.xpose.msra.mxu0 %v750
    %853 = vmatprep.subr.mxu0 0.0
    %854 = vmatpush1.xpose.msra.mxu0 %v753
    %855 = vmatprep.subr.mxu0 0.0
    %856 = vmatpush1.xpose.msra.mxu0 %v756
    %857 = vmatprep.subr.mxu0 0.0
    %858 = vmatpush1.xpose.msra.mxu0 %v759
    %859 = vmatprep.subr.mxu0 0.0
    %860 = vmatpush1.xpose.msra.mxu0 %v762
    %861 = vmatprep.subr.mxu0 0.0
    %862 = vmatpush1.xpose.msra.mxu0 %v765
    %863 = vmatprep.subr.mxu0 0.0
    %864 = vmatpush1.xpose.msra.mxu0 %v768
    %865 = vmatprep.subr.mxu0 0.0
    %866 = vmatpush1.xpose.msra.mxu0 %v771
    %867 = vmatprep.subr.mxu0 0.0
    %868 = vmatpush1.xpose.msra.mxu0 %v774
    %869 = vmatprep.subr.mxu0 0.0
    %870 = vmatpush1.xpose.msra.mxu0 %v777
    %871 = vmatprep.subr.mxu0 0.0
    %872 = vmatpush1.xpose.msra.mxu0 %v780
    %873 = vmatprep.subr.mxu0 0.0
    %874 = vmatpush1.xpose.msra.mxu0 %v783
    %875 = vmatprep.subr.mxu0 0.0
    %876 = vmatpush1.xpose.msra.mxu0 %v786
    %877 = vmatprep.subr.mxu0 0.0
    %878 = vmatpush1.xpose.msra.mxu0 %v789
    %879 = vmatprep.mubr.f32.mxu0 0.0
    %880 = vmatmul.mubr.f32.gmra.mrb[0].mxu0 %v693
    %v881 = vpop.f32.mrb[0].mxu0
    %v882 = vadd.f32 0.0, %v881
    %v883 = vpop.f32.mrb[0].mxu0
    %v884 = vadd.f32 0.0, %v883
    %885 = vdwg.mxu0
    %886 = vmatprep.subr.mxu0 0.0
    %887 = vmatpush1.xpose.msra.mxu0 %v792
    %888 = vmatprep.subr.mxu0 0.0
    %889 = vmatpush1.xpose.msra.mxu0 %v795
    %890 = vmatprep.subr.mxu0 0.0
    %891 = vmatpush1.xpose.msra.mxu0 %v798
    %892 = vmatprep.subr.mxu0 0.0
    %893 = vmatpush1.xpose.msra.mxu0 %v801
    %894 = vmatprep.subr.mxu0 0.0
    %895 = vmatpush1.xpose.msra.mxu0 %v804
    %896 = vmatprep.subr.mxu0 0.0
    %897 = vmatpush1.xpose.msra.mxu0 %v807
    %898 = vmatprep.subr.mxu0 0.0
    %899 = vmatpush1.xpose.msra.mxu0 %v810
    %900 = vmatprep.subr.mxu0 0.0
    %901 = vmatpush1.xpose.msra.mxu0 %v813
    %902 = vmatprep.subr.mxu0 0.0
    %903 = vmatpush1.xpose.msra.mxu0 0.0
    %904 = vmatprep.subr.mxu0 0.0
    %905 = vmatpush1.xpose.msra.mxu0 0.0
    %906 = vmatprep.subr.mxu0 0.0
    %907 = vmatpush1.xpose.msra.mxu0 0.0
    %908 = vmatprep.subr.mxu0 0.0
    %909 = vmatpush1.xpose.msra.mxu0 0.0
    %910 = vmatprep.subr.mxu0 0.0
    %911 = vmatpush1.xpose.msra.mxu0 0.0
    %912 = vmatprep.subr.mxu0 0.0
    %913 = vmatpush1.xpose.msra.mxu0 0.0
    %914 = vmatprep.subr.mxu0 0.0
    %915 = vmatpush1.xpose.msra.mxu0 0.0
    %916 = vmatprep.subr.mxu0 0.0
    %917 = vmatpush1.xpose.msra.mxu0 0.0
    %918 = vmatprep.subr.mxu0 0.0
    %919 = vmatpush1.xpose.msra.mxu0 0.0
    %920 = vmatprep.subr.mxu0 0.0
    %921 = vmatpush1.xpose.msra.mxu0 0.0
    %922 = vmatprep.subr.mxu0 0.0
    %923 = vmatpush1.xpose.msra.mxu0 0.0
    %924 = vmatprep.subr.mxu0 0.0
    %925 = vmatpush1.xpose.msra.mxu0 0.0
    %926 = vmatprep.subr.mxu0 0.0
    %927 = vmatpush1.xpose.msra.mxu0 0.0
    %928 = vmatprep.subr.mxu0 0.0
    %929 = vmatpush1.xpose.msra.mxu0 0.0
    %930 = vmatprep.subr.mxu0 0.0
    %931 = vmatpush1.xpose.msra.mxu0 0.0
    %932 = vmatprep.subr.mxu0 0.0
    %933 = vmatpush1.xpose.msra.mxu0 0.0
    %934 = vmatprep.subr.mxu0 0.0
    %935 = vmatpush1.xpose.msra.mxu0 0.0
    %936 = vmatprep.subr.mxu0 0.0
    %937 = vmatpush1.xpose.msra.mxu0 0.0
    %938 = vmatprep.subr.mxu0 0.0
    %939 = vmatpush1.xpose.msra.mxu0 0.0
    %940 = vmatprep.subr.mxu0 0.0
    %941 = vmatpush1.xpose.msra.mxu0 0.0
    %942 = vmatprep.subr.mxu0 0.0
    %943 = vmatpush1.xpose.msra.mxu0 0.0
    %944 = vmatprep.subr.mxu0 0.0
    %945 = vmatpush1.xpose.msra.mxu0 0.0
    %946 = vmatprep.subr.mxu0 0.0
    %947 = vmatpush1.xpose.msra.mxu0 0.0
    %948 = vmatprep.subr.mxu0 0.0
    %949 = vmatpush1.xpose.msra.mxu0 0.0
    %950 = vmatprep.mubr.f32.mxu0 0.0
    %951 = vmatmul.mubr.f32.gmra.mrb[0].mxu0 %v693
    %v952 = vpop.f32.mrb[0].mxu0
    %v953 = vadd.f32 0.0, %v952
    %v954 = vpop.f32.mrb[0].mxu0
    %955 = vdwg.mxu0
    %v956 = vlaneseq
    %v957 = vshrl.u32 %v956, 7
    %v958 = vsub.s32 0, %v957
    %v959 = vrot.slane %v882, %v958
    %v960 = vlaneseq
    %v961 = vshrl.u32 %v960, 7
    %v962 = vsub.s32 0, %v961
    %v963 = vrot.slane %v884, %v962
    %v964 = vlaneseq
    %v965 = vshrl.u32 %v964, 7
    %v966 = vsub.s32 0, %v965
    %v967 = vrot.slane %v953, %v966
    %v968 = vmul.f32 %v325, %v959
    %v969 = vmul.f32 %v327, %v963
    %v970 = vmul.f32 %v368, %v967
    %v971 = vmul.f32 %v329, %v959
    %v972 = vmul.f32 %v331, %v963
    %v973 = vmul.f32 %v371, %v967
    %v974 = vlaneseq
    %v975 = vshrl.u32 %v974, 7
    %v976 = vsub.s32 1, %v975
    %v977 = vrot.slane %v882, %v976
    %v978 = vlaneseq
    %v979 = vshrl.u32 %v978, 7
    %v980 = vsub.s32 1, %v979
    %v981 = vrot.slane %v884, %v980
    %v982 = vlaneseq
    %v983 = vshrl.u32 %v982, 7
    %v984 = vsub.s32 1, %v983
    %v985 = vrot.slane %v953, %v984
    %v986 = vadd.f32 %v968, %v977
    %v987 = vadd.f32 %v969, %v981
    %v988 = vadd.f32 %v970, %v985
    %v989 = vadd.f32 %v971, %v977
    %v990 = vadd.f32 %v972, %v981
    %v991 = vadd.f32 %v973, %v985
    %v992 = vmax.f32 %v986, 0.0
    %v993 = vmax.f32 %v987, 0.0
    %v994 = vmax.f32 %v988, 0.0
    %v995 = vmax.f32 %v989, 0.0
    %v996 = vmax.f32 %v990, 0.0
    %v997 = vmax.f32 %v991, 0.0
    %v998 = vpack.c.bf16 %v995, %v992
    %v999 = vpack.c.bf16 %v996, %v993
    %v1000 = vpack.c.bf16 %v997, %v994
    %v1001 = vld [vmem:[%s4] sm:$0xff]
    %v1002 = vld [vmem:[%s4 + $0x8] sm:$0xff]
    %v1003 = vld [vmem:[%s4 + $0x10] sm:$0xff]
    %v1004 = vld [vmem:[%s4 + $0x18] sm:$0xff]
    %v1005 = vld [vmem:[%s4 + $0x20] sm:$0xff]
    %v1006 = vld [vmem:[%s4 + $0x28] sm:$0xff]
    %v1007 = vld [vmem:[%s4 + $0x30] sm:$0xff]
    %v1008 = vld [vmem:[%s4 + $0x38] sm:$0xff]
    %v1009 = vld [vmem:[%s4 + $0x40] sm:$0xff]
    %v1010 = vld [vmem:[%s4 + $0x48] sm:$0xff]
    %v1011 = vld [vmem:[%s4 + $0x50] sm:$0xff]
    %v1012 = vld [vmem:[%s4 + $0x58] sm:$0xff]
    %v1013 = vld [vmem:[%s4 + $0x60] sm:$0xff]
    %v1014 = vld [vmem:[%s4 + $0x68] sm:$0xff]
    %v1015 = vld [vmem:[%s4 + $0x70] sm:$0xff]
    %v1016 = vld [vmem:[%s4 + $0x78] sm:$0xff]
    %v1017 = vld [vmem:[%s4 + $0x80] sm:$0xff]
    %v1018 = vld [vmem:[%s4 + $0x88] sm:$0xff]
    %v1019 = vld [vmem:[%s4 + $0x90] sm:$0xff]
    %v1020 = vld [vmem:[%s4 + $0x98] sm:$0xff]
    %v1021 = vld [vmem:[%s4 + $0xa0] sm:$0xff]
    %v1022 = vld [vmem:[%s4 + $0xa8] sm:$0xff]
    %v1023 = vld [vmem:[%s4 + $0xb0] sm:$0xff]
    %v1024 = vld [vmem:[%s4 + $0xb8] sm:$0xff]
    %v1025 = vld [vmem:[%s4 + $0xc0] sm:$0xff]
    %v1026 = vld [vmem:[%s4 + $0xc8] sm:$0xff]
    %v1027 = vld [vmem:[%s4 + $0xd0] sm:$0xff]
    %v1028 = vld [vmem:[%s4 + $0xd8] sm:$0xff]
    %v1029 = vld [vmem:[%s4 + $0xe0] sm:$0xff]
    %v1030 = vld [vmem:[%s4 + $0xe8] sm:$0xff]
    %v1031 = vld [vmem:[%s4 + $0xf0] sm:$0xff]
    %v1032 = vld [vmem:[%s4 + $0xf8] sm:$0xff]
    %v1033 = vld [vmem:[%s4 + $0x100] sm:$0xff]
    %v1034 = vld [vmem:[%s4 + $0x108] sm:$0xff]
    %v1035 = vld [vmem:[%s4 + $0x110] sm:$0xff]
    %v1036 = vld [vmem:[%s4 + $0x118] sm:$0xff]
    %v1037 = vld [vmem:[%s4 + $0x120] sm:$0xff]
    %v1038 = vld [vmem:[%s4 + $0x128] sm:$0xff]
    %v1039 = vld [vmem:[%s4 + $0x130] sm:$0xff]
    %v1040 = vld [vmem:[%s4 + $0x138] sm:$0xff]
    %v1041 = vld [vmem:[%s4 + $0x140] sm:$0xff]
    %v1042 = vld [vmem:[%s4 + $0x148] sm:$0xff]
    %v1043 = vld [vmem:[%s4 + $0x150] sm:$0xff]
    %v1044 = vld [vmem:[%s4 + $0x158] sm:$0xff]
    %v1045 = vld [vmem:[%s4 + $0x160] sm:$0xff]
    %v1046 = vld [vmem:[%s4 + $0x168] sm:$0xff]
    %v1047 = vld [vmem:[%s4 + $0x170] sm:$0xff]
    %v1048 = vld [vmem:[%s4 + $0x178] sm:$0xff]
    %v1049 = vld [vmem:[%s4 + $0x180] sm:$0xff]
    %v1050 = vld [vmem:[%s4 + $0x188] sm:$0xff]
    %v1051 = vld [vmem:[%s4 + $0x190] sm:$0xff]
    %v1052 = vld [vmem:[%s4 + $0x198] sm:$0xff]
    %v1053 = vld [vmem:[%s4 + $0x1a0] sm:$0xff]
    %v1054 = vld [vmem:[%s4 + $0x1a8] sm:$0xff]
    %v1055 = vld [vmem:[%s4 + $0x1b0] sm:$0xff]
    %v1056 = vld [vmem:[%s4 + $0x1b8] sm:$0xff]
    %v1057 = vld [vmem:[%s4 + $0x1c0] sm:$0xff]
    %v1058 = vld [vmem:[%s4 + $0x1c8] sm:$0xff]
    %v1059 = vld [vmem:[%s4 + $0x1d0] sm:$0xff]
    %v1060 = vld [vmem:[%s4 + $0x1d8] sm:$0xff]
    %v1061 = vld [vmem:[%s4 + $0x1e0] sm:$0xff]
    %v1062 = vld [vmem:[%s4 + $0x1e8] sm:$0xff]
    %v1063 = vld [vmem:[%s4 + $0x1f0] sm:$0xff]
    %v1064 = vld [vmem:[%s4 + $0x1f8] sm:$0xff]
    %v1065 = vld [vmem:[%s4 + $0x200] sm:$0xff]
    %v1066 = vld [vmem:[%s4 + $0x208] sm:$0xff]
    %v1067 = vld [vmem:[%s4 + $0x210] sm:$0xff]
    %v1068 = vld [vmem:[%s4 + $0x218] sm:$0xff]
    %v1069 = vld [vmem:[%s4 + $0x220] sm:$0xff]
    %v1070 = vld [vmem:[%s4 + $0x228] sm:$0xff]
    %v1071 = vld [vmem:[%s4 + $0x230] sm:$0xff]
    %v1072 = vld [vmem:[%s4 + $0x238] sm:$0xff]
    %v1073 = vld [vmem:[%s4 + $0x240] sm:$0xff]
    %v1074 = vld [vmem:[%s4 + $0x248] sm:$0xff]
    %v1075 = vld [vmem:[%s4 + $0x250] sm:$0xff]
    %v1076 = vld [vmem:[%s4 + $0x258] sm:$0xff]
    %v1077 = vld [vmem:[%s4 + $0x260] sm:$0xff]
    %v1078 = vld [vmem:[%s4 + $0x268] sm:$0xff]
    %v1079 = vld [vmem:[%s4 + $0x270] sm:$0xff]
    %v1080 = vld [vmem:[%s4 + $0x278] sm:$0xff]
    %v1161 = vunpack.c.l.b16 %v1001
    %v1162 = vunpack.c.h.b16 %v1001
    %v1163 = vunpack.c.l.b16 %v1002
    %v1164 = vunpack.c.h.b16 %v1002
    %v1165 = vunpack.c.l.b16 %v1003
    %v1166 = vunpack.c.h.b16 %v1003
    %v1167 = vunpack.c.l.b16 %v1004
    %v1168 = vunpack.c.h.b16 %v1004
    %v1169 = vunpack.c.l.b16 %v1005
    %v1170 = vunpack.c.h.b16 %v1005
    %v1171 = vunpack.c.l.b16 %v1006
    %v1172 = vunpack.c.h.b16 %v1006
    %v1173 = vunpack.c.l.b16 %v1007
    %v1174 = vunpack.c.h.b16 %v1007
    %v1175 = vunpack.c.l.b16 %v1008
    %v1176 = vunpack.c.h.b16 %v1008
    %v1177 = vunpack.c.l.b16 %v1009
    %v1178 = vunpack.c.h.b16 %v1009
    %v1179 = vunpack.c.l.b16 %v1010
    %v1180 = vunpack.c.h.b16 %v1010
    %v1181 = vunpack.c.l.b16 %v1011
    %v1182 = vunpack.c.h.b16 %v1011
    %v1183 = vunpack.c.l.b16 %v1012
    %v1184 = vunpack.c.h.b16 %v1012
    %v1185 = vunpack.c.l.b16 %v1013
    %v1186 = vunpack.c.h.b16 %v1013
    %v1187 = vunpack.c.l.b16 %v1014
    %v1188 = vunpack.c.h.b16 %v1014
    %v1189 = vunpack.c.l.b16 %v1015
    %v1190 = vunpack.c.h.b16 %v1015
    %v1191 = vunpack.c.l.b16 %v1016
    %v1192 = vunpack.c.h.b16 %v1016
    %v1193 = vunpack.c.l.b16 %v1017
    %v1194 = vunpack.c.h.b16 %v1017
    %v1195 = vunpack.c.l.b16 %v1018
    %v1196 = vunpack.c.h.b16 %v1018
    %v1197 = vunpack.c.l.b16 %v1019
    %v1198 = vunpack.c.h.b16 %v1019
    %v1199 = vunpack.c.l.b16 %v1020
    %v1200 = vunpack.c.h.b16 %v1020
    %v1201 = vunpack.c.l.b16 %v1021
    %v1202 = vunpack.c.h.b16 %v1021
    %v1203 = vunpack.c.l.b16 %v1022
    %v1204 = vunpack.c.h.b16 %v1022
    %v1205 = vunpack.c.l.b16 %v1023
    %v1206 = vunpack.c.h.b16 %v1023
    %v1207 = vunpack.c.l.b16 %v1024
    %v1208 = vunpack.c.h.b16 %v1024
    %v1209 = vunpack.c.l.b16 %v1025
    %v1210 = vunpack.c.h.b16 %v1025
    %v1211 = vunpack.c.l.b16 %v1026
    %v1212 = vunpack.c.h.b16 %v1026
    %v1213 = vunpack.c.l.b16 %v1027
    %v1214 = vunpack.c.h.b16 %v1027
    %v1215 = vunpack.c.l.b16 %v1028
    %v1216 = vunpack.c.h.b16 %v1028
    %v1217 = vunpack.c.l.b16 %v1029
    %v1218 = vunpack.c.h.b16 %v1029
    %v1219 = vunpack.c.l.b16 %v1030
    %v1220 = vunpack.c.h.b16 %v1030
    %v1221 = vunpack.c.l.b16 %v1031
    %v1222 = vunpack.c.h.b16 %v1031
    %v1223 = vunpack.c.l.b16 %v1032
    %v1224 = vunpack.c.h.b16 %v1032
    %v1225 = vunpack.c.l.b16 %v1033
    %v1226 = vunpack.c.h.b16 %v1033
    %v1227 = vunpack.c.l.b16 %v1034
    %v1228 = vunpack.c.h.b16 %v1034
    %v1229 = vunpack.c.l.b16 %v1035
    %v1230 = vunpack.c.h.b16 %v1035
    %v1231 = vunpack.c.l.b16 %v1036
    %v1232 = vunpack.c.h.b16 %v1036
    %v1233 = vunpack.c.l.b16 %v1037
    %v1234 = vunpack.c.h.b16 %v1037
    %v1235 = vunpack.c.l.b16 %v1038
    %v1236 = vunpack.c.h.b16 %v1038
    %v1237 = vunpack.c.l.b16 %v1039
    %v1238 = vunpack.c.h.b16 %v1039
    %v1239 = vunpack.c.l.b16 %v1040
    %v1240 = vunpack.c.h.b16 %v1040
    %v1241 = vunpack.c.l.b16 %v1041
    %v1242 = vunpack.c.h.b16 %v1041
    %v1243 = vunpack.c.l.b16 %v1042
    %v1244 = vunpack.c.h.b16 %v1042
    %v1245 = vunpack.c.l.b16 %v1043
    %v1246 = vunpack.c.h.b16 %v1043
    %v1247 = vunpack.c.l.b16 %v1044
    %v1248 = vunpack.c.h.b16 %v1044
    %v1249 = vunpack.c.l.b16 %v1045
    %v1250 = vunpack.c.h.b16 %v1045
    %v1251 = vunpack.c.l.b16 %v1046
    %v1252 = vunpack.c.h.b16 %v1046
    %v1253 = vunpack.c.l.b16 %v1047
    %v1254 = vunpack.c.h.b16 %v1047
    %v1255 = vunpack.c.l.b16 %v1048
    %v1256 = vunpack.c.h.b16 %v1048
    %v1257 = vunpack.c.l.b16 %v1049
    %v1258 = vunpack.c.h.b16 %v1049
    %v1259 = vunpack.c.l.b16 %v1050
    %v1260 = vunpack.c.h.b16 %v1050
    %v1261 = vunpack.c.l.b16 %v1051
    %v1262 = vunpack.c.h.b16 %v1051
    %v1263 = vunpack.c.l.b16 %v1052
    %v1264 = vunpack.c.h.b16 %v1052
    %v1265 = vunpack.c.l.b16 %v1053
    %v1266 = vunpack.c.h.b16 %v1053
    %v1267 = vunpack.c.l.b16 %v1054
    %v1268 = vunpack.c.h.b16 %v1054
    %v1269 = vunpack.c.l.b16 %v1055
    %v1270 = vunpack.c.h.b16 %v1055
    %v1271 = vunpack.c.l.b16 %v1056
    %v1272 = vunpack.c.h.b16 %v1056
    %v1273 = vunpack.c.l.b16 %v1057
    %v1274 = vunpack.c.h.b16 %v1057
    %v1275 = vunpack.c.l.b16 %v1058
    %v1276 = vunpack.c.h.b16 %v1058
    %v1277 = vunpack.c.l.b16 %v1059
    %v1278 = vunpack.c.h.b16 %v1059
    %v1279 = vunpack.c.l.b16 %v1060
    %v1280 = vunpack.c.h.b16 %v1060
    %v1281 = vunpack.c.l.b16 %v1061
    %v1282 = vunpack.c.h.b16 %v1061
    %v1283 = vunpack.c.l.b16 %v1062
    %v1284 = vunpack.c.h.b16 %v1062
    %v1285 = vunpack.c.l.b16 %v1063
    %v1286 = vunpack.c.h.b16 %v1063
    %v1287 = vunpack.c.l.b16 %v1064
    %v1288 = vunpack.c.h.b16 %v1064
    %v1289 = vunpack.c.l.b16 %v1065
    %v1290 = vunpack.c.h.b16 %v1065
    %v1291 = vunpack.c.l.b16 %v1066
    %v1292 = vunpack.c.h.b16 %v1066
    %v1293 = vunpack.c.l.b16 %v1067
    %v1294 = vunpack.c.h.b16 %v1067
    %v1295 = vunpack.c.l.b16 %v1068
    %v1296 = vunpack.c.h.b16 %v1068
    %v1297 = vunpack.c.l.b16 %v1069
    %v1298 = vunpack.c.h.b16 %v1069
    %v1299 = vunpack.c.l.b16 %v1070
    %v1300 = vunpack.c.h.b16 %v1070
    %v1301 = vunpack.c.l.b16 %v1071
    %v1302 = vunpack.c.h.b16 %v1071
    %v1303 = vunpack.c.l.b16 %v1072
    %v1304 = vunpack.c.h.b16 %v1072
    %v1305 = vunpack.c.l.b16 %v1073
    %v1306 = vunpack.c.h.b16 %v1073
    %v1307 = vunpack.c.l.b16 %v1074
    %v1308 = vunpack.c.h.b16 %v1074
    %v1309 = vunpack.c.l.b16 %v1075
    %v1310 = vunpack.c.h.b16 %v1075
    %v1311 = vunpack.c.l.b16 %v1076
    %v1312 = vunpack.c.h.b16 %v1076
    %v1313 = vunpack.c.l.b16 %v1077
    %v1314 = vunpack.c.h.b16 %v1077
    %v1315 = vunpack.c.l.b16 %v1078
    %v1316 = vunpack.c.h.b16 %v1078
    %v1317 = vunpack.c.l.b16 %v1079
    %v1318 = vunpack.c.h.b16 %v1079
    %v1319 = vunpack.c.l.b16 %v1080
    %v1320 = vunpack.c.h.b16 %v1080
    %v1321 = vpack.c.b16 %v1165, %v1161
    %v1322 = vpack.c.b16 %v1166, %v1162
    %v1323 = vpack.c.b16 %v1167, %v1163
    %v1324 = vpack.c.b16 %v1168, %v1164
    %v1325 = vpack.c.b16 %v1173, %v1169
    %v1326 = vpack.c.b16 %v1174, %v1170
    %v1327 = vpack.c.b16 %v1175, %v1171
    %v1328 = vpack.c.b16 %v1176, %v1172
    %v1329 = vpack.c.b16 %v1181, %v1177
    %v1330 = vpack.c.b16 %v1182, %v1178
    %v1331 = vpack.c.b16 %v1183, %v1179
    %v1332 = vpack.c.b16 %v1184, %v1180
    %v1333 = vpack.c.b16 %v1189, %v1185
    %v1334 = vpack.c.b16 %v1190, %v1186
    %v1335 = vpack.c.b16 %v1191, %v1187
    %v1336 = vpack.c.b16 %v1192, %v1188
    %v1337 = vpack.c.b16 %v1197, %v1193
    %v1338 = vpack.c.b16 %v1198, %v1194
    %v1339 = vpack.c.b16 %v1199, %v1195
    %v1340 = vpack.c.b16 %v1200, %v1196
    %v1341 = vpack.c.b16 %v1205, %v1201
    %v1342 = vpack.c.b16 %v1206, %v1202
    %v1343 = vpack.c.b16 %v1207, %v1203
    %v1344 = vpack.c.b16 %v1208, %v1204
    %v1345 = vpack.c.b16 %v1213, %v1209
    %v1346 = vpack.c.b16 %v1214, %v1210
    %v1347 = vpack.c.b16 %v1215, %v1211
    %v1348 = vpack.c.b16 %v1216, %v1212
    %v1349 = vpack.c.b16 %v1221, %v1217
    %v1350 = vpack.c.b16 %v1222, %v1218
    %v1351 = vpack.c.b16 %v1223, %v1219
    %v1352 = vpack.c.b16 %v1224, %v1220
    %v1353 = vpack.c.b16 %v1229, %v1225
    %v1354 = vpack.c.b16 %v1230, %v1226
    %v1355 = vpack.c.b16 %v1231, %v1227
    %v1356 = vpack.c.b16 %v1232, %v1228
    %v1357 = vpack.c.b16 %v1237, %v1233
    %v1358 = vpack.c.b16 %v1238, %v1234
    %v1359 = vpack.c.b16 %v1239, %v1235
    %v1360 = vpack.c.b16 %v1240, %v1236
    %v1361 = vpack.c.b16 %v1245, %v1241
    %v1362 = vpack.c.b16 %v1246, %v1242
    %v1363 = vpack.c.b16 %v1247, %v1243
    %v1364 = vpack.c.b16 %v1248, %v1244
    %v1365 = vpack.c.b16 %v1253, %v1249
    %v1366 = vpack.c.b16 %v1254, %v1250
    %v1367 = vpack.c.b16 %v1255, %v1251
    %v1368 = vpack.c.b16 %v1256, %v1252
    %v1369 = vpack.c.b16 %v1261, %v1257
    %v1370 = vpack.c.b16 %v1262, %v1258
    %v1371 = vpack.c.b16 %v1263, %v1259
    %v1372 = vpack.c.b16 %v1264, %v1260
    %v1373 = vpack.c.b16 %v1269, %v1265
    %v1374 = vpack.c.b16 %v1270, %v1266
    %v1375 = vpack.c.b16 %v1271, %v1267
    %v1376 = vpack.c.b16 %v1272, %v1268
    %v1377 = vpack.c.b16 %v1277, %v1273
    %v1378 = vpack.c.b16 %v1278, %v1274
    %v1379 = vpack.c.b16 %v1279, %v1275
    %v1380 = vpack.c.b16 %v1280, %v1276
    %v1381 = vpack.c.b16 %v1285, %v1281
    %v1382 = vpack.c.b16 %v1286, %v1282
    %v1383 = vpack.c.b16 %v1287, %v1283
    %v1384 = vpack.c.b16 %v1288, %v1284
    %v1385 = vpack.c.b16 %v1293, %v1289
    %v1386 = vpack.c.b16 %v1294, %v1290
    %v1387 = vpack.c.b16 %v1295, %v1291
    %v1388 = vpack.c.b16 %v1296, %v1292
    %v1389 = vpack.c.b16 %v1301, %v1297
    %v1390 = vpack.c.b16 %v1302, %v1298
    %v1391 = vpack.c.b16 %v1303, %v1299
    %v1392 = vpack.c.b16 %v1304, %v1300
    %v1393 = vpack.c.b16 %v1309, %v1305
    %v1394 = vpack.c.b16 %v1310, %v1306
    %v1395 = vpack.c.b16 %v1311, %v1307
    %v1396 = vpack.c.b16 %v1312, %v1308
    %v1397 = vpack.c.b16 %v1317, %v1313
    %v1398 = vpack.c.b16 %v1318, %v1314
    %v1399 = vpack.c.b16 %v1319, %v1315
    %v1400 = vpack.c.b16 %v1320, %v1316
    %v1482 = vsel %vm472, %v1000, 0
    %1484 = vmatprep.subr.bf16.mxu0 %v1322
    %1485 = vmatpush1.bf16.msra.mxu0 %v1321
    %1486 = vmatprep.subr.bf16.mxu0 %v1326
    %1487 = vmatpush1.bf16.msra.mxu0 %v1325
    %1488 = vmatprep.subr.bf16.mxu0 %v1330
    %1489 = vmatpush1.bf16.msra.mxu0 %v1329
    %1490 = vmatprep.subr.bf16.mxu0 %v1334
    %1491 = vmatpush1.bf16.msra.mxu0 %v1333
    %1492 = vmatprep.subr.bf16.mxu0 %v1338
    %1493 = vmatpush1.bf16.msra.mxu0 %v1337
    %1494 = vmatprep.subr.bf16.mxu0 %v1342
    %1495 = vmatpush1.bf16.msra.mxu0 %v1341
    %1496 = vmatprep.subr.bf16.mxu0 %v1346
    %1497 = vmatpush1.bf16.msra.mxu0 %v1345
    %1498 = vmatprep.subr.bf16.mxu0 %v1350
    %1499 = vmatpush1.bf16.msra.mxu0 %v1349
    %1500 = vmatprep.subr.bf16.mxu0 %v1354
    %1501 = vmatpush1.bf16.msra.mxu0 %v1353
    %1502 = vmatprep.subr.bf16.mxu0 %v1358
    %1503 = vmatpush1.bf16.msra.mxu0 %v1357
    %1504 = vmatprep.subr.bf16.mxu0 %v1362
    %1505 = vmatpush1.bf16.msra.mxu0 %v1361
    %1506 = vmatprep.subr.bf16.mxu0 %v1366
    %1507 = vmatpush1.bf16.msra.mxu0 %v1365
    %1508 = vmatprep.subr.bf16.mxu0 %v1370
    %1509 = vmatpush1.bf16.msra.mxu0 %v1369
    %1510 = vmatprep.subr.bf16.mxu0 %v1374
    %1511 = vmatpush1.bf16.msra.mxu0 %v1373
    %1512 = vmatprep.subr.bf16.mxu0 %v1378
    %1513 = vmatpush1.bf16.msra.mxu0 %v1377
    %1514 = vmatprep.subr.bf16.mxu0 %v1382
    %1515 = vmatpush1.bf16.msra.mxu0 %v1381
    %1516 = vmatprep.mubr.bf16.mxu0 %v999
    %1517 = vmatmul.mubr.bf16.gmra.mrb[0].mxu0 %v998
    %v1518 = vpop.f32.mrb[0].mxu0
    %v1519 = vadd.f32 0.0, %v1518
    %v1520 = vpop.f32.mrb[0].mxu0
    %v1521 = vadd.f32 0.0, %v1520
    %v1522 = vpop.f32.mrb[0].mxu0
    %v1523 = vadd.f32 0.0, %v1522
    %v1524 = vpop.f32.mrb[0].mxu0
    %v1525 = vadd.f32 0.0, %v1524
    %1526 = vdwg.mxu0
    %1527 = vmatprep.subr.bf16.mxu0 %v1386
    %1528 = vmatpush1.bf16.msra.mxu0 %v1385
    %1529 = vmatprep.subr.bf16.mxu0 %v1390
    %1530 = vmatpush1.bf16.msra.mxu0 %v1389
    %1531 = vmatprep.subr.bf16.mxu0 %v1394
    %1532 = vmatpush1.bf16.msra.mxu0 %v1393
    %1533 = vmatprep.subr.bf16.mxu0 %v1398
    %1534 = vmatpush1.bf16.msra.mxu0 %v1397
    %1535 = vmatprep.subr.bf16.mxu0 0
    %1536 = vmatpush1.bf16.msra.mxu0 0
    %1537 = vmatprep.subr.bf16.mxu0 0
    %1538 = vmatpush1.bf16.msra.mxu0 0
    %1539 = vmatprep.subr.bf16.mxu0 0
    %1540 = vmatpush1.bf16.msra.mxu0 0
    %1541 = vmatprep.subr.bf16.mxu0 0
    %1542 = vmatpush1.bf16.msra.mxu0 0
    %1543 = vmatprep.subr.bf16.mxu0 0
    %1544 = vmatpush1.bf16.msra.mxu0 0
    %1545 = vmatprep.subr.bf16.mxu0 0
    %1546 = vmatpush1.bf16.msra.mxu0 0
    %1547 = vmatprep.subr.bf16.mxu0 0
    %1548 = vmatpush1.bf16.msra.mxu0 0
    %1549 = vmatprep.subr.bf16.mxu0 0
    %1550 = vmatpush1.bf16.msra.mxu0 0
    %1551 = vmatprep.subr.bf16.mxu0 0
    %1552 = vmatpush1.bf16.msra.mxu0 0
    %1553 = vmatprep.subr.bf16.mxu0 0
    %1554 = vmatpush1.bf16.msra.mxu0 0
    %1555 = vmatprep.subr.bf16.mxu0 0
    %1556 = vmatpush1.bf16.msra.mxu0 0
    %1557 = vmatprep.subr.bf16.mxu0 0
    %1558 = vmatpush1.bf16.msra.mxu0 0
    %1559 = vmatprep.mubr.bf16.mxu0 0
    %1560 = vmatmul.mubr.bf16.gmra.mrb[0].mxu0 %v1482
    %v1561 = vpop.f32.mrb[0].mxu0
    %v1562 = vadd.f32 %v1519, %v1561
    %v1563 = vpop.f32.mrb[0].mxu0
    %v1564 = vadd.f32 %v1521, %v1563
    %v1565 = vpop.f32.mrb[0].mxu0
    %v1566 = vadd.f32 %v1523, %v1565
    %v1567 = vpop.f32.mrb[0].mxu0
    %v1568 = vadd.f32 %v1525, %v1567
    %1569 = vdwg.mxu0
    %1570 = vmatprep.subr.bf16.mxu0 %v1324
    %1571 = vmatpush1.bf16.msra.mxu0 %v1323
    %1572 = vmatprep.subr.bf16.mxu0 %v1328
    %1573 = vmatpush1.bf16.msra.mxu0 %v1327
    %1574 = vmatprep.subr.bf16.mxu0 %v1332
    %1575 = vmatpush1.bf16.msra.mxu0 %v1331
    %1576 = vmatprep.subr.bf16.mxu0 %v1336
    %1577 = vmatpush1.bf16.msra.mxu0 %v1335
    %1578 = vmatprep.subr.bf16.mxu0 %v1340
    %1579 = vmatpush1.bf16.msra.mxu0 %v1339
    %1580 = vmatprep.subr.bf16.mxu0 %v1344
    %1581 = vmatpush1.bf16.msra.mxu0 %v1343
    %1582 = vmatprep.subr.bf16.mxu0 %v1348
    %1583 = vmatpush1.bf16.msra.mxu0 %v1347
    %1584 = vmatprep.subr.bf16.mxu0 %v1352
    %1585 = vmatpush1.bf16.msra.mxu0 %v1351
    %1586 = vmatprep.subr.bf16.mxu0 %v1356
    %1587 = vmatpush1.bf16.msra.mxu0 %v1355
    %1588 = vmatprep.subr.bf16.mxu0 %v1360
    %1589 = vmatpush1.bf16.msra.mxu0 %v1359
    %1590 = vmatprep.subr.bf16.mxu0 %v1364
    %1591 = vmatpush1.bf16.msra.mxu0 %v1363
    %1592 = vmatprep.subr.bf16.mxu0 %v1368
    %1593 = vmatpush1.bf16.msra.mxu0 %v1367
    %1594 = vmatprep.subr.bf16.mxu0 %v1372
    %1595 = vmatpush1.bf16.msra.mxu0 %v1371
    %1596 = vmatprep.subr.bf16.mxu0 %v1376
    %1597 = vmatpush1.bf16.msra.mxu0 %v1375
    %1598 = vmatprep.subr.bf16.mxu0 %v1380
    %1599 = vmatpush1.bf16.msra.mxu0 %v1379
    %1600 = vmatprep.subr.bf16.mxu0 %v1384
    %1601 = vmatpush1.bf16.msra.mxu0 %v1383
    %1602 = vmatprep.mubr.bf16.mxu0 %v999
    %1603 = vmatmul.mubr.bf16.gmra.mrb[0].mxu0 %v998
    %v1604 = vpop.f32.mrb[0].mxu0
    %v1605 = vadd.f32 0.0, %v1604
    %v1606 = vpop.f32.mrb[0].mxu0
    %v1607 = vadd.f32 0.0, %v1606
    %v1608 = vpop.f32.mrb[0].mxu0
    %v1609 = vadd.f32 0.0, %v1608
    %v1610 = vpop.f32.mrb[0].mxu0
    %v1611 = vadd.f32 0.0, %v1610
    %1612 = vdwg.mxu0
    %1613 = vmatprep.subr.bf16.mxu0 %v1388
    %1614 = vmatpush1.bf16.msra.mxu0 %v1387
    %1615 = vmatprep.subr.bf16.mxu0 %v1392
    %1616 = vmatpush1.bf16.msra.mxu0 %v1391
    %1617 = vmatprep.subr.bf16.mxu0 %v1396
    %1618 = vmatpush1.bf16.msra.mxu0 %v1395
    %1619 = vmatprep.subr.bf16.mxu0 %v1400
    %1620 = vmatpush1.bf16.msra.mxu0 %v1399
    %1621 = vmatprep.subr.bf16.mxu0 0
    %1622 = vmatpush1.bf16.msra.mxu0 0
    %1623 = vmatprep.subr.bf16.mxu0 0
    %1624 = vmatpush1.bf16.msra.mxu0 0
    %1625 = vmatprep.subr.bf16.mxu0 0
    %1626 = vmatpush1.bf16.msra.mxu0 0
    %1627 = vmatprep.subr.bf16.mxu0 0
    %1628 = vmatpush1.bf16.msra.mxu0 0
    %1629 = vmatprep.subr.bf16.mxu0 0
    %1630 = vmatpush1.bf16.msra.mxu0 0
    %1631 = vmatprep.subr.bf16.mxu0 0
    %1632 = vmatpush1.bf16.msra.mxu0 0
    %1633 = vmatprep.subr.bf16.mxu0 0
    %1634 = vmatpush1.bf16.msra.mxu0 0
    %1635 = vmatprep.subr.bf16.mxu0 0
    %1636 = vmatpush1.bf16.msra.mxu0 0
    %1637 = vmatprep.subr.bf16.mxu0 0
    %1638 = vmatpush1.bf16.msra.mxu0 0
    %1639 = vmatprep.subr.bf16.mxu0 0
    %1640 = vmatpush1.bf16.msra.mxu0 0
    %1641 = vmatprep.subr.bf16.mxu0 0
    %1642 = vmatpush1.bf16.msra.mxu0 0
    %1643 = vmatprep.subr.bf16.mxu0 0
    %1644 = vmatpush1.bf16.msra.mxu0 0
    %1645 = vmatprep.mubr.bf16.mxu0 0
    %1646 = vmatmul.mubr.bf16.gmra.mrb[0].mxu0 %v1482
    %v1647 = vpop.f32.mrb[0].mxu0
    %v1648 = vadd.f32 %v1605, %v1647
    %v1649 = vpop.f32.mrb[0].mxu0
    %v1650 = vadd.f32 %v1607, %v1649
    %v1651 = vpop.f32.mrb[0].mxu0
    %v1652 = vadd.f32 %v1609, %v1651
    %v1653 = vpop.f32.mrb[0].mxu0
    %v1654 = vadd.f32 %v1611, %v1653
    %1655 = vdwg.mxu0
    %v1656 = vld [vmem:[%s5] sm:$0xf]
    %v1657 = vld [vmem:[%s5 + $0x4] sm:$0xf]
    %v1658 = vld [vmem:[%s5 + $0x8] sm:$0xf]
    %v1659 = vld [vmem:[%s5 + $0xc] sm:$0xf]
    %v1660 = vld [vmem:[%s5 + $0x10] sm:$0xf]
    %v1661 = vld [vmem:[%s5 + $0x14] sm:$0xf]
    %v1662 = vld [vmem:[%s5 + $0x18] sm:$0xf]
    %v1663 = vld [vmem:[%s5 + $0x1c] sm:$0xf]
    %v1664 = vld [vmem:[%s5 + $0x20] sm:$0xf]
    %v1665 = vld [vmem:[%s5 + $0x24] sm:$0xf]
    %v1666 = vld [vmem:[%s5 + $0x28] sm:$0xf]
    %v1667 = vld [vmem:[%s5 + $0x2c] sm:$0xf]
    %v1668 = vld [vmem:[%s5 + $0x30] sm:$0xf]
    %v1669 = vld [vmem:[%s5 + $0x34] sm:$0xf]
    %v1670 = vld [vmem:[%s5 + $0x38] sm:$0xf]
    %v1671 = vld [vmem:[%s5 + $0x3c] sm:$0xf]
    %v1672 = vld [vmem:[%s5 + $0x40] sm:$0xf]
    %v1673 = vld [vmem:[%s5 + $0x44] sm:$0xf]
    %v1674 = vld [vmem:[%s5 + $0x48] sm:$0xf]
    %v1675 = vld [vmem:[%s5 + $0x4c] sm:$0xf]
    %v1676 = vld [vmem:[%s5 + $0x50] sm:$0xf]
    %v1677 = vld [vmem:[%s5 + $0x54] sm:$0xf]
    %v1678 = vld [vmem:[%s5 + $0x58] sm:$0xf]
    %v1679 = vld [vmem:[%s5 + $0x5c] sm:$0xf]
    %v1680 = vld [vmem:[%s5 + $0x60] sm:$0xf]
    %v1681 = vld [vmem:[%s5 + $0x64] sm:$0xf]
    %v1682 = vld [vmem:[%s5 + $0x68] sm:$0xf]
    %v1683 = vld [vmem:[%s5 + $0x6c] sm:$0xf]
    %v1684 = vld [vmem:[%s5 + $0x70] sm:$0xf]
    %v1685 = vld [vmem:[%s5 + $0x74] sm:$0xf]
    %v1686 = vld [vmem:[%s5 + $0x78] sm:$0xf]
    %v1687 = vld [vmem:[%s5 + $0x7c] sm:$0xf]
    %v1688 = vld [vmem:[%s5 + $0x80] sm:$0xf]
    %v1689 = vld [vmem:[%s5 + $0x84] sm:$0xf]
    %v1690 = vld [vmem:[%s5 + $0x88] sm:$0xf]
    %v1691 = vld [vmem:[%s5 + $0x8c] sm:$0xf]
    %v1692 = vld [vmem:[%s5 + $0x90] sm:$0xf]
    %v1693 = vld [vmem:[%s5 + $0x94] sm:$0xf]
    %v1694 = vld [vmem:[%s5 + $0x98] sm:$0xf]
    %v1695 = vld [vmem:[%s5 + $0x9c] sm:$0xf]
    %v1696 = vld [vmem:[%s5 + $0xa0] sm:$0xf]
    %v1697 = vld [vmem:[%s5 + $0xa4] sm:$0xf]
    %v1698 = vld [vmem:[%s5 + $0xa8] sm:$0xf]
    %v1699 = vld [vmem:[%s5 + $0xac] sm:$0xf]
    %v1700 = vld [vmem:[%s5 + $0xb0] sm:$0xf]
    %v1701 = vld [vmem:[%s5 + $0xb4] sm:$0xf]
    %v1702 = vld [vmem:[%s5 + $0xb8] sm:$0xf]
    %v1703 = vld [vmem:[%s5 + $0xbc] sm:$0xf]
    %v1704 = vld [vmem:[%s5 + $0xc0] sm:$0xf]
    %v1705 = vld [vmem:[%s5 + $0xc4] sm:$0xf]
    %v1706 = vld [vmem:[%s5 + $0xc8] sm:$0xf]
    %v1707 = vld [vmem:[%s5 + $0xcc] sm:$0xf]
    %v1708 = vld [vmem:[%s5 + $0xd0] sm:$0xf]
    %v1709 = vld [vmem:[%s5 + $0xd4] sm:$0xf]
    %v1710 = vld [vmem:[%s5 + $0xd8] sm:$0xf]
    %v1711 = vld [vmem:[%s5 + $0xdc] sm:$0xf]
    %v1712 = vunpack.c.l.bf16 %v1656
    %v1713 = vunpack.c.l.bf16 %v1657
    %v1714 = vunpack.c.l.bf16 %v1658
    %v1715 = vunpack.c.l.bf16 %v1659
    %v1716 = vunpack.c.l.bf16 %v1660
    %v1717 = vunpack.c.l.bf16 %v1661
    %v1718 = vunpack.c.l.bf16 %v1662
    %v1719 = vunpack.c.l.bf16 %v1663
    %v1720 = vunpack.c.l.bf16 %v1664
    %v1721 = vunpack.c.l.bf16 %v1665
    %v1722 = vunpack.c.l.bf16 %v1666
    %v1723 = vunpack.c.l.bf16 %v1667
    %v1724 = vunpack.c.l.bf16 %v1668
    %v1725 = vunpack.c.l.bf16 %v1669
    %v1726 = vunpack.c.l.bf16 %v1670
    %v1727 = vunpack.c.l.bf16 %v1671
    %v1728 = vunpack.c.l.bf16 %v1672
    %v1729 = vunpack.c.l.bf16 %v1673
    %v1730 = vunpack.c.l.bf16 %v1674
    %v1731 = vunpack.c.l.bf16 %v1675
    %v1732 = vunpack.c.l.bf16 %v1676
    %v1733 = vunpack.c.l.bf16 %v1677
    %v1734 = vunpack.c.l.bf16 %v1678
    %v1735 = vunpack.c.l.bf16 %v1679
    %v1736 = vunpack.c.l.bf16 %v1680
    %v1737 = vunpack.c.l.bf16 %v1681
    %v1738 = vunpack.c.l.bf16 %v1682
    %v1739 = vunpack.c.l.bf16 %v1683
    %v1740 = vunpack.c.l.bf16 %v1684
    %v1741 = vunpack.c.l.bf16 %v1685
    %v1742 = vunpack.c.l.bf16 %v1686
    %v1743 = vunpack.c.l.bf16 %v1687
    %v1744 = vunpack.c.l.bf16 %v1688
    %v1745 = vunpack.c.l.bf16 %v1689
    %v1746 = vunpack.c.l.bf16 %v1690
    %v1747 = vunpack.c.l.bf16 %v1691
    %v1748 = vunpack.c.l.bf16 %v1692
    %v1749 = vunpack.c.l.bf16 %v1693
    %v1750 = vunpack.c.l.bf16 %v1694
    %v1751 = vunpack.c.l.bf16 %v1695
    %v1752 = vunpack.c.l.bf16 %v1696
    %v1753 = vunpack.c.l.bf16 %v1697
    %v1754 = vunpack.c.l.bf16 %v1698
    %v1755 = vunpack.c.l.bf16 %v1699
    %v1756 = vunpack.c.l.bf16 %v1700
    %v1757 = vunpack.c.l.bf16 %v1701
    %v1758 = vunpack.c.l.bf16 %v1702
    %v1759 = vunpack.c.l.bf16 %v1703
    %v1760 = vunpack.c.l.bf16 %v1704
    %v1761 = vunpack.c.l.bf16 %v1705
    %v1762 = vunpack.c.l.bf16 %v1706
    %v1763 = vunpack.c.l.bf16 %v1707
    %v1764 = vunpack.c.l.bf16 %v1708
    %v1765 = vunpack.c.l.bf16 %v1709
    %v1766 = vunpack.c.l.bf16 %v1710
    %v1767 = vunpack.c.l.bf16 %v1711
    %v1768 = vld [vmem:[%s6] sm:$0x3]
    %v1769 = vsel %vm455, %v1566, 0.0
    %v1770 = vadd.f32 %v1562, %v1769
    %v1771 = vrot.slane %v1770, 4
    %v1772 = vadd.f32 %v1770, %v1771
    %v1773 = vrot.slane %v1772, 2
    %v1774 = vadd.f32 %v1772, %v1773
    %v1775 = vrot.slane %v1774, 1
    %v1776 = vadd.f32 %v1774, %v1775
    %v1777 = vsel %vm455, %v1568, 0.0
    %v1778 = vadd.f32 %v1564, %v1777
    %v1779 = vrot.slane %v1778, 4
    %v1780 = vadd.f32 %v1778, %v1779
    %v1781 = vrot.slane %v1780, 2
    %v1782 = vadd.f32 %v1780, %v1781
    %v1783 = vrot.slane %v1782, 1
    %v1784 = vadd.f32 %v1782, %v1783
    %v1785 = vsel %vm455, %v1652, 0.0
    %v1786 = vadd.f32 %v1648, %v1785
    %v1787 = vrot.slane %v1786, 4
    %v1788 = vadd.f32 %v1786, %v1787
    %v1789 = vrot.slane %v1788, 2
    %v1790 = vadd.f32 %v1788, %v1789
    %v1791 = vrot.slane %v1790, 1
    %v1792 = vadd.f32 %v1790, %v1791
    %v1793 = vsel %vm472, %v1650, 0.0
    %v1794 = vsel %vm474, %v1654, 0.0
    %v1795 = vadd.f32 %v1793, %v1794
    %v1796 = vrot.slane %v1795, 4
    %v1797 = vadd.f32 %v1795, %v1796
    %v1798 = vrot.slane %v1797, 2
    %v1799 = vadd.f32 %v1797, %v1798
    %v1800 = vrot.slane %v1799, 1
    %v1801 = vadd.f32 %v1799, %v1800
    %v1802 = vmul.f32 %v1562, %v1562
    %v1803 = vmul.f32 %v1564, %v1564
    %v1804 = vmul.f32 %v1648, %v1648
    %v1805 = vmul.f32 %v1650, %v1650
    %v1806 = vmul.f32 %v1566, %v1566
    %v1807 = vmul.f32 %v1568, %v1568
    %v1808 = vmul.f32 %v1652, %v1652
    %v1809 = vmul.f32 %v1654, %v1654
    %v1810 = vsel %vm455, %v1806, 0.0
    %v1811 = vadd.f32 %v1802, %v1810
    %v1812 = vrot.slane %v1811, 4
    %v1813 = vadd.f32 %v1811, %v1812
    %v1814 = vrot.slane %v1813, 2
    %v1815 = vadd.f32 %v1813, %v1814
    %v1816 = vrot.slane %v1815, 1
    %v1817 = vadd.f32 %v1815, %v1816
    %v1818 = vsel %vm455, %v1807, 0.0
    %v1819 = vadd.f32 %v1803, %v1818
    %v1820 = vrot.slane %v1819, 4
    %v1821 = vadd.f32 %v1819, %v1820
    %v1822 = vrot.slane %v1821, 2
    %v1823 = vadd.f32 %v1821, %v1822
    %v1824 = vrot.slane %v1823, 1
    %v1825 = vadd.f32 %v1823, %v1824
    %v1826 = vsel %vm455, %v1808, 0.0
    %v1827 = vadd.f32 %v1804, %v1826
    %v1828 = vrot.slane %v1827, 4
    %v1829 = vadd.f32 %v1827, %v1828
    %v1830 = vrot.slane %v1829, 2
    %v1831 = vadd.f32 %v1829, %v1830
    %v1832 = vrot.slane %v1831, 1
    %v1833 = vadd.f32 %v1831, %v1832
    %v1834 = vsel %vm472, %v1805, 0.0
    %v1835 = vsel %vm474, %v1809, 0.0
    %v1836 = vadd.f32 %v1834, %v1835
    %v1837 = vrot.slane %v1836, 4
    %v1838 = vadd.f32 %v1836, %v1837
    %v1839 = vrot.slane %v1838, 2
    %v1840 = vadd.f32 %v1838, %v1839
    %v1841 = vrot.slane %v1840, 1
    %v1842 = vadd.f32 %v1840, %v1841
    %v1843 = vsel %vm514, 1.0, %v1776
    %v1844 = vsel %vm514, 1.0, %v1784
    %v1845 = vsel %vm514, 1.0, %v1792
    %v1846 = vsel %vm514, 1.0, %v1801
    %v1847 = vsel %vm455, %v1843, %v1817
    %v1848 = vsel %vm455, %v1844, %v1825
    %v1849 = vsel %vm455, %v1845, %v1833
    %v1850 = vsel %vm455, %v1846, %v1842
    %v1852 = vsel %vm472, %v1850, 0
    %1854 = vmatprep.subr.mxu0 0.0
    %1855 = vmatpush1.msra.mxu0 %v1712
    %1856 = vmatprep.subr.mxu0 0.0
    %1857 = vmatpush1.msra.mxu0 %v1713
    %1858 = vmatprep.subr.mxu0 0.0
    %1859 = vmatpush1.msra.mxu0 %v1714
    %1860 = vmatprep.subr.mxu0 0.0
    %1861 = vmatpush1.msra.mxu0 %v1715
    %1862 = vmatprep.subr.mxu0 0.0
    %1863 = vmatpush1.msra.mxu0 %v1716
    %1864 = vmatprep.subr.mxu0 0.0
    %1865 = vmatpush1.msra.mxu0 %v1717
    %1866 = vmatprep.subr.mxu0 0.0
    %1867 = vmatpush1.msra.mxu0 %v1718
    %1868 = vmatprep.subr.mxu0 0.0
    %1869 = vmatpush1.msra.mxu0 %v1719
    %1870 = vmatprep.subr.mxu0 0.0
    %1871 = vmatpush1.msra.mxu0 %v1720
    %1872 = vmatprep.subr.mxu0 0.0
    %1873 = vmatpush1.msra.mxu0 %v1721
    %1874 = vmatprep.subr.mxu0 0.0
    %1875 = vmatpush1.msra.mxu0 %v1722
    %1876 = vmatprep.subr.mxu0 0.0
    %1877 = vmatpush1.msra.mxu0 %v1723
    %1878 = vmatprep.subr.mxu0 0.0
    %1879 = vmatpush1.msra.mxu0 %v1724
    %1880 = vmatprep.subr.mxu0 0.0
    %1881 = vmatpush1.msra.mxu0 %v1725
    %1882 = vmatprep.subr.mxu0 0.0
    %1883 = vmatpush1.msra.mxu0 %v1726
    %1884 = vmatprep.subr.mxu0 0.0
    %1885 = vmatpush1.msra.mxu0 %v1727
    %1886 = vmatprep.subr.mxu0 0.0
    %1887 = vmatpush1.msra.mxu0 %v1728
    %1888 = vmatprep.subr.mxu0 0.0
    %1889 = vmatpush1.msra.mxu0 %v1729
    %1890 = vmatprep.subr.mxu0 0.0
    %1891 = vmatpush1.msra.mxu0 %v1730
    %1892 = vmatprep.subr.mxu0 0.0
    %1893 = vmatpush1.msra.mxu0 %v1731
    %1894 = vmatprep.subr.mxu0 0.0
    %1895 = vmatpush1.msra.mxu0 %v1732
    %1896 = vmatprep.subr.mxu0 0.0
    %1897 = vmatpush1.msra.mxu0 %v1733
    %1898 = vmatprep.subr.mxu0 0.0
    %1899 = vmatpush1.msra.mxu0 %v1734
    %1900 = vmatprep.subr.mxu0 0.0
    %1901 = vmatpush1.msra.mxu0 %v1735
    %1902 = vmatprep.subr.mxu0 0.0
    %1903 = vmatpush1.msra.mxu0 %v1736
    %1904 = vmatprep.subr.mxu0 0.0
    %1905 = vmatpush1.msra.mxu0 %v1737
    %1906 = vmatprep.subr.mxu0 0.0
    %1907 = vmatpush1.msra.mxu0 %v1738
    %1908 = vmatprep.subr.mxu0 0.0
    %1909 = vmatpush1.msra.mxu0 %v1739
    %1910 = vmatprep.subr.mxu0 0.0
    %1911 = vmatpush1.msra.mxu0 %v1740
    %1912 = vmatprep.subr.mxu0 0.0
    %1913 = vmatpush1.msra.mxu0 %v1741
    %1914 = vmatprep.subr.mxu0 0.0
    %1915 = vmatpush1.msra.mxu0 %v1742
    %1916 = vmatprep.subr.mxu0 0.0
    %1917 = vmatpush1.msra.mxu0 %v1743
    %1918 = vmatprep.mubr.f32.mxu0 %v1848
    %1919 = vmatmul.mubr.f32.gmra.mrb[0].mxu0 %v1847
    %v1920 = vpop.f32.mrb[0].mxu0
    %v1921 = vadd.f32 0.0, %v1920
    %v1922 = vpop.f32.mrb[0].mxu0
    %1923 = vdwg.mxu0
    %1924 = vmatprep.subr.mxu0 0.0
    %1925 = vmatpush1.msra.mxu0 %v1744
    %1926 = vmatprep.subr.mxu0 0.0
    %1927 = vmatpush1.msra.mxu0 %v1745
    %1928 = vmatprep.subr.mxu0 0.0
    %1929 = vmatpush1.msra.mxu0 %v1746
    %1930 = vmatprep.subr.mxu0 0.0
    %1931 = vmatpush1.msra.mxu0 %v1747
    %1932 = vmatprep.subr.mxu0 0.0
    %1933 = vmatpush1.msra.mxu0 %v1748
    %1934 = vmatprep.subr.mxu0 0.0
    %1935 = vmatpush1.msra.mxu0 %v1749
    %1936 = vmatprep.subr.mxu0 0.0
    %1937 = vmatpush1.msra.mxu0 %v1750
    %1938 = vmatprep.subr.mxu0 0.0
    %1939 = vmatpush1.msra.mxu0 %v1751
    %1940 = vmatprep.subr.mxu0 0.0
    %1941 = vmatpush1.msra.mxu0 %v1752
    %1942 = vmatprep.subr.mxu0 0.0
    %1943 = vmatpush1.msra.mxu0 %v1753
    %1944 = vmatprep.subr.mxu0 0.0
    %1945 = vmatpush1.msra.mxu0 %v1754
    %1946 = vmatprep.subr.mxu0 0.0
    %1947 = vmatpush1.msra.mxu0 %v1755
    %1948 = vmatprep.subr.mxu0 0.0
    %1949 = vmatpush1.msra.mxu0 %v1756
    %1950 = vmatprep.subr.mxu0 0.0
    %1951 = vmatpush1.msra.mxu0 %v1757
    %1952 = vmatprep.subr.mxu0 0.0
    %1953 = vmatpush1.msra.mxu0 %v1758
    %1954 = vmatprep.subr.mxu0 0.0
    %1955 = vmatpush1.msra.mxu0 %v1759
    %1956 = vmatprep.subr.mxu0 0.0
    %1957 = vmatpush1.msra.mxu0 %v1760
    %1958 = vmatprep.subr.mxu0 0.0
    %1959 = vmatpush1.msra.mxu0 %v1761
    %1960 = vmatprep.subr.mxu0 0.0
    %1961 = vmatpush1.msra.mxu0 %v1762
    %1962 = vmatprep.subr.mxu0 0.0
    %1963 = vmatpush1.msra.mxu0 %v1763
    %1964 = vmatprep.subr.mxu0 0.0
    %1965 = vmatpush1.msra.mxu0 %v1764
    %1966 = vmatprep.subr.mxu0 0.0
    %1967 = vmatpush1.msra.mxu0 %v1765
    %1968 = vmatprep.subr.mxu0 0.0
    %1969 = vmatpush1.msra.mxu0 %v1766
    %1970 = vmatprep.subr.mxu0 0.0
    %1971 = vmatpush1.msra.mxu0 %v1767
    %1972 = vmatprep.subr.mxu0 0.0
    %1973 = vmatpush1.msra.mxu0 0.0
    %1974 = vmatprep.subr.mxu0 0.0
    %1975 = vmatpush1.msra.mxu0 0.0
    %1976 = vmatprep.subr.mxu0 0.0
    %1977 = vmatpush1.msra.mxu0 0.0
    %1978 = vmatprep.subr.mxu0 0.0
    %1979 = vmatpush1.msra.mxu0 0.0
    %1980 = vmatprep.subr.mxu0 0.0
    %1981 = vmatpush1.msra.mxu0 0.0
    %1982 = vmatprep.subr.mxu0 0.0
    %1983 = vmatpush1.msra.mxu0 0.0
    %1984 = vmatprep.subr.mxu0 0.0
    %1985 = vmatpush1.msra.mxu0 0.0
    %1986 = vmatprep.subr.mxu0 0.0
    %1987 = vmatpush1.msra.mxu0 0.0
    %1988 = vmatprep.mubr.f32.mxu0 %v1852
    %1989 = vmatmul.mubr.f32.gmra.mrb[0].mxu0 %v1849
    %v1990 = vpop.f32.mrb[0].mxu0
    %v1991 = vadd.f32 %v1921, %v1990
    %v1992 = vpop.f32.mrb[0].mxu0
    %1993 = vdwg.mxu0
    %v1994 = vmul.f32 %v1991, 10.0
    %v1996 = vrot.slane %v1994, 7
    %v1998 = vrcp.pop %v1996
    %v1999 = vmul.f32 %v1991, %v1998
    %v2000 = vrot.slane %v1994, 6
    %v2002 = vrcp.pop %v2000
    %v2003 = vmul.f32 %v1991, %v2002
    %v2004 = vmul.f32 %v1999, %v1999
    %v2006 = vrot.slane %v2004, 7
    %v2008 = vsub.f32 %v2003, %v2006
    %v2009 = vmax.f32 %v2008, 0.0
    %v2010 = vadd.f32 %v2009, 1e-05
    %v2011 = vrsqrt.pop %v2010
    %v2013 = vrot.slane %v2011, 2
    %v2015 = vmul.f32 %v1768, %v2013
    %v2017 = vrot.slane %v2015, 7
    %v2019 = vmul.f32 %v1999, %v2017
    %v2020 = vsub.f32 %v1768, %v2019
    %v2021 = vsel %vm514, %v2015, %v2020
    %vm2022 = vcmask 261120
    %v2024 = vsel %vm2022, %v2021, 0
    %v2027 = vsel %vm2022, %v1712, 0
    %v2030 = vsel %vm2022, %v1713, 0
    %v2033 = vsel %vm2022, %v1714, 0
    %v2036 = vsel %vm2022, %v1715, 0
    %v2039 = vsel %vm2022, %v1716, 0
    %v2042 = vsel %vm2022, %v1717, 0
    %v2045 = vsel %vm2022, %v1718, 0
    %v2048 = vsel %vm2022, %v1719, 0
    %v2051 = vsel %vm2022, %v1720, 0
    %v2054 = vsel %vm2022, %v1721, 0
    %v2057 = vsel %vm2022, %v1722, 0
    %v2060 = vsel %vm2022, %v1723, 0
    %v2063 = vsel %vm2022, %v1724, 0
    %v2066 = vsel %vm2022, %v1725, 0
    %v2069 = vsel %vm2022, %v1726, 0
    %v2072 = vsel %vm2022, %v1727, 0
    %v2075 = vsel %vm2022, %v1728, 0
    %v2078 = vsel %vm2022, %v1729, 0
    %v2081 = vsel %vm2022, %v1730, 0
    %v2084 = vsel %vm2022, %v1731, 0
    %v2087 = vsel %vm2022, %v1732, 0
    %v2090 = vsel %vm2022, %v1733, 0
    %v2093 = vsel %vm2022, %v1734, 0
    %v2096 = vsel %vm2022, %v1735, 0
    %v2099 = vsel %vm2022, %v1736, 0
    %v2102 = vsel %vm2022, %v1737, 0
    %v2105 = vsel %vm2022, %v1738, 0
    %v2108 = vsel %vm2022, %v1739, 0
    %v2111 = vsel %vm2022, %v1740, 0
    %v2114 = vsel %vm2022, %v1741, 0
    %v2117 = vsel %vm2022, %v1742, 0
    %v2120 = vsel %vm2022, %v1743, 0
    %v2123 = vsel %vm2022, %v1744, 0
    %v2126 = vsel %vm2022, %v1745, 0
    %v2129 = vsel %vm2022, %v1746, 0
    %v2132 = vsel %vm2022, %v1747, 0
    %v2135 = vsel %vm2022, %v1748, 0
    %v2138 = vsel %vm2022, %v1749, 0
    %v2141 = vsel %vm2022, %v1750, 0
    %v2144 = vsel %vm2022, %v1751, 0
    %v2147 = vsel %vm2022, %v1752, 0
    %v2150 = vsel %vm2022, %v1753, 0
    %v2153 = vsel %vm2022, %v1754, 0
    %v2156 = vsel %vm2022, %v1755, 0
    %v2159 = vsel %vm2022, %v1756, 0
    %v2162 = vsel %vm2022, %v1757, 0
    %v2165 = vsel %vm2022, %v1758, 0
    %v2168 = vsel %vm2022, %v1759, 0
    %v2171 = vsel %vm2022, %v1760, 0
    %v2174 = vsel %vm2022, %v1761, 0
    %v2177 = vsel %vm2022, %v1762, 0
    %v2180 = vsel %vm2022, %v1763, 0
    %v2183 = vsel %vm2022, %v1764, 0
    %v2186 = vsel %vm2022, %v1765, 0
    %v2189 = vsel %vm2022, %v1766, 0
    %v2192 = vsel %vm2022, %v1767, 0
    %2194 = vmatprep.subr.mxu0 0.0
    %2195 = vmatpush1.xpose.msra.mxu0 %v2027
    %2196 = vmatprep.subr.mxu0 0.0
    %2197 = vmatpush1.xpose.msra.mxu0 %v2030
    %2198 = vmatprep.subr.mxu0 0.0
    %2199 = vmatpush1.xpose.msra.mxu0 %v2033
    %2200 = vmatprep.subr.mxu0 0.0
    %2201 = vmatpush1.xpose.msra.mxu0 %v2036
    %2202 = vmatprep.subr.mxu0 0.0
    %2203 = vmatpush1.xpose.msra.mxu0 %v2039
    %2204 = vmatprep.subr.mxu0 0.0
    %2205 = vmatpush1.xpose.msra.mxu0 %v2042
    %2206 = vmatprep.subr.mxu0 0.0
    %2207 = vmatpush1.xpose.msra.mxu0 %v2045
    %2208 = vmatprep.subr.mxu0 0.0
    %2209 = vmatpush1.xpose.msra.mxu0 %v2048
    %2210 = vmatprep.subr.mxu0 0.0
    %2211 = vmatpush1.xpose.msra.mxu0 %v2051
    %2212 = vmatprep.subr.mxu0 0.0
    %2213 = vmatpush1.xpose.msra.mxu0 %v2054
    %2214 = vmatprep.subr.mxu0 0.0
    %2215 = vmatpush1.xpose.msra.mxu0 %v2057
    %2216 = vmatprep.subr.mxu0 0.0
    %2217 = vmatpush1.xpose.msra.mxu0 %v2060
    %2218 = vmatprep.subr.mxu0 0.0
    %2219 = vmatpush1.xpose.msra.mxu0 %v2063
    %2220 = vmatprep.subr.mxu0 0.0
    %2221 = vmatpush1.xpose.msra.mxu0 %v2066
    %2222 = vmatprep.subr.mxu0 0.0
    %2223 = vmatpush1.xpose.msra.mxu0 %v2069
    %2224 = vmatprep.subr.mxu0 0.0
    %2225 = vmatpush1.xpose.msra.mxu0 %v2072
    %2226 = vmatprep.subr.mxu0 0.0
    %2227 = vmatpush1.xpose.msra.mxu0 %v2075
    %2228 = vmatprep.subr.mxu0 0.0
    %2229 = vmatpush1.xpose.msra.mxu0 %v2078
    %2230 = vmatprep.subr.mxu0 0.0
    %2231 = vmatpush1.xpose.msra.mxu0 %v2081
    %2232 = vmatprep.subr.mxu0 0.0
    %2233 = vmatpush1.xpose.msra.mxu0 %v2084
    %2234 = vmatprep.subr.mxu0 0.0
    %2235 = vmatpush1.xpose.msra.mxu0 %v2087
    %2236 = vmatprep.subr.mxu0 0.0
    %2237 = vmatpush1.xpose.msra.mxu0 %v2090
    %2238 = vmatprep.subr.mxu0 0.0
    %2239 = vmatpush1.xpose.msra.mxu0 %v2093
    %2240 = vmatprep.subr.mxu0 0.0
    %2241 = vmatpush1.xpose.msra.mxu0 %v2096
    %2242 = vmatprep.subr.mxu0 0.0
    %2243 = vmatpush1.xpose.msra.mxu0 %v2099
    %2244 = vmatprep.subr.mxu0 0.0
    %2245 = vmatpush1.xpose.msra.mxu0 %v2102
    %2246 = vmatprep.subr.mxu0 0.0
    %2247 = vmatpush1.xpose.msra.mxu0 %v2105
    %2248 = vmatprep.subr.mxu0 0.0
    %2249 = vmatpush1.xpose.msra.mxu0 %v2108
    %2250 = vmatprep.subr.mxu0 0.0
    %2251 = vmatpush1.xpose.msra.mxu0 %v2111
    %2252 = vmatprep.subr.mxu0 0.0
    %2253 = vmatpush1.xpose.msra.mxu0 %v2114
    %2254 = vmatprep.subr.mxu0 0.0
    %2255 = vmatpush1.xpose.msra.mxu0 %v2117
    %2256 = vmatprep.subr.mxu0 0.0
    %2257 = vmatpush1.xpose.msra.mxu0 %v2120
    %2258 = vmatprep.mubr.f32.mxu0 0.0
    %2259 = vmatmul.mubr.f32.gmra.mrb[0].mxu0 %v2024
    %v2260 = vpop.f32.mrb[0].mxu0
    %v2261 = vadd.f32 0.0, %v2260
    %v2262 = vpop.f32.mrb[0].mxu0
    %v2263 = vadd.f32 0.0, %v2262
    %2264 = vdwg.mxu0
    %2265 = vmatprep.subr.mxu0 0.0
    %2266 = vmatpush1.xpose.msra.mxu0 %v2123
    %2267 = vmatprep.subr.mxu0 0.0
    %2268 = vmatpush1.xpose.msra.mxu0 %v2126
    %2269 = vmatprep.subr.mxu0 0.0
    %2270 = vmatpush1.xpose.msra.mxu0 %v2129
    %2271 = vmatprep.subr.mxu0 0.0
    %2272 = vmatpush1.xpose.msra.mxu0 %v2132
    %2273 = vmatprep.subr.mxu0 0.0
    %2274 = vmatpush1.xpose.msra.mxu0 %v2135
    %2275 = vmatprep.subr.mxu0 0.0
    %2276 = vmatpush1.xpose.msra.mxu0 %v2138
    %2277 = vmatprep.subr.mxu0 0.0
    %2278 = vmatpush1.xpose.msra.mxu0 %v2141
    %2279 = vmatprep.subr.mxu0 0.0
    %2280 = vmatpush1.xpose.msra.mxu0 %v2144
    %2281 = vmatprep.subr.mxu0 0.0
    %2282 = vmatpush1.xpose.msra.mxu0 %v2147
    %2283 = vmatprep.subr.mxu0 0.0
    %2284 = vmatpush1.xpose.msra.mxu0 %v2150
    %2285 = vmatprep.subr.mxu0 0.0
    %2286 = vmatpush1.xpose.msra.mxu0 %v2153
    %2287 = vmatprep.subr.mxu0 0.0
    %2288 = vmatpush1.xpose.msra.mxu0 %v2156
    %2289 = vmatprep.subr.mxu0 0.0
    %2290 = vmatpush1.xpose.msra.mxu0 %v2159
    %2291 = vmatprep.subr.mxu0 0.0
    %2292 = vmatpush1.xpose.msra.mxu0 %v2162
    %2293 = vmatprep.subr.mxu0 0.0
    %2294 = vmatpush1.xpose.msra.mxu0 %v2165
    %2295 = vmatprep.subr.mxu0 0.0
    %2296 = vmatpush1.xpose.msra.mxu0 %v2168
    %2297 = vmatprep.subr.mxu0 0.0
    %2298 = vmatpush1.xpose.msra.mxu0 %v2171
    %2299 = vmatprep.subr.mxu0 0.0
    %2300 = vmatpush1.xpose.msra.mxu0 %v2174
    %2301 = vmatprep.subr.mxu0 0.0
    %2302 = vmatpush1.xpose.msra.mxu0 %v2177
    %2303 = vmatprep.subr.mxu0 0.0
    %2304 = vmatpush1.xpose.msra.mxu0 %v2180
    %2305 = vmatprep.subr.mxu0 0.0
    %2306 = vmatpush1.xpose.msra.mxu0 %v2183
    %2307 = vmatprep.subr.mxu0 0.0
    %2308 = vmatpush1.xpose.msra.mxu0 %v2186
    %2309 = vmatprep.subr.mxu0 0.0
    %2310 = vmatpush1.xpose.msra.mxu0 %v2189
    %2311 = vmatprep.subr.mxu0 0.0
    %2312 = vmatpush1.xpose.msra.mxu0 %v2192
    %2313 = vmatprep.subr.mxu0 0.0
    %2314 = vmatpush1.xpose.msra.mxu0 0.0
    %2315 = vmatprep.subr.mxu0 0.0
    %2316 = vmatpush1.xpose.msra.mxu0 0.0
    %2317 = vmatprep.subr.mxu0 0.0
    %2318 = vmatpush1.xpose.msra.mxu0 0.0
    %2319 = vmatprep.subr.mxu0 0.0
    %2320 = vmatpush1.xpose.msra.mxu0 0.0
    %2321 = vmatprep.subr.mxu0 0.0
    %2322 = vmatpush1.xpose.msra.mxu0 0.0
    %2323 = vmatprep.subr.mxu0 0.0
    %2324 = vmatpush1.xpose.msra.mxu0 0.0
    %2325 = vmatprep.subr.mxu0 0.0
    %2326 = vmatpush1.xpose.msra.mxu0 0.0
    %2327 = vmatprep.subr.mxu0 0.0
    %2328 = vmatpush1.xpose.msra.mxu0 0.0
    %2329 = vmatprep.mubr.f32.mxu0 0.0
    %2330 = vmatmul.mubr.f32.gmra.mrb[0].mxu0 %v2024
    %v2331 = vpop.f32.mrb[0].mxu0
    %v2332 = vadd.f32 0.0, %v2331
    %v2333 = vpop.f32.mrb[0].mxu0
    %v2334 = vadd.f32 0.0, %v2333
    %2335 = vdwg.mxu0
    %v2336 = vlaneseq
    %v2337 = vshrl.u32 %v2336, 7
    %v2338 = vsub.s32 0, %v2337
    %v2339 = vrot.slane %v2261, %v2338
    %v2340 = vlaneseq
    %v2341 = vshrl.u32 %v2340, 7
    %v2342 = vsub.s32 0, %v2341
    %v2343 = vrot.slane %v2263, %v2342
    %v2344 = vlaneseq
    %v2345 = vshrl.u32 %v2344, 7
    %v2346 = vsub.s32 0, %v2345
    %v2347 = vrot.slane %v2332, %v2346
    %v2348 = vlaneseq
    %v2349 = vshrl.u32 %v2348, 7
    %v2350 = vsub.s32 0, %v2349
    %v2351 = vrot.slane %v2334, %v2350
    %v2352 = vmul.f32 %v1562, %v2339
    %v2353 = vmul.f32 %v1564, %v2343
    %v2354 = vmul.f32 %v1648, %v2347
    %v2355 = vmul.f32 %v1650, %v2351
    %v2356 = vmul.f32 %v1566, %v2339
    %v2357 = vmul.f32 %v1568, %v2343
    %v2358 = vmul.f32 %v1652, %v2347
    %v2359 = vmul.f32 %v1654, %v2351
    %v2360 = vlaneseq
    %v2361 = vshrl.u32 %v2360, 7
    %v2362 = vsub.s32 1, %v2361
    %v2363 = vrot.slane %v2261, %v2362
    %v2364 = vlaneseq
    %v2365 = vshrl.u32 %v2364, 7
    %v2366 = vsub.s32 1, %v2365
    %v2367 = vrot.slane %v2263, %v2366
    %v2368 = vlaneseq
    %v2369 = vshrl.u32 %v2368, 7
    %v2370 = vsub.s32 1, %v2369
    %v2371 = vrot.slane %v2332, %v2370
    %v2372 = vlaneseq
    %v2373 = vshrl.u32 %v2372, 7
    %v2374 = vsub.s32 1, %v2373
    %v2375 = vrot.slane %v2334, %v2374
    %v2376 = vadd.f32 %v2352, %v2363
    %v2377 = vadd.f32 %v2353, %v2367
    %v2378 = vadd.f32 %v2354, %v2371
    %v2379 = vadd.f32 %v2355, %v2375
    %v2380 = vadd.f32 %v2356, %v2363
    %v2381 = vadd.f32 %v2357, %v2367
    %v2382 = vadd.f32 %v2358, %v2371
    %v2383 = vadd.f32 %v2359, %v2375
    %v2384 = vmax.f32 %v2376, 0.0
    %v2385 = vmax.f32 %v2377, 0.0
    %v2386 = vmax.f32 %v2378, 0.0
    %v2387 = vmax.f32 %v2379, 0.0
    %v2388 = vmax.f32 %v2380, 0.0
    %v2389 = vmax.f32 %v2381, 0.0
    %v2390 = vmax.f32 %v2382, 0.0
    %v2391 = vmax.f32 %v2383, 0.0
    %v2392 = vpack.c.bf16 %v2388, %v2384
    %v2393 = vpack.c.bf16 %v2389, %v2385
    %v2394 = vpack.c.bf16 %v2390, %v2386
    %v2395 = vpack.c.bf16 %v2391, %v2387
    %v2396 = vld [vmem:[%s7] sm:$0xff]
    %v2397 = vld [vmem:[%s7 + $0x8] sm:$0xf]
    %v2398 = vld [vmem:[%s7 + $0xc] sm:$0xff]
    %v2399 = vld [vmem:[%s7 + $0x14] sm:$0xf]
    %v2400 = vld [vmem:[%s7 + $0x18] sm:$0xff]
    %v2401 = vld [vmem:[%s7 + $0x20] sm:$0xf]
    %v2402 = vld [vmem:[%s7 + $0x24] sm:$0xff]
    %v2403 = vld [vmem:[%s7 + $0x2c] sm:$0xf]
    %v2404 = vld [vmem:[%s7 + $0x30] sm:$0xff]
    %v2405 = vld [vmem:[%s7 + $0x38] sm:$0xf]
    %v2406 = vld [vmem:[%s7 + $0x3c] sm:$0xff]
    %v2407 = vld [vmem:[%s7 + $0x44] sm:$0xf]
    %v2408 = vld [vmem:[%s7 + $0x48] sm:$0xff]
    %v2409 = vld [vmem:[%s7 + $0x50] sm:$0xf]
    %v2410 = vld [vmem:[%s7 + $0x54] sm:$0xff]
    %v2411 = vld [vmem:[%s7 + $0x5c] sm:$0xf]
    %v2412 = vld [vmem:[%s7 + $0x60] sm:$0xff]
    %v2413 = vld [vmem:[%s7 + $0x68] sm:$0xf]
    %v2414 = vld [vmem:[%s7 + $0x6c] sm:$0xff]
    %v2415 = vld [vmem:[%s7 + $0x74] sm:$0xf]
    %v2416 = vld [vmem:[%s7 + $0x78] sm:$0xff]
    %v2417 = vld [vmem:[%s7 + $0x80] sm:$0xf]
    %v2418 = vld [vmem:[%s7 + $0x84] sm:$0xff]
    %v2419 = vld [vmem:[%s7 + $0x8c] sm:$0xf]
    %v2420 = vld [vmem:[%s7 + $0x90] sm:$0xff]
    %v2421 = vld [vmem:[%s7 + $0x98] sm:$0xf]
    %v2422 = vld [vmem:[%s7 + $0x9c] sm:$0xff]
    %v2423 = vld [vmem:[%s7 + $0xa4] sm:$0xf]
    %v2424 = vld [vmem:[%s7 + $0xa8] sm:$0xff]
    %v2425 = vld [vmem:[%s7 + $0xb0] sm:$0xf]
    %v2426 = vld [vmem:[%s7 + $0xb4] sm:$0xff]
    %v2427 = vld [vmem:[%s7 + $0xbc] sm:$0xf]
    %v2428 = vld [vmem:[%s7 + $0xc0] sm:$0xff]
    %v2429 = vld [vmem:[%s7 + $0xc8] sm:$0xf]
    %v2430 = vld [vmem:[%s7 + $0xcc] sm:$0xff]
    %v2431 = vld [vmem:[%s7 + $0xd4] sm:$0xf]
    %v2432 = vld [vmem:[%s7 + $0xd8] sm:$0xff]
    %v2433 = vld [vmem:[%s7 + $0xe0] sm:$0xf]
    %v2434 = vld [vmem:[%s7 + $0xe4] sm:$0xff]
    %v2435 = vld [vmem:[%s7 + $0xec] sm:$0xf]
    %v2436 = vld [vmem:[%s7 + $0xf0] sm:$0xff]
    %v2437 = vld [vmem:[%s7 + $0xf8] sm:$0xf]
    %v2438 = vld [vmem:[%s7 + $0xfc] sm:$0xff]
    %v2439 = vld [vmem:[%s7 + $0x104] sm:$0xf]
    %v2440 = vld [vmem:[%s7 + $0x108] sm:$0xff]
    %v2441 = vld [vmem:[%s7 + $0x110] sm:$0xf]
    %v2442 = vld [vmem:[%s7 + $0x114] sm:$0xff]
    %v2443 = vld [vmem:[%s7 + $0x11c] sm:$0xf]
    %v2444 = vld [vmem:[%s7 + $0x120] sm:$0xff]
    %v2445 = vld [vmem:[%s7 + $0x128] sm:$0xf]
    %v2446 = vld [vmem:[%s7 + $0x12c] sm:$0xff]
    %v2447 = vld [vmem:[%s7 + $0x134] sm:$0xf]
    %v2448 = vld [vmem:[%s7 + $0x138] sm:$0xff]
    %v2449 = vld [vmem:[%s7 + $0x140] sm:$0xf]
    %v2450 = vld [vmem:[%s7 + $0x144] sm:$0xff]
    %v2451 = vld [vmem:[%s7 + $0x14c] sm:$0xf]
    %v2452 = vld [vmem:[%s7 + $0x150] sm:$0xff]
    %v2453 = vld [vmem:[%s7 + $0x158] sm:$0xf]
    %v2454 = vld [vmem:[%s7 + $0x15c] sm:$0xff]
    %v2455 = vld [vmem:[%s7 + $0x164] sm:$0xf]
    %v2456 = vld [vmem:[%s7 + $0x168] sm:$0xff]
    %v2457 = vld [vmem:[%s7 + $0x170] sm:$0xf]
    %v2458 = vld [vmem:[%s7 + $0x174] sm:$0xff]
    %v2459 = vld [vmem:[%s7 + $0x17c] sm:$0xf]
    %v2460 = vld [vmem:[%s7 + $0x180] sm:$0xff]
    %v2461 = vld [vmem:[%s7 + $0x188] sm:$0xf]
    %v2462 = vld [vmem:[%s7 + $0x18c] sm:$0xff]
    %v2463 = vld [vmem:[%s7 + $0x194] sm:$0xf]
    %v2464 = vld [vmem:[%s7 + $0x198] sm:$0xff]
    %v2465 = vld [vmem:[%s7 + $0x1a0] sm:$0xf]
    %v2466 = vld [vmem:[%s7 + $0x1a4] sm:$0xff]
    %v2467 = vld [vmem:[%s7 + $0x1ac] sm:$0xf]
    %v2468 = vld [vmem:[%s7 + $0x1b0] sm:$0xff]
    %v2469 = vld [vmem:[%s7 + $0x1b8] sm:$0xf]
    %v2470 = vld [vmem:[%s7 + $0x1bc] sm:$0xff]
    %v2471 = vld [vmem:[%s7 + $0x1c4] sm:$0xf]
    %v2472 = vld [vmem:[%s7 + $0x1c8] sm:$0xff]
    %v2473 = vld [vmem:[%s7 + $0x1d0] sm:$0xf]
    %v2474 = vld [vmem:[%s7 + $0x1d4] sm:$0xff]
    %v2475 = vld [vmem:[%s7 + $0x1dc] sm:$0xf]
    %v2476 = vld [vmem:[%s7 + $0x1e0] sm:$0xff]
    %v2477 = vld [vmem:[%s7 + $0x1e8] sm:$0xf]
    %v2478 = vld [vmem:[%s7 + $0x1ec] sm:$0xff]
    %v2479 = vld [vmem:[%s7 + $0x1f4] sm:$0xf]
    %v2480 = vld [vmem:[%s7 + $0x1f8] sm:$0xff]
    %v2481 = vld [vmem:[%s7 + $0x200] sm:$0xf]
    %v2482 = vld [vmem:[%s7 + $0x204] sm:$0xff]
    %v2483 = vld [vmem:[%s7 + $0x20c] sm:$0xf]
    %v2484 = vld [vmem:[%s7 + $0x210] sm:$0xff]
    %v2485 = vld [vmem:[%s7 + $0x218] sm:$0xf]
    %v2486 = vld [vmem:[%s7 + $0x21c] sm:$0xff]
    %v2487 = vld [vmem:[%s7 + $0x224] sm:$0xf]
    %v2488 = vld [vmem:[%s7 + $0x228] sm:$0xff]
    %v2489 = vld [vmem:[%s7 + $0x230] sm:$0xf]
    %v2490 = vld [vmem:[%s7 + $0x234] sm:$0xff]
    %v2491 = vld [vmem:[%s7 + $0x23c] sm:$0xf]
    %v2492 = vld [vmem:[%s7 + $0x240] sm:$0xff]
    %v2493 = vld [vmem:[%s7 + $0x248] sm:$0xf]
    %v2494 = vld [vmem:[%s7 + $0x24c] sm:$0xff]
    %v2495 = vld [vmem:[%s7 + $0x254] sm:$0xf]
    %v2496 = vld [vmem:[%s7 + $0x258] sm:$0xff]
    %v2497 = vld [vmem:[%s7 + $0x260] sm:$0xf]
    %v2498 = vld [vmem:[%s7 + $0x264] sm:$0xff]
    %v2499 = vld [vmem:[%s7 + $0x26c] sm:$0xf]
    %v2500 = vld [vmem:[%s7 + $0x270] sm:$0xff]
    %v2501 = vld [vmem:[%s7 + $0x278] sm:$0xf]
    %v2502 = vld [vmem:[%s7 + $0x27c] sm:$0xff]
    %v2503 = vld [vmem:[%s7 + $0x284] sm:$0xf]
    %v2504 = vld [vmem:[%s7 + $0x288] sm:$0xff]
    %v2505 = vld [vmem:[%s7 + $0x290] sm:$0xf]
    %v2506 = vld [vmem:[%s7 + $0x294] sm:$0xff]
    %v2507 = vld [vmem:[%s7 + $0x29c] sm:$0xf]
    %v2620 = vunpack.c.l.b16 %v2396
    %v2621 = vunpack.c.h.b16 %v2396
    %v2622 = vunpack.c.l.b16 %v2397
    %v2623 = vunpack.c.l.b16 %v2398
    %v2624 = vunpack.c.h.b16 %v2398
    %v2625 = vunpack.c.l.b16 %v2399
    %v2626 = vunpack.c.l.b16 %v2400
    %v2627 = vunpack.c.h.b16 %v2400
    %v2628 = vunpack.c.l.b16 %v2401
    %v2629 = vunpack.c.l.b16 %v2402
    %v2630 = vunpack.c.h.b16 %v2402
    %v2631 = vunpack.c.l.b16 %v2403
    %v2632 = vunpack.c.l.b16 %v2404
    %v2633 = vunpack.c.h.b16 %v2404
    %v2634 = vunpack.c.l.b16 %v2405
    %v2635 = vunpack.c.l.b16 %v2406
    %v2636 = vunpack.c.h.b16 %v2406
    %v2637 = vunpack.c.l.b16 %v2407
    %v2638 = vunpack.c.l.b16 %v2408
    %v2639 = vunpack.c.h.b16 %v2408
    %v2640 = vunpack.c.l.b16 %v2409
    %v2641 = vunpack.c.l.b16 %v2410
    %v2642 = vunpack.c.h.b16 %v2410
    %v2643 = vunpack.c.l.b16 %v2411
    %v2644 = vunpack.c.l.b16 %v2412
    %v2645 = vunpack.c.h.b16 %v2412
    %v2646 = vunpack.c.l.b16 %v2413
    %v2647 = vunpack.c.l.b16 %v2414
    %v2648 = vunpack.c.h.b16 %v2414
    %v2649 = vunpack.c.l.b16 %v2415
    %v2650 = vunpack.c.l.b16 %v2416
    %v2651 = vunpack.c.h.b16 %v2416
    %v2652 = vunpack.c.l.b16 %v2417
    %v2653 = vunpack.c.l.b16 %v2418
    %v2654 = vunpack.c.h.b16 %v2418
    %v2655 = vunpack.c.l.b16 %v2419
    %v2656 = vunpack.c.l.b16 %v2420
    %v2657 = vunpack.c.h.b16 %v2420
    %v2658 = vunpack.c.l.b16 %v2421
    %v2659 = vunpack.c.l.b16 %v2422
    %v2660 = vunpack.c.h.b16 %v2422
    %v2661 = vunpack.c.l.b16 %v2423
    %v2662 = vunpack.c.l.b16 %v2424
    %v2663 = vunpack.c.h.b16 %v2424
    %v2664 = vunpack.c.l.b16 %v2425
    %v2665 = vunpack.c.l.b16 %v2426
    %v2666 = vunpack.c.h.b16 %v2426
    %v2667 = vunpack.c.l.b16 %v2427
    %v2668 = vunpack.c.l.b16 %v2428
    %v2669 = vunpack.c.h.b16 %v2428
    %v2670 = vunpack.c.l.b16 %v2429
    %v2671 = vunpack.c.l.b16 %v2430
    %v2672 = vunpack.c.h.b16 %v2430
    %v2673 = vunpack.c.l.b16 %v2431
    %v2674 = vunpack.c.l.b16 %v2432
    %v2675 = vunpack.c.h.b16 %v2432
    %v2676 = vunpack.c.l.b16 %v2433
    %v2677 = vunpack.c.l.b16 %v2434
    %v2678 = vunpack.c.h.b16 %v2434
    %v2679 = vunpack.c.l.b16 %v2435
    %v2680 = vunpack.c.l.b16 %v2436
    %v2681 = vunpack.c.h.b16 %v2436
    %v2682 = vunpack.c.l.b16 %v2437
    %v2683 = vunpack.c.l.b16 %v2438
    %v2684 = vunpack.c.h.b16 %v2438
    %v2685 = vunpack.c.l.b16 %v2439
    %v2686 = vunpack.c.l.b16 %v2440
    %v2687 = vunpack.c.h.b16 %v2440
    %v2688 = vunpack.c.l.b16 %v2441
    %v2689 = vunpack.c.l.b16 %v2442
    %v2690 = vunpack.c.h.b16 %v2442
    %v2691 = vunpack.c.l.b16 %v2443
    %v2692 = vunpack.c.l.b16 %v2444
    %v2693 = vunpack.c.h.b16 %v2444
    %v2694 = vunpack.c.l.b16 %v2445
    %v2695 = vunpack.c.l.b16 %v2446
    %v2696 = vunpack.c.h.b16 %v2446
    %v2697 = vunpack.c.l.b16 %v2447
    %v2698 = vunpack.c.l.b16 %v2448
    %v2699 = vunpack.c.h.b16 %v2448
    %v2700 = vunpack.c.l.b16 %v2449
    %v2701 = vunpack.c.l.b16 %v2450
    %v2702 = vunpack.c.h.b16 %v2450
    %v2703 = vunpack.c.l.b16 %v2451
    %v2704 = vunpack.c.l.b16 %v2452
    %v2705 = vunpack.c.h.b16 %v2452
    %v2706 = vunpack.c.l.b16 %v2453
    %v2707 = vunpack.c.l.b16 %v2454
    %v2708 = vunpack.c.h.b16 %v2454
    %v2709 = vunpack.c.l.b16 %v2455
    %v2710 = vunpack.c.l.b16 %v2456
    %v2711 = vunpack.c.h.b16 %v2456
    %v2712 = vunpack.c.l.b16 %v2457
    %v2713 = vunpack.c.l.b16 %v2458
    %v2714 = vunpack.c.h.b16 %v2458
    %v2715 = vunpack.c.l.b16 %v2459
    %v2716 = vunpack.c.l.b16 %v2460
    %v2717 = vunpack.c.h.b16 %v2460
    %v2718 = vunpack.c.l.b16 %v2461
    %v2719 = vunpack.c.l.b16 %v2462
    %v2720 = vunpack.c.h.b16 %v2462
    %v2721 = vunpack.c.l.b16 %v2463
    %v2722 = vunpack.c.l.b16 %v2464
    %v2723 = vunpack.c.h.b16 %v2464
    %v2724 = vunpack.c.l.b16 %v2465
    %v2725 = vunpack.c.l.b16 %v2466
    %v2726 = vunpack.c.h.b16 %v2466
    %v2727 = vunpack.c.l.b16 %v2467
    %v2728 = vunpack.c.l.b16 %v2468
    %v2729 = vunpack.c.h.b16 %v2468
    %v2730 = vunpack.c.l.b16 %v2469
    %v2731 = vunpack.c.l.b16 %v2470
    %v2732 = vunpack.c.h.b16 %v2470
    %v2733 = vunpack.c.l.b16 %v2471
    %v2734 = vunpack.c.l.b16 %v2472
    %v2735 = vunpack.c.h.b16 %v2472
    %v2736 = vunpack.c.l.b16 %v2473
    %v2737 = vunpack.c.l.b16 %v2474
    %v2738 = vunpack.c.h.b16 %v2474
    %v2739 = vunpack.c.l.b16 %v2475
    %v2740 = vunpack.c.l.b16 %v2476
    %v2741 = vunpack.c.h.b16 %v2476
    %v2742 = vunpack.c.l.b16 %v2477
    %v2743 = vunpack.c.l.b16 %v2478
    %v2744 = vunpack.c.h.b16 %v2478
    %v2745 = vunpack.c.l.b16 %v2479
    %v2746 = vunpack.c.l.b16 %v2480
    %v2747 = vunpack.c.h.b16 %v2480
    %v2748 = vunpack.c.l.b16 %v2481
    %v2749 = vunpack.c.l.b16 %v2482
    %v2750 = vunpack.c.h.b16 %v2482
    %v2751 = vunpack.c.l.b16 %v2483
    %v2752 = vunpack.c.l.b16 %v2484
    %v2753 = vunpack.c.h.b16 %v2484
    %v2754 = vunpack.c.l.b16 %v2485
    %v2755 = vunpack.c.l.b16 %v2486
    %v2756 = vunpack.c.h.b16 %v2486
    %v2757 = vunpack.c.l.b16 %v2487
    %v2758 = vunpack.c.l.b16 %v2488
    %v2759 = vunpack.c.h.b16 %v2488
    %v2760 = vunpack.c.l.b16 %v2489
    %v2761 = vunpack.c.l.b16 %v2490
    %v2762 = vunpack.c.h.b16 %v2490
    %v2763 = vunpack.c.l.b16 %v2491
    %v2764 = vunpack.c.l.b16 %v2492
    %v2765 = vunpack.c.h.b16 %v2492
    %v2766 = vunpack.c.l.b16 %v2493
    %v2767 = vunpack.c.l.b16 %v2494
    %v2768 = vunpack.c.h.b16 %v2494
    %v2769 = vunpack.c.l.b16 %v2495
    %v2770 = vunpack.c.l.b16 %v2496
    %v2771 = vunpack.c.h.b16 %v2496
    %v2772 = vunpack.c.l.b16 %v2497
    %v2773 = vunpack.c.l.b16 %v2498
    %v2774 = vunpack.c.h.b16 %v2498
    %v2775 = vunpack.c.l.b16 %v2499
    %v2776 = vunpack.c.l.b16 %v2500
    %v2777 = vunpack.c.h.b16 %v2500
    %v2778 = vunpack.c.l.b16 %v2501
    %v2779 = vunpack.c.l.b16 %v2502
    %v2780 = vunpack.c.h.b16 %v2502
    %v2781 = vunpack.c.l.b16 %v2503
    %v2782 = vunpack.c.l.b16 %v2504
    %v2783 = vunpack.c.h.b16 %v2504
    %v2784 = vunpack.c.l.b16 %v2505
    %v2785 = vunpack.c.l.b16 %v2506
    %v2786 = vunpack.c.h.b16 %v2506
    %v2787 = vunpack.c.l.b16 %v2507
    %v2788 = vpack.c.b16 %v2623, %v2620
    %v2789 = vpack.c.b16 %v2624, %v2621
    %v2790 = vpack.c.b16 %v2625, %v2622
    %v2791 = vpack.c.b16 %v2629, %v2626
    %v2792 = vpack.c.b16 %v2630, %v2627
    %v2793 = vpack.c.b16 %v2631, %v2628
    %v2794 = vpack.c.b16 %v2635, %v2632
    %v2795 = vpack.c.b16 %v2636, %v2633
    %v2796 = vpack.c.b16 %v2637, %v2634
    %v2797 = vpack.c.b16 %v2641, %v2638
    %v2798 = vpack.c.b16 %v2642, %v2639
    %v2799 = vpack.c.b16 %v2643, %v2640
    %v2800 = vpack.c.b16 %v2647, %v2644
    %v2801 = vpack.c.b16 %v2648, %v2645
    %v2802 = vpack.c.b16 %v2649, %v2646
    %v2803 = vpack.c.b16 %v2653, %v2650
    %v2804 = vpack.c.b16 %v2654, %v2651
    %v2805 = vpack.c.b16 %v2655, %v2652
    %v2806 = vpack.c.b16 %v2659, %v2656
    %v2807 = vpack.c.b16 %v2660, %v2657
    %v2808 = vpack.c.b16 %v2661, %v2658
    %v2809 = vpack.c.b16 %v2665, %v2662
    %v2810 = vpack.c.b16 %v2666, %v2663
    %v2811 = vpack.c.b16 %v2667, %v2664
    %v2812 = vpack.c.b16 %v2671, %v2668
    %v2813 = vpack.c.b16 %v2672, %v2669
    %v2814 = vpack.c.b16 %v2673, %v2670
    %v2815 = vpack.c.b16 %v2677, %v2674
    %v2816 = vpack.c.b16 %v2678, %v2675
    %v2817 = vpack.c.b16 %v2679, %v2676
    %v2818 = vpack.c.b16 %v2683, %v2680
    %v2819 = vpack.c.b16 %v2684, %v2681
    %v2820 = vpack.c.b16 %v2685, %v2682
    %v2821 = vpack.c.b16 %v2689, %v2686
    %v2822 = vpack.c.b16 %v2690, %v2687
    %v2823 = vpack.c.b16 %v2691, %v2688
    %v2824 = vpack.c.b16 %v2695, %v2692
    %v2825 = vpack.c.b16 %v2696, %v2693
    %v2826 = vpack.c.b16 %v2697, %v2694
    %v2827 = vpack.c.b16 %v2701, %v2698
    %v2828 = vpack.c.b16 %v2702, %v2699
    %v2829 = vpack.c.b16 %v2703, %v2700
    %v2830 = vpack.c.b16 %v2707, %v2704
    %v2831 = vpack.c.b16 %v2708, %v2705
    %v2832 = vpack.c.b16 %v2709, %v2706
    %v2833 = vpack.c.b16 %v2713, %v2710
    %v2834 = vpack.c.b16 %v2714, %v2711
    %v2835 = vpack.c.b16 %v2715, %v2712
    %v2836 = vpack.c.b16 %v2719, %v2716
    %v2837 = vpack.c.b16 %v2720, %v2717
    %v2838 = vpack.c.b16 %v2721, %v2718
    %v2839 = vpack.c.b16 %v2725, %v2722
    %v2840 = vpack.c.b16 %v2726, %v2723
    %v2841 = vpack.c.b16 %v2727, %v2724
    %v2842 = vpack.c.b16 %v2731, %v2728
    %v2843 = vpack.c.b16 %v2732, %v2729
    %v2844 = vpack.c.b16 %v2733, %v2730
    %v2845 = vpack.c.b16 %v2737, %v2734
    %v2846 = vpack.c.b16 %v2738, %v2735
    %v2847 = vpack.c.b16 %v2739, %v2736
    %v2848 = vpack.c.b16 %v2743, %v2740
    %v2849 = vpack.c.b16 %v2744, %v2741
    %v2850 = vpack.c.b16 %v2745, %v2742
    %v2851 = vpack.c.b16 %v2749, %v2746
    %v2852 = vpack.c.b16 %v2750, %v2747
    %v2853 = vpack.c.b16 %v2751, %v2748
    %v2854 = vpack.c.b16 %v2755, %v2752
    %v2855 = vpack.c.b16 %v2756, %v2753
    %v2856 = vpack.c.b16 %v2757, %v2754
    %v2857 = vpack.c.b16 %v2761, %v2758
    %v2858 = vpack.c.b16 %v2762, %v2759
    %v2859 = vpack.c.b16 %v2763, %v2760
    %v2860 = vpack.c.b16 %v2767, %v2764
    %v2861 = vpack.c.b16 %v2768, %v2765
    %v2862 = vpack.c.b16 %v2769, %v2766
    %v2863 = vpack.c.b16 %v2773, %v2770
    %v2864 = vpack.c.b16 %v2774, %v2771
    %v2865 = vpack.c.b16 %v2775, %v2772
    %v2866 = vpack.c.b16 %v2779, %v2776
    %v2867 = vpack.c.b16 %v2780, %v2777
    %v2868 = vpack.c.b16 %v2781, %v2778
    %v2869 = vpack.c.b16 %v2785, %v2782
    %v2870 = vpack.c.b16 %v2786, %v2783
    %v2871 = vpack.c.b16 %v2787, %v2784
    %v2957 = vsel %vm472, %v2395, 0
    %2959 = vmatprep.subr.bf16.mxu0 %v2789
    %2960 = vmatpush1.bf16.msra.mxu0 %v2788
    %2961 = vmatprep.subr.bf16.mxu0 %v2792
    %2962 = vmatpush1.bf16.msra.mxu0 %v2791
    %2963 = vmatprep.subr.bf16.mxu0 %v2795
    %2964 = vmatpush1.bf16.msra.mxu0 %v2794
    %2965 = vmatprep.subr.bf16.mxu0 %v2798
    %2966 = vmatpush1.bf16.msra.mxu0 %v2797
    %2967 = vmatprep.subr.bf16.mxu0 %v2801
    %2968 = vmatpush1.bf16.msra.mxu0 %v2800
    %2969 = vmatprep.subr.bf16.mxu0 %v2804
    %2970 = vmatpush1.bf16.msra.mxu0 %v2803
    %2971 = vmatprep.subr.bf16.mxu0 %v2807
    %2972 = vmatpush1.bf16.msra.mxu0 %v2806
    %2973 = vmatprep.subr.bf16.mxu0 %v2810
    %2974 = vmatpush1.bf16.msra.mxu0 %v2809
    %2975 = vmatprep.subr.bf16.mxu0 %v2813
    %2976 = vmatpush1.bf16.msra.mxu0 %v2812
    %2977 = vmatprep.subr.bf16.mxu0 %v2816
    %2978 = vmatpush1.bf16.msra.mxu0 %v2815
    %2979 = vmatprep.subr.bf16.mxu0 %v2819
    %2980 = vmatpush1.bf16.msra.mxu0 %v2818
    %2981 = vmatprep.subr.bf16.mxu0 %v2822
    %2982 = vmatpush1.bf16.msra.mxu0 %v2821
    %2983 = vmatprep.subr.bf16.mxu0 %v2825
    %2984 = vmatpush1.bf16.msra.mxu0 %v2824
    %2985 = vmatprep.subr.bf16.mxu0 %v2828
    %2986 = vmatpush1.bf16.msra.mxu0 %v2827
    %2987 = vmatprep.subr.bf16.mxu0 %v2831
    %2988 = vmatpush1.bf16.msra.mxu0 %v2830
    %2989 = vmatprep.subr.bf16.mxu0 %v2834
    %2990 = vmatpush1.bf16.msra.mxu0 %v2833
    %2991 = vmatprep.mubr.bf16.mxu0 %v2393
    %2992 = vmatmul.mubr.bf16.gmra.mrb[0].mxu0 %v2392
    %v2993 = vpop.f32.mrb[0].mxu0
    %v2994 = vadd.f32 0.0, %v2993
    %v2995 = vpop.f32.mrb[0].mxu0
    %v2996 = vadd.f32 0.0, %v2995
    %v2997 = vpop.f32.mrb[0].mxu0
    %v2998 = vadd.f32 0.0, %v2997
    %v2999 = vpop.f32.mrb[0].mxu0
    %v3000 = vadd.f32 0.0, %v2999
    %3001 = vdwg.mxu0
    %3002 = vmatprep.subr.bf16.mxu0 %v2837
    %3003 = vmatpush1.bf16.msra.mxu0 %v2836
    %3004 = vmatprep.subr.bf16.mxu0 %v2840
    %3005 = vmatpush1.bf16.msra.mxu0 %v2839
    %3006 = vmatprep.subr.bf16.mxu0 %v2843
    %3007 = vmatpush1.bf16.msra.mxu0 %v2842
    %3008 = vmatprep.subr.bf16.mxu0 %v2846
    %3009 = vmatpush1.bf16.msra.mxu0 %v2845
    %3010 = vmatprep.subr.bf16.mxu0 %v2849
    %3011 = vmatpush1.bf16.msra.mxu0 %v2848
    %3012 = vmatprep.subr.bf16.mxu0 %v2852
    %3013 = vmatpush1.bf16.msra.mxu0 %v2851
    %3014 = vmatprep.subr.bf16.mxu0 %v2855
    %3015 = vmatpush1.bf16.msra.mxu0 %v2854
    %3016 = vmatprep.subr.bf16.mxu0 %v2858
    %3017 = vmatpush1.bf16.msra.mxu0 %v2857
    %3018 = vmatprep.subr.bf16.mxu0 %v2861
    %3019 = vmatpush1.bf16.msra.mxu0 %v2860
    %3020 = vmatprep.subr.bf16.mxu0 %v2864
    %3021 = vmatpush1.bf16.msra.mxu0 %v2863
    %3022 = vmatprep.subr.bf16.mxu0 %v2867
    %3023 = vmatpush1.bf16.msra.mxu0 %v2866
    %3024 = vmatprep.subr.bf16.mxu0 %v2870
    %3025 = vmatpush1.bf16.msra.mxu0 %v2869
    %3026 = vmatprep.subr.bf16.mxu0 0
    %3027 = vmatpush1.bf16.msra.mxu0 0
    %3028 = vmatprep.subr.bf16.mxu0 0
    %3029 = vmatpush1.bf16.msra.mxu0 0
    %3030 = vmatprep.subr.bf16.mxu0 0
    %3031 = vmatpush1.bf16.msra.mxu0 0
    %3032 = vmatprep.subr.bf16.mxu0 0
    %3033 = vmatpush1.bf16.msra.mxu0 0
    %3034 = vmatprep.mubr.bf16.mxu0 %v2957
    %3035 = vmatmul.mubr.bf16.gmra.mrb[0].mxu0 %v2394
    %v3036 = vpop.f32.mrb[0].mxu0
    %v3037 = vadd.f32 %v2994, %v3036
    %v3038 = vpop.f32.mrb[0].mxu0
    %v3039 = vadd.f32 %v2996, %v3038
    %v3040 = vpop.f32.mrb[0].mxu0
    %v3041 = vadd.f32 %v2998, %v3040
    %v3042 = vpop.f32.mrb[0].mxu0
    %v3043 = vadd.f32 %v3000, %v3042
    %3044 = vdwg.mxu0
    %3045 = vmatprep.subr.bf16.mxu0 0
    %3046 = vmatpush1.bf16.msra.mxu0 %v2790
    %3047 = vmatprep.subr.bf16.mxu0 0
    %3048 = vmatpush1.bf16.msra.mxu0 %v2793
    %3049 = vmatprep.subr.bf16.mxu0 0
    %3050 = vmatpush1.bf16.msra.mxu0 %v2796
    %3051 = vmatprep.subr.bf16.mxu0 0
    %3052 = vmatpush1.bf16.msra.mxu0 %v2799
    %3053 = vmatprep.subr.bf16.mxu0 0
    %3054 = vmatpush1.bf16.msra.mxu0 %v2802
    %3055 = vmatprep.subr.bf16.mxu0 0
    %3056 = vmatpush1.bf16.msra.mxu0 %v2805
    %3057 = vmatprep.subr.bf16.mxu0 0
    %3058 = vmatpush1.bf16.msra.mxu0 %v2808
    %3059 = vmatprep.subr.bf16.mxu0 0
    %3060 = vmatpush1.bf16.msra.mxu0 %v2811
    %3061 = vmatprep.subr.bf16.mxu0 0
    %3062 = vmatpush1.bf16.msra.mxu0 %v2814
    %3063 = vmatprep.subr.bf16.mxu0 0
    %3064 = vmatpush1.bf16.msra.mxu0 %v2817
    %3065 = vmatprep.subr.bf16.mxu0 0
    %3066 = vmatpush1.bf16.msra.mxu0 %v2820
    %3067 = vmatprep.subr.bf16.mxu0 0
    %3068 = vmatpush1.bf16.msra.mxu0 %v2823
    %3069 = vmatprep.subr.bf16.mxu0 0
    %3070 = vmatpush1.bf16.msra.mxu0 %v2826
    %3071 = vmatprep.subr.bf16.mxu0 0
    %3072 = vmatpush1.bf16.msra.mxu0 %v2829
    %3073 = vmatprep.subr.bf16.mxu0 0
    %3074 = vmatpush1.bf16.msra.mxu0 %v2832
    %3075 = vmatprep.subr.bf16.mxu0 0
    %3076 = vmatpush1.bf16.msra.mxu0 %v2835
    %3077 = vmatprep.mubr.bf16.mxu0 %v2393
    %3078 = vmatmul.mubr.bf16.gmra.mrb[0].mxu0 %v2392
    %v3079 = vpop.f32.mrb[0].mxu0
    %v3080 = vadd.f32 0.0, %v3079
    %v3081 = vpop.f32.mrb[0].mxu0
    %v3082 = vpop.f32.mrb[0].mxu0
    %v3083 = vadd.f32 0.0, %v3082
    %v3084 = vpop.f32.mrb[0].mxu0
    %3085 = vdwg.mxu0
    %3086 = vmatprep.subr.bf16.mxu0 0
    %3087 = vmatpush1.bf16.msra.mxu0 %v2838
    %3088 = vmatprep.subr.bf16.mxu0 0
    %3089 = vmatpush1.bf16.msra.mxu0 %v2841
    %3090 = vmatprep.subr.bf16.mxu0 0
    %3091 = vmatpush1.bf16.msra.mxu0 %v2844
    %3092 = vmatprep.subr.bf16.mxu0 0
    %3093 = vmatpush1.bf16.msra.mxu0 %v2847
    %3094 = vmatprep.subr.bf16.mxu0 0
    %3095 = vmatpush1.bf16.msra.mxu0 %v2850
    %3096 = vmatprep.subr.bf16.mxu0 0
    %3097 = vmatpush1.bf16.msra.mxu0 %v2853
    %3098 = vmatprep.subr.bf16.mxu0 0
    %3099 = vmatpush1.bf16.msra.mxu0 %v2856
    %3100 = vmatprep.subr.bf16.mxu0 0
    %3101 = vmatpush1.bf16.msra.mxu0 %v2859
    %3102 = vmatprep.subr.bf16.mxu0 0
    %3103 = vmatpush1.bf16.msra.mxu0 %v2862
    %3104 = vmatprep.subr.bf16.mxu0 0
    %3105 = vmatpush1.bf16.msra.mxu0 %v2865
    %3106 = vmatprep.subr.bf16.mxu0 0
    %3107 = vmatpush1.bf16.msra.mxu0 %v2868
    %3108 = vmatprep.subr.bf16.mxu0 0
    %3109 = vmatpush1.bf16.msra.mxu0 %v2871
    %3110 = vmatprep.subr.bf16.mxu0 0
    %3111 = vmatpush1.bf16.msra.mxu0 0
    %3112 = vmatprep.subr.bf16.mxu0 0
    %3113 = vmatpush1.bf16.msra.mxu0 0
    %3114 = vmatprep.subr.bf16.mxu0 0
    %3115 = vmatpush1.bf16.msra.mxu0 0
    %3116 = vmatprep.subr.bf16.mxu0 0
    %3117 = vmatpush1.bf16.msra.mxu0 0
    %3118 = vmatprep.mubr.bf16.mxu0 %v2957
    %3119 = vmatmul.mubr.bf16.gmra.mrb[0].mxu0 %v2394
    %v3120 = vpop.f32.mrb[0].mxu0
    %v3121 = vadd.f32 %v3080, %v3120
    %v3122 = vpop.f32.mrb[0].mxu0
    %v3123 = vpop.f32.mrb[0].mxu0
    %v3124 = vadd.f32 %v3083, %v3123
    %v3125 = vpop.f32.mrb[0].mxu0
    %3126 = vdwg.mxu0
    %v3127 = vld [vmem:[%s8] sm:$0xf]
    %v3128 = vld [vmem:[%s8 + $0x4] sm:$0xf]
    %v3129 = vld [vmem:[%s8 + $0x8] sm:$0xf]
    %v3130 = vld [vmem:[%s8 + $0xc] sm:$0xf]
    %v3131 = vld [vmem:[%s8 + $0x10] sm:$0xf]
    %v3132 = vld [vmem:[%s8 + $0x14] sm:$0xf]
    %v3133 = vld [vmem:[%s8 + $0x18] sm:$0xf]
    %v3134 = vld [vmem:[%s8 + $0x1c] sm:$0xf]
    %v3135 = vld [vmem:[%s8 + $0x20] sm:$0xf]
    %v3136 = vld [vmem:[%s8 + $0x24] sm:$0xf]
    %v3137 = vld [vmem:[%s8 + $0x28] sm:$0xf]
    %v3138 = vld [vmem:[%s8 + $0x2c] sm:$0xf]
    %v3139 = vld [vmem:[%s8 + $0x30] sm:$0xf]
    %v3140 = vld [vmem:[%s8 + $0x34] sm:$0xf]
    %v3141 = vld [vmem:[%s8 + $0x38] sm:$0xf]
    %v3142 = vld [vmem:[%s8 + $0x3c] sm:$0xf]
    %v3143 = vld [vmem:[%s8 + $0x40] sm:$0xf]
    %v3144 = vld [vmem:[%s8 + $0x44] sm:$0xf]
    %v3145 = vld [vmem:[%s8 + $0x48] sm:$0xf]
    %v3146 = vld [vmem:[%s8 + $0x4c] sm:$0xf]
    %v3147 = vld [vmem:[%s8 + $0x50] sm:$0xf]
    %v3148 = vld [vmem:[%s8 + $0x54] sm:$0xf]
    %v3149 = vld [vmem:[%s8 + $0x58] sm:$0xf]
    %v3150 = vld [vmem:[%s8 + $0x5c] sm:$0xf]
    %v3151 = vld [vmem:[%s8 + $0x60] sm:$0xf]
    %v3152 = vld [vmem:[%s8 + $0x64] sm:$0xf]
    %v3153 = vld [vmem:[%s8 + $0x68] sm:$0xf]
    %v3154 = vld [vmem:[%s8 + $0x6c] sm:$0xf]
    %v3155 = vld [vmem:[%s8 + $0x70] sm:$0xf]
    %v3156 = vld [vmem:[%s8 + $0x74] sm:$0xf]
    %v3157 = vld [vmem:[%s8 + $0x78] sm:$0xf]
    %v3158 = vld [vmem:[%s8 + $0x7c] sm:$0xf]
    %v3159 = vld [vmem:[%s8 + $0x80] sm:$0xf]
    %v3160 = vld [vmem:[%s8 + $0x84] sm:$0xf]
    %v3161 = vld [vmem:[%s8 + $0x88] sm:$0xf]
    %v3162 = vld [vmem:[%s8 + $0x8c] sm:$0xf]
    %v3163 = vld [vmem:[%s8 + $0x90] sm:$0xf]
    %v3164 = vld [vmem:[%s8 + $0x94] sm:$0xf]
    %v3165 = vld [vmem:[%s8 + $0x98] sm:$0xf]
    %v3166 = vld [vmem:[%s8 + $0x9c] sm:$0xf]
    %v3167 = vld [vmem:[%s8 + $0xa0] sm:$0xf]
    %v3168 = vld [vmem:[%s8 + $0xa4] sm:$0xf]
    %v3169 = vld [vmem:[%s8 + $0xa8] sm:$0xf]
    %v3170 = vld [vmem:[%s8 + $0xac] sm:$0xf]
    %v3171 = vld [vmem:[%s8 + $0xb0] sm:$0xf]
    %v3172 = vld [vmem:[%s8 + $0xb4] sm:$0xf]
    %v3173 = vunpack.c.l.bf16 %v3127
    %v3174 = vunpack.c.l.bf16 %v3128
    %v3175 = vunpack.c.l.bf16 %v3129
    %v3176 = vunpack.c.l.bf16 %v3130
    %v3177 = vunpack.c.l.bf16 %v3131
    %v3178 = vunpack.c.l.bf16 %v3132
    %v3179 = vunpack.c.l.bf16 %v3133
    %v3180 = vunpack.c.l.bf16 %v3134
    %v3181 = vunpack.c.l.bf16 %v3135
    %v3182 = vunpack.c.l.bf16 %v3136
    %v3183 = vunpack.c.l.bf16 %v3137
    %v3184 = vunpack.c.l.bf16 %v3138
    %v3185 = vunpack.c.l.bf16 %v3139
    %v3186 = vunpack.c.l.bf16 %v3140
    %v3187 = vunpack.c.l.bf16 %v3141
    %v3188 = vunpack.c.l.bf16 %v3142
    %v3189 = vunpack.c.l.bf16 %v3143
    %v3190 = vunpack.c.l.bf16 %v3144
    %v3191 = vunpack.c.l.bf16 %v3145
    %v3192 = vunpack.c.l.bf16 %v3146
    %v3193 = vunpack.c.l.bf16 %v3147
    %v3194 = vunpack.c.l.bf16 %v3148
    %v3195 = vunpack.c.l.bf16 %v3149
    %v3196 = vunpack.c.l.bf16 %v3150
    %v3197 = vunpack.c.l.bf16 %v3151
    %v3198 = vunpack.c.l.bf16 %v3152
    %v3199 = vunpack.c.l.bf16 %v3153
    %v3200 = vunpack.c.l.bf16 %v3154
    %v3201 = vunpack.c.l.bf16 %v3155
    %v3202 = vunpack.c.l.bf16 %v3156
    %v3203 = vunpack.c.l.bf16 %v3157
    %v3204 = vunpack.c.l.bf16 %v3158
    %v3205 = vunpack.c.l.bf16 %v3159
    %v3206 = vunpack.c.l.bf16 %v3160
    %v3207 = vunpack.c.l.bf16 %v3161
    %v3208 = vunpack.c.l.bf16 %v3162
    %v3209 = vunpack.c.l.bf16 %v3163
    %v3210 = vunpack.c.l.bf16 %v3164
    %v3211 = vunpack.c.l.bf16 %v3165
    %v3212 = vunpack.c.l.bf16 %v3166
    %v3213 = vunpack.c.l.bf16 %v3167
    %v3214 = vunpack.c.l.bf16 %v3168
    %v3215 = vunpack.c.l.bf16 %v3169
    %v3216 = vunpack.c.l.bf16 %v3170
    %v3217 = vunpack.c.l.bf16 %v3171
    %v3218 = vunpack.c.l.bf16 %v3172
    %v3219 = vld [vmem:[%s9] sm:$0x3]
    %v3220 = vsel %vm455, %v3041, 0.0
    %v3221 = vadd.f32 %v3037, %v3220
    %v3222 = vrot.slane %v3221, 4
    %v3223 = vadd.f32 %v3221, %v3222
    %v3224 = vrot.slane %v3223, 2
    %v3225 = vadd.f32 %v3223, %v3224
    %v3226 = vrot.slane %v3225, 1
    %v3227 = vadd.f32 %v3225, %v3226
    %v3228 = vsel %vm455, %v3043, 0.0
    %v3229 = vadd.f32 %v3039, %v3228
    %v3230 = vrot.slane %v3229, 4
    %v3231 = vadd.f32 %v3229, %v3230
    %v3232 = vrot.slane %v3231, 2
    %v3233 = vadd.f32 %v3231, %v3232
    %v3234 = vrot.slane %v3233, 1
    %v3235 = vadd.f32 %v3233, %v3234
    %vm3236 = vcmask 916480
    %v3237 = vsel %vm3236, %v3121, 0.0
    %vm3238 = vcmask 910336
    %v3239 = vsel %vm3238, %v3124, 0.0
    %v3240 = vadd.f32 %v3237, %v3239
    %v3241 = vrot.slane %v3240, 4
    %v3242 = vadd.f32 %v3240, %v3241
    %v3243 = vrot.slane %v3242, 2
    %v3244 = vadd.f32 %v3242, %v3243
    %v3245 = vrot.slane %v3244, 1
    %v3246 = vadd.f32 %v3244, %v3245
    %v3247 = vmul.f32 %v3037, %v3037
    %v3248 = vmul.f32 %v3039, %v3039
    %v3249 = vmul.f32 %v3121, %v3121
    %v3250 = vmul.f32 %v3041, %v3041
    %v3251 = vmul.f32 %v3043, %v3043
    %v3252 = vmul.f32 %v3124, %v3124
    %v3253 = vsel %vm455, %v3250, 0.0
    %v3254 = vadd.f32 %v3247, %v3253
    %v3255 = vrot.slane %v3254, 4
    %v3256 = vadd.f32 %v3254, %v3255
    %v3257 = vrot.slane %v3256, 2
    %v3258 = vadd.f32 %v3256, %v3257
    %v3259 = vrot.slane %v3258, 1
    %v3260 = vadd.f32 %v3258, %v3259
    %v3261 = vsel %vm455, %v3251, 0.0
    %v3262 = vadd.f32 %v3248, %v3261
    %v3263 = vrot.slane %v3262, 4
    %v3264 = vadd.f32 %v3262, %v3263
    %v3265 = vrot.slane %v3264, 2
    %v3266 = vadd.f32 %v3264, %v3265
    %v3267 = vrot.slane %v3266, 1
    %v3268 = vadd.f32 %v3266, %v3267
    %v3269 = vsel %vm3236, %v3249, 0.0
    %v3270 = vsel %vm3238, %v3252, 0.0
    %v3271 = vadd.f32 %v3269, %v3270
    %v3272 = vrot.slane %v3271, 4
    %v3273 = vadd.f32 %v3271, %v3272
    %v3274 = vrot.slane %v3273, 2
    %v3275 = vadd.f32 %v3273, %v3274
    %v3276 = vrot.slane %v3275, 1
    %v3277 = vadd.f32 %v3275, %v3276
    %v3278 = vsel %vm514, 1.0, %v3227
    %v3279 = vsel %vm514, 1.0, %v3235
    %v3280 = vsel %vm514, 1.0, %v3246
    %v3281 = vsel %vm455, %v3278, %v3260
    %v3282 = vsel %vm455, %v3279, %v3268
    %v3283 = vsel %vm455, %v3280, %v3277
    %v3285 = vsel %vm3236, %v3283, 0
    %3287 = vmatprep.subr.mxu0 0.0
    %3288 = vmatpush1.msra.mxu0 %v3173
    %3289 = vmatprep.subr.mxu0 0.0
    %3290 = vmatpush1.msra.mxu0 %v3174
    %3291 = vmatprep.subr.mxu0 0.0
    %3292 = vmatpush1.msra.mxu0 %v3175
    %3293 = vmatprep.subr.mxu0 0.0
    %3294 = vmatpush1.msra.mxu0 %v3176
    %3295 = vmatprep.subr.mxu0 0.0
    %3296 = vmatpush1.msra.mxu0 %v3177
    %3297 = vmatprep.subr.mxu0 0.0
    %3298 = vmatpush1.msra.mxu0 %v3178
    %3299 = vmatprep.subr.mxu0 0.0
    %3300 = vmatpush1.msra.mxu0 %v3179
    %3301 = vmatprep.subr.mxu0 0.0
    %3302 = vmatpush1.msra.mxu0 %v3180
    %3303 = vmatprep.subr.mxu0 0.0
    %3304 = vmatpush1.msra.mxu0 %v3181
    %3305 = vmatprep.subr.mxu0 0.0
    %3306 = vmatpush1.msra.mxu0 %v3182
    %3307 = vmatprep.subr.mxu0 0.0
    %3308 = vmatpush1.msra.mxu0 %v3183
    %3309 = vmatprep.subr.mxu0 0.0
    %3310 = vmatpush1.msra.mxu0 %v3184
    %3311 = vmatprep.subr.mxu0 0.0
    %3312 = vmatpush1.msra.mxu0 %v3185
    %3313 = vmatprep.subr.mxu0 0.0
    %3314 = vmatpush1.msra.mxu0 %v3186
    %3315 = vmatprep.subr.mxu0 0.0
    %3316 = vmatpush1.msra.mxu0 %v3187
    %3317 = vmatprep.subr.mxu0 0.0
    %3318 = vmatpush1.msra.mxu0 %v3188
    %3319 = vmatprep.subr.mxu0 0.0
    %3320 = vmatpush1.msra.mxu0 %v3189
    %3321 = vmatprep.subr.mxu0 0.0
    %3322 = vmatpush1.msra.mxu0 %v3190
    %3323 = vmatprep.subr.mxu0 0.0
    %3324 = vmatpush1.msra.mxu0 %v3191
    %3325 = vmatprep.subr.mxu0 0.0
    %3326 = vmatpush1.msra.mxu0 %v3192
    %3327 = vmatprep.subr.mxu0 0.0
    %3328 = vmatpush1.msra.mxu0 %v3193
    %3329 = vmatprep.subr.mxu0 0.0
    %3330 = vmatpush1.msra.mxu0 %v3194
    %3331 = vmatprep.subr.mxu0 0.0
    %3332 = vmatpush1.msra.mxu0 %v3195
    %3333 = vmatprep.subr.mxu0 0.0
    %3334 = vmatpush1.msra.mxu0 %v3196
    %3335 = vmatprep.subr.mxu0 0.0
    %3336 = vmatpush1.msra.mxu0 %v3197
    %3337 = vmatprep.subr.mxu0 0.0
    %3338 = vmatpush1.msra.mxu0 %v3198
    %3339 = vmatprep.subr.mxu0 0.0
    %3340 = vmatpush1.msra.mxu0 %v3199
    %3341 = vmatprep.subr.mxu0 0.0
    %3342 = vmatpush1.msra.mxu0 %v3200
    %3343 = vmatprep.subr.mxu0 0.0
    %3344 = vmatpush1.msra.mxu0 %v3201
    %3345 = vmatprep.subr.mxu0 0.0
    %3346 = vmatpush1.msra.mxu0 %v3202
    %3347 = vmatprep.subr.mxu0 0.0
    %3348 = vmatpush1.msra.mxu0 %v3203
    %3349 = vmatprep.subr.mxu0 0.0
    %3350 = vmatpush1.msra.mxu0 %v3204
    %3351 = vmatprep.mubr.f32.mxu0 %v3282
    %3352 = vmatmul.mubr.f32.gmra.mrb[0].mxu0 %v3281
    %v3353 = vpop.f32.mrb[0].mxu0
    %v3354 = vadd.f32 0.0, %v3353
    %v3355 = vpop.f32.mrb[0].mxu0
    %3356 = vdwg.mxu0
    %3357 = vmatprep.subr.mxu0 0.0
    %3358 = vmatpush1.msra.mxu0 %v3205
    %3359 = vmatprep.subr.mxu0 0.0
    %3360 = vmatpush1.msra.mxu0 %v3206
    %3361 = vmatprep.subr.mxu0 0.0
    %3362 = vmatpush1.msra.mxu0 %v3207
    %3363 = vmatprep.subr.mxu0 0.0
    %3364 = vmatpush1.msra.mxu0 %v3208
    %3365 = vmatprep.subr.mxu0 0.0
    %3366 = vmatpush1.msra.mxu0 %v3209
    %3367 = vmatprep.subr.mxu0 0.0
    %3368 = vmatpush1.msra.mxu0 %v3210
    %3369 = vmatprep.subr.mxu0 0.0
    %3370 = vmatpush1.msra.mxu0 %v3211
    %3371 = vmatprep.subr.mxu0 0.0
    %3372 = vmatpush1.msra.mxu0 %v3212
    %3373 = vmatprep.subr.mxu0 0.0
    %3374 = vmatpush1.msra.mxu0 %v3213
    %3375 = vmatprep.subr.mxu0 0.0
    %3376 = vmatpush1.msra.mxu0 %v3214
    %3377 = vmatprep.subr.mxu0 0.0
    %3378 = vmatpush1.msra.mxu0 %v3215
    %3379 = vmatprep.subr.mxu0 0.0
    %3380 = vmatpush1.msra.mxu0 %v3216
    %3381 = vmatprep.subr.mxu0 0.0
    %3382 = vmatpush1.msra.mxu0 %v3217
    %3383 = vmatprep.subr.mxu0 0.0
    %3384 = vmatpush1.msra.mxu0 %v3218
    %3385 = vmatprep.subr.mxu0 0.0
    %3386 = vmatpush1.msra.mxu0 0.0
    %3387 = vmatprep.subr.mxu0 0.0
    %3388 = vmatpush1.msra.mxu0 0.0
    %3389 = vmatprep.subr.mxu0 0.0
    %3390 = vmatpush1.msra.mxu0 0.0
    %3391 = vmatprep.subr.mxu0 0.0
    %3392 = vmatpush1.msra.mxu0 0.0
    %3393 = vmatprep.subr.mxu0 0.0
    %3394 = vmatpush1.msra.mxu0 0.0
    %3395 = vmatprep.subr.mxu0 0.0
    %3396 = vmatpush1.msra.mxu0 0.0
    %3397 = vmatprep.subr.mxu0 0.0
    %3398 = vmatpush1.msra.mxu0 0.0
    %3399 = vmatprep.subr.mxu0 0.0
    %3400 = vmatpush1.msra.mxu0 0.0
    %3401 = vmatprep.subr.mxu0 0.0
    %3402 = vmatpush1.msra.mxu0 0.0
    %3403 = vmatprep.subr.mxu0 0.0
    %3404 = vmatpush1.msra.mxu0 0.0
    %3405 = vmatprep.subr.mxu0 0.0
    %3406 = vmatpush1.msra.mxu0 0.0
    %3407 = vmatprep.subr.mxu0 0.0
    %3408 = vmatpush1.msra.mxu0 0.0
    %3409 = vmatprep.subr.mxu0 0.0
    %3410 = vmatpush1.msra.mxu0 0.0
    %3411 = vmatprep.subr.mxu0 0.0
    %3412 = vmatpush1.msra.mxu0 0.0
    %3413 = vmatprep.subr.mxu0 0.0
    %3414 = vmatpush1.msra.mxu0 0.0
    %3415 = vmatprep.subr.mxu0 0.0
    %3416 = vmatpush1.msra.mxu0 0.0
    %3417 = vmatprep.subr.mxu0 0.0
    %3418 = vmatpush1.msra.mxu0 0.0
    %3419 = vmatprep.subr.mxu0 0.0
    %3420 = vmatpush1.msra.mxu0 0.0
    %3421 = vmatprep.mubr.f32.mxu0 0.0
    %3422 = vmatmul.mubr.f32.gmra.mrb[0].mxu0 %v3285
    %v3423 = vpop.f32.mrb[0].mxu0
    %v3424 = vadd.f32 %v3354, %v3423
    %v3425 = vpop.f32.mrb[0].mxu0
    %3426 = vdwg.mxu0
    %v3427 = vmul.f32 %v3424, 10.0
    %v3429 = vrot.slane %v3427, 7
    %v3431 = vrcp.pop %v3429
    %v3432 = vmul.f32 %v3424, %v3431
    %v3433 = vrot.slane %v3427, 6
    %v3435 = vrcp.pop %v3433
    %v3436 = vmul.f32 %v3424, %v3435
    %v3437 = vmul.f32 %v3432, %v3432
    %v3439 = vrot.slane %v3437, 7
    %v3441 = vsub.f32 %v3436, %v3439
    %v3442 = vmax.f32 %v3441, 0.0
    %v3443 = vadd.f32 %v3442, 1e-05
    %v3444 = vrsqrt.pop %v3443
    %v3446 = vrot.slane %v3444, 2
    %v3448 = vmul.f32 %v3219, %v3446
    %v3450 = vrot.slane %v3448, 7
    %v3452 = vmul.f32 %v3432, %v3450
    %v3453 = vsub.f32 %v3219, %v3452
    %v3454 = vsel %vm514, %v3448, %v3453
    %vm3455 = vcmask 130048
    %v3457 = vsel %vm3455, %v3454, 0
    %v3460 = vsel %vm3455, %v3173, 0
    %v3463 = vsel %vm3455, %v3174, 0
    %v3466 = vsel %vm3455, %v3175, 0
    %v3469 = vsel %vm3455, %v3176, 0
    %v3472 = vsel %vm3455, %v3177, 0
    %v3475 = vsel %vm3455, %v3178, 0
    %v3478 = vsel %vm3455, %v3179, 0
    %v3481 = vsel %vm3455, %v3180, 0
    %v3484 = vsel %vm3455, %v3181, 0
    %v3487 = vsel %vm3455, %v3182, 0
    %v3490 = vsel %vm3455, %v3183, 0
    %v3493 = vsel %vm3455, %v3184, 0
    %v3496 = vsel %vm3455, %v3185, 0
    %v3499 = vsel %vm3455, %v3186, 0
    %v3502 = vsel %vm3455, %v3187, 0
    %v3505 = vsel %vm3455, %v3188, 0
    %v3508 = vsel %vm3455, %v3189, 0
    %v3511 = vsel %vm3455, %v3190, 0
    %v3514 = vsel %vm3455, %v3191, 0
    %v3517 = vsel %vm3455, %v3192, 0
    %v3520 = vsel %vm3455, %v3193, 0
    %v3523 = vsel %vm3455, %v3194, 0
    %v3526 = vsel %vm3455, %v3195, 0
    %v3529 = vsel %vm3455, %v3196, 0
    %v3532 = vsel %vm3455, %v3197, 0
    %v3535 = vsel %vm3455, %v3198, 0
    %v3538 = vsel %vm3455, %v3199, 0
    %v3541 = vsel %vm3455, %v3200, 0
    %v3544 = vsel %vm3455, %v3201, 0
    %v3547 = vsel %vm3455, %v3202, 0
    %v3550 = vsel %vm3455, %v3203, 0
    %v3553 = vsel %vm3455, %v3204, 0
    %v3556 = vsel %vm3455, %v3205, 0
    %v3559 = vsel %vm3455, %v3206, 0
    %v3562 = vsel %vm3455, %v3207, 0
    %v3565 = vsel %vm3455, %v3208, 0
    %v3568 = vsel %vm3455, %v3209, 0
    %v3571 = vsel %vm3455, %v3210, 0
    %v3574 = vsel %vm3455, %v3211, 0
    %v3577 = vsel %vm3455, %v3212, 0
    %v3580 = vsel %vm3455, %v3213, 0
    %v3583 = vsel %vm3455, %v3214, 0
    %v3586 = vsel %vm3455, %v3215, 0
    %v3589 = vsel %vm3455, %v3216, 0
    %v3592 = vsel %vm3455, %v3217, 0
    %v3595 = vsel %vm3455, %v3218, 0
    %3597 = vmatprep.subr.mxu0 0.0
    %3598 = vmatpush1.xpose.msra.mxu0 %v3460
    %3599 = vmatprep.subr.mxu0 0.0
    %3600 = vmatpush1.xpose.msra.mxu0 %v3463
    %3601 = vmatprep.subr.mxu0 0.0
    %3602 = vmatpush1.xpose.msra.mxu0 %v3466
    %3603 = vmatprep.subr.mxu0 0.0
    %3604 = vmatpush1.xpose.msra.mxu0 %v3469
    %3605 = vmatprep.subr.mxu0 0.0
    %3606 = vmatpush1.xpose.msra.mxu0 %v3472
    %3607 = vmatprep.subr.mxu0 0.0
    %3608 = vmatpush1.xpose.msra.mxu0 %v3475
    %3609 = vmatprep.subr.mxu0 0.0
    %3610 = vmatpush1.xpose.msra.mxu0 %v3478
    %3611 = vmatprep.subr.mxu0 0.0
    %3612 = vmatpush1.xpose.msra.mxu0 %v3481
    %3613 = vmatprep.subr.mxu0 0.0
    %3614 = vmatpush1.xpose.msra.mxu0 %v3484
    %3615 = vmatprep.subr.mxu0 0.0
    %3616 = vmatpush1.xpose.msra.mxu0 %v3487
    %3617 = vmatprep.subr.mxu0 0.0
    %3618 = vmatpush1.xpose.msra.mxu0 %v3490
    %3619 = vmatprep.subr.mxu0 0.0
    %3620 = vmatpush1.xpose.msra.mxu0 %v3493
    %3621 = vmatprep.subr.mxu0 0.0
    %3622 = vmatpush1.xpose.msra.mxu0 %v3496
    %3623 = vmatprep.subr.mxu0 0.0
    %3624 = vmatpush1.xpose.msra.mxu0 %v3499
    %3625 = vmatprep.subr.mxu0 0.0
    %3626 = vmatpush1.xpose.msra.mxu0 %v3502
    %3627 = vmatprep.subr.mxu0 0.0
    %3628 = vmatpush1.xpose.msra.mxu0 %v3505
    %3629 = vmatprep.subr.mxu0 0.0
    %3630 = vmatpush1.xpose.msra.mxu0 %v3508
    %3631 = vmatprep.subr.mxu0 0.0
    %3632 = vmatpush1.xpose.msra.mxu0 %v3511
    %3633 = vmatprep.subr.mxu0 0.0
    %3634 = vmatpush1.xpose.msra.mxu0 %v3514
    %3635 = vmatprep.subr.mxu0 0.0
    %3636 = vmatpush1.xpose.msra.mxu0 %v3517
    %3637 = vmatprep.subr.mxu0 0.0
    %3638 = vmatpush1.xpose.msra.mxu0 %v3520
    %3639 = vmatprep.subr.mxu0 0.0
    %3640 = vmatpush1.xpose.msra.mxu0 %v3523
    %3641 = vmatprep.subr.mxu0 0.0
    %3642 = vmatpush1.xpose.msra.mxu0 %v3526
    %3643 = vmatprep.subr.mxu0 0.0
    %3644 = vmatpush1.xpose.msra.mxu0 %v3529
    %3645 = vmatprep.subr.mxu0 0.0
    %3646 = vmatpush1.xpose.msra.mxu0 %v3532
    %3647 = vmatprep.subr.mxu0 0.0
    %3648 = vmatpush1.xpose.msra.mxu0 %v3535
    %3649 = vmatprep.subr.mxu0 0.0
    %3650 = vmatpush1.xpose.msra.mxu0 %v3538
    %3651 = vmatprep.subr.mxu0 0.0
    %3652 = vmatpush1.xpose.msra.mxu0 %v3541
    %3653 = vmatprep.subr.mxu0 0.0
    %3654 = vmatpush1.xpose.msra.mxu0 %v3544
    %3655 = vmatprep.subr.mxu0 0.0
    %3656 = vmatpush1.xpose.msra.mxu0 %v3547
    %3657 = vmatprep.subr.mxu0 0.0
    %3658 = vmatpush1.xpose.msra.mxu0 %v3550
    %3659 = vmatprep.subr.mxu0 0.0
    %3660 = vmatpush1.xpose.msra.mxu0 %v3553
    %3661 = vmatprep.mubr.f32.mxu0 0.0
    %3662 = vmatmul.mubr.f32.gmra.mrb[0].mxu0 %v3457
    %v3663 = vpop.f32.mrb[0].mxu0
    %v3664 = vadd.f32 0.0, %v3663
    %v3665 = vpop.f32.mrb[0].mxu0
    %v3666 = vadd.f32 0.0, %v3665
    %3667 = vdwg.mxu0
    %3668 = vmatprep.subr.mxu0 0.0
    %3669 = vmatpush1.xpose.msra.mxu0 %v3556
    %3670 = vmatprep.subr.mxu0 0.0
    %3671 = vmatpush1.xpose.msra.mxu0 %v3559
    %3672 = vmatprep.subr.mxu0 0.0
    %3673 = vmatpush1.xpose.msra.mxu0 %v3562
    %3674 = vmatprep.subr.mxu0 0.0
    %3675 = vmatpush1.xpose.msra.mxu0 %v3565
    %3676 = vmatprep.subr.mxu0 0.0
    %3677 = vmatpush1.xpose.msra.mxu0 %v3568
    %3678 = vmatprep.subr.mxu0 0.0
    %3679 = vmatpush1.xpose.msra.mxu0 %v3571
    %3680 = vmatprep.subr.mxu0 0.0
    %3681 = vmatpush1.xpose.msra.mxu0 %v3574
    %3682 = vmatprep.subr.mxu0 0.0
    %3683 = vmatpush1.xpose.msra.mxu0 %v3577
    %3684 = vmatprep.subr.mxu0 0.0
    %3685 = vmatpush1.xpose.msra.mxu0 %v3580
    %3686 = vmatprep.subr.mxu0 0.0
    %3687 = vmatpush1.xpose.msra.mxu0 %v3583
    %3688 = vmatprep.subr.mxu0 0.0
    %3689 = vmatpush1.xpose.msra.mxu0 %v3586
    %3690 = vmatprep.subr.mxu0 0.0
    %3691 = vmatpush1.xpose.msra.mxu0 %v3589
    %3692 = vmatprep.subr.mxu0 0.0
    %3693 = vmatpush1.xpose.msra.mxu0 %v3592
    %3694 = vmatprep.subr.mxu0 0.0
    %3695 = vmatpush1.xpose.msra.mxu0 %v3595
    %3696 = vmatprep.subr.mxu0 0.0
    %3697 = vmatpush1.xpose.msra.mxu0 0.0
    %3698 = vmatprep.subr.mxu0 0.0
    %3699 = vmatpush1.xpose.msra.mxu0 0.0
    %3700 = vmatprep.subr.mxu0 0.0
    %3701 = vmatpush1.xpose.msra.mxu0 0.0
    %3702 = vmatprep.subr.mxu0 0.0
    %3703 = vmatpush1.xpose.msra.mxu0 0.0
    %3704 = vmatprep.subr.mxu0 0.0
    %3705 = vmatpush1.xpose.msra.mxu0 0.0
    %3706 = vmatprep.subr.mxu0 0.0
    %3707 = vmatpush1.xpose.msra.mxu0 0.0
    %3708 = vmatprep.subr.mxu0 0.0
    %3709 = vmatpush1.xpose.msra.mxu0 0.0
    %3710 = vmatprep.subr.mxu0 0.0
    %3711 = vmatpush1.xpose.msra.mxu0 0.0
    %3712 = vmatprep.subr.mxu0 0.0
    %3713 = vmatpush1.xpose.msra.mxu0 0.0
    %3714 = vmatprep.subr.mxu0 0.0
    %3715 = vmatpush1.xpose.msra.mxu0 0.0
    %3716 = vmatprep.subr.mxu0 0.0
    %3717 = vmatpush1.xpose.msra.mxu0 0.0
    %3718 = vmatprep.subr.mxu0 0.0
    %3719 = vmatpush1.xpose.msra.mxu0 0.0
    %3720 = vmatprep.subr.mxu0 0.0
    %3721 = vmatpush1.xpose.msra.mxu0 0.0
    %3722 = vmatprep.subr.mxu0 0.0
    %3723 = vmatpush1.xpose.msra.mxu0 0.0
    %3724 = vmatprep.subr.mxu0 0.0
    %3725 = vmatpush1.xpose.msra.mxu0 0.0
    %3726 = vmatprep.subr.mxu0 0.0
    %3727 = vmatpush1.xpose.msra.mxu0 0.0
    %3728 = vmatprep.subr.mxu0 0.0
    %3729 = vmatpush1.xpose.msra.mxu0 0.0
    %3730 = vmatprep.subr.mxu0 0.0
    %3731 = vmatpush1.xpose.msra.mxu0 0.0
    %3732 = vmatprep.mubr.f32.mxu0 0.0
    %3733 = vmatmul.mubr.f32.gmra.mrb[0].mxu0 %v3457
    %v3734 = vpop.f32.mrb[0].mxu0
    %v3735 = vadd.f32 0.0, %v3734
    %v3736 = vpop.f32.mrb[0].mxu0
    %3737 = vdwg.mxu0
    %v3738 = vlaneseq
    %v3739 = vshrl.u32 %v3738, 7
    %v3740 = vsub.s32 0, %v3739
    %v3741 = vrot.slane %v3664, %v3740
    %v3742 = vlaneseq
    %v3743 = vshrl.u32 %v3742, 7
    %v3744 = vsub.s32 0, %v3743
    %v3745 = vrot.slane %v3666, %v3744
    %v3746 = vlaneseq
    %v3747 = vshrl.u32 %v3746, 7
    %v3748 = vsub.s32 0, %v3747
    %v3749 = vrot.slane %v3735, %v3748
    %v3750 = vmul.f32 %v3037, %v3741
    %v3751 = vmul.f32 %v3039, %v3745
    %v3752 = vmul.f32 %v3121, %v3749
    %v3753 = vmul.f32 %v3041, %v3741
    %v3754 = vmul.f32 %v3043, %v3745
    %v3755 = vmul.f32 %v3124, %v3749
    %v3756 = vlaneseq
    %v3757 = vshrl.u32 %v3756, 7
    %v3758 = vsub.s32 1, %v3757
    %v3759 = vrot.slane %v3664, %v3758
    %v3760 = vlaneseq
    %v3761 = vshrl.u32 %v3760, 7
    %v3762 = vsub.s32 1, %v3761
    %v3763 = vrot.slane %v3666, %v3762
    %v3764 = vlaneseq
    %v3765 = vshrl.u32 %v3764, 7
    %v3766 = vsub.s32 1, %v3765
    %v3767 = vrot.slane %v3735, %v3766
    %v3768 = vadd.f32 %v3750, %v3759
    %v3769 = vadd.f32 %v3751, %v3763
    %v3770 = vadd.f32 %v3752, %v3767
    %v3771 = vadd.f32 %v3753, %v3759
    %v3772 = vadd.f32 %v3754, %v3763
    %v3773 = vadd.f32 %v3755, %v3767
    %v3774 = vmax.f32 %v3768, 0.0
    %v3775 = vmax.f32 %v3769, 0.0
    %v3776 = vmax.f32 %v3770, 0.0
    %v3777 = vmax.f32 %v3771, 0.0
    %v3778 = vmax.f32 %v3772, 0.0
    %v3779 = vmax.f32 %v3773, 0.0
    %v3780 = vpack.c.bf16 %v3777, %v3774
    %v3781 = vpack.c.bf16 %v3778, %v3775
    %v3782 = vpack.c.bf16 %v3779, %v3776
    %v3783 = vld [vmem:[%s10] sm:$0xff]
    %v3784 = vld [vmem:[%s10 + $0x8] sm:$0xff]
    %v3785 = vld [vmem:[%s10 + $0x10] sm:$0xff]
    %v3786 = vld [vmem:[%s10 + $0x18] sm:$0xff]
    %v3787 = vld [vmem:[%s10 + $0x20] sm:$0xff]
    %v3788 = vld [vmem:[%s10 + $0x28] sm:$0xff]
    %v3789 = vld [vmem:[%s10 + $0x30] sm:$0xff]
    %v3790 = vld [vmem:[%s10 + $0x38] sm:$0xff]
    %v3791 = vld [vmem:[%s10 + $0x40] sm:$0xff]
    %v3792 = vld [vmem:[%s10 + $0x48] sm:$0xff]
    %v3793 = vld [vmem:[%s10 + $0x50] sm:$0xff]
    %v3794 = vld [vmem:[%s10 + $0x58] sm:$0xff]
    %v3795 = vld [vmem:[%s10 + $0x60] sm:$0xff]
    %v3796 = vld [vmem:[%s10 + $0x68] sm:$0xff]
    %v3797 = vld [vmem:[%s10 + $0x70] sm:$0xff]
    %v3798 = vld [vmem:[%s10 + $0x78] sm:$0xff]
    %v3799 = vld [vmem:[%s10 + $0x80] sm:$0xff]
    %v3800 = vld [vmem:[%s10 + $0x88] sm:$0xff]
    %v3801 = vld [vmem:[%s10 + $0x90] sm:$0xff]
    %v3802 = vld [vmem:[%s10 + $0x98] sm:$0xff]
    %v3803 = vld [vmem:[%s10 + $0xa0] sm:$0xff]
    %v3804 = vld [vmem:[%s10 + $0xa8] sm:$0xff]
    %v3805 = vld [vmem:[%s10 + $0xb0] sm:$0xff]
    %v3806 = vld [vmem:[%s10 + $0xb8] sm:$0xff]
    %v3807 = vld [vmem:[%s10 + $0xc0] sm:$0xff]
    %v3808 = vld [vmem:[%s10 + $0xc8] sm:$0xff]
    %v3809 = vld [vmem:[%s10 + $0xd0] sm:$0xff]
    %v3810 = vld [vmem:[%s10 + $0xd8] sm:$0xff]
    %v3811 = vld [vmem:[%s10 + $0xe0] sm:$0xff]
    %v3812 = vld [vmem:[%s10 + $0xe8] sm:$0xff]
    %v3813 = vld [vmem:[%s10 + $0xf0] sm:$0xff]
    %v3814 = vld [vmem:[%s10 + $0xf8] sm:$0xff]
    %v3815 = vld [vmem:[%s10 + $0x100] sm:$0xff]
    %v3816 = vld [vmem:[%s10 + $0x108] sm:$0xff]
    %v3817 = vld [vmem:[%s10 + $0x110] sm:$0xff]
    %v3818 = vld [vmem:[%s10 + $0x118] sm:$0xff]
    %v3819 = vld [vmem:[%s10 + $0x120] sm:$0xff]
    %v3820 = vld [vmem:[%s10 + $0x128] sm:$0xff]
    %v3821 = vld [vmem:[%s10 + $0x130] sm:$0xff]
    %v3822 = vld [vmem:[%s10 + $0x138] sm:$0xff]
    %v3823 = vld [vmem:[%s10 + $0x140] sm:$0xff]
    %v3824 = vld [vmem:[%s10 + $0x148] sm:$0xff]
    %v3825 = vld [vmem:[%s10 + $0x150] sm:$0xff]
    %v3826 = vld [vmem:[%s10 + $0x158] sm:$0xff]
    %v3827 = vld [vmem:[%s10 + $0x160] sm:$0xff]
    %v3828 = vld [vmem:[%s10 + $0x168] sm:$0xff]
    %v3875 = vunpack.c.l.b16 %v3783
    %v3876 = vunpack.c.h.b16 %v3783
    %v3877 = vunpack.c.l.b16 %v3784
    %v3878 = vunpack.c.h.b16 %v3784
    %v3879 = vunpack.c.l.b16 %v3785
    %v3880 = vunpack.c.h.b16 %v3785
    %v3881 = vunpack.c.l.b16 %v3786
    %v3882 = vunpack.c.h.b16 %v3786
    %v3883 = vunpack.c.l.b16 %v3787
    %v3884 = vunpack.c.h.b16 %v3787
    %v3885 = vunpack.c.l.b16 %v3788
    %v3886 = vunpack.c.h.b16 %v3788
    %v3887 = vunpack.c.l.b16 %v3789
    %v3888 = vunpack.c.h.b16 %v3789
    %v3889 = vunpack.c.l.b16 %v3790
    %v3890 = vunpack.c.h.b16 %v3790
    %v3891 = vunpack.c.l.b16 %v3791
    %v3892 = vunpack.c.h.b16 %v3791
    %v3893 = vunpack.c.l.b16 %v3792
    %v3894 = vunpack.c.h.b16 %v3792
    %v3895 = vunpack.c.l.b16 %v3793
    %v3896 = vunpack.c.h.b16 %v3793
    %v3897 = vunpack.c.l.b16 %v3794
    %v3898 = vunpack.c.h.b16 %v3794
    %v3899 = vunpack.c.l.b16 %v3795
    %v3900 = vunpack.c.h.b16 %v3795
    %v3901 = vunpack.c.l.b16 %v3796
    %v3902 = vunpack.c.h.b16 %v3796
    %v3903 = vunpack.c.l.b16 %v3797
    %v3904 = vunpack.c.h.b16 %v3797
    %v3905 = vunpack.c.l.b16 %v3798
    %v3906 = vunpack.c.h.b16 %v3798
    %v3907 = vunpack.c.l.b16 %v3799
    %v3908 = vunpack.c.h.b16 %v3799
    %v3909 = vunpack.c.l.b16 %v3800
    %v3910 = vunpack.c.h.b16 %v3800
    %v3911 = vunpack.c.l.b16 %v3801
    %v3912 = vunpack.c.h.b16 %v3801
    %v3913 = vunpack.c.l.b16 %v3802
    %v3914 = vunpack.c.h.b16 %v3802
    %v3915 = vunpack.c.l.b16 %v3803
    %v3916 = vunpack.c.h.b16 %v3803
    %v3917 = vunpack.c.l.b16 %v3804
    %v3918 = vunpack.c.h.b16 %v3804
    %v3919 = vunpack.c.l.b16 %v3805
    %v3920 = vunpack.c.h.b16 %v3805
    %v3921 = vunpack.c.l.b16 %v3806
    %v3922 = vunpack.c.h.b16 %v3806
    %v3923 = vunpack.c.l.b16 %v3807
    %v3924 = vunpack.c.h.b16 %v3807
    %v3925 = vunpack.c.l.b16 %v3808
    %v3926 = vunpack.c.h.b16 %v3808
    %v3927 = vunpack.c.l.b16 %v3809
    %v3928 = vunpack.c.h.b16 %v3809
    %v3929 = vunpack.c.l.b16 %v3810
    %v3930 = vunpack.c.h.b16 %v3810
    %v3931 = vunpack.c.l.b16 %v3811
    %v3932 = vunpack.c.h.b16 %v3811
    %v3933 = vunpack.c.l.b16 %v3812
    %v3934 = vunpack.c.h.b16 %v3812
    %v3935 = vunpack.c.l.b16 %v3813
    %v3936 = vunpack.c.h.b16 %v3813
    %v3937 = vunpack.c.l.b16 %v3814
    %v3938 = vunpack.c.h.b16 %v3814
    %v3939 = vunpack.c.l.b16 %v3815
    %v3940 = vunpack.c.h.b16 %v3815
    %v3941 = vunpack.c.l.b16 %v3816
    %v3942 = vunpack.c.h.b16 %v3816
    %v3943 = vunpack.c.l.b16 %v3817
    %v3944 = vunpack.c.h.b16 %v3817
    %v3945 = vunpack.c.l.b16 %v3818
    %v3946 = vunpack.c.h.b16 %v3818
    %v3947 = vunpack.c.l.b16 %v3819
    %v3948 = vunpack.c.h.b16 %v3819
    %v3949 = vunpack.c.l.b16 %v3820
    %v3950 = vunpack.c.h.b16 %v3820
    %v3951 = vunpack.c.l.b16 %v3821
    %v3952 = vunpack.c.h.b16 %v3821
    %v3953 = vunpack.c.l.b16 %v3822
    %v3954 = vunpack.c.h.b16 %v3822
    %v3955 = vunpack.c.l.b16 %v3823
    %v3956 = vunpack.c.h.b16 %v3823
    %v3957 = vunpack.c.l.b16 %v3824
    %v3958 = vunpack.c.h.b16 %v3824
    %v3959 = vunpack.c.l.b16 %v3825
    %v3960 = vunpack.c.h.b16 %v3825
    %v3961 = vunpack.c.l.b16 %v3826
    %v3962 = vunpack.c.h.b16 %v3826
    %v3963 = vunpack.c.l.b16 %v3827
    %v3964 = vunpack.c.h.b16 %v3827
    %v3965 = vunpack.c.l.b16 %v3828
    %v3966 = vunpack.c.h.b16 %v3828
    %v3967 = vpack.c.b16 %v3877, %v3875
    %v3968 = vpack.c.b16 %v3878, %v3876
    %v3969 = vpack.c.b16 %v3881, %v3879
    %v3970 = vpack.c.b16 %v3882, %v3880
    %v3971 = vpack.c.b16 %v3885, %v3883
    %v3972 = vpack.c.b16 %v3886, %v3884
    %v3973 = vpack.c.b16 %v3889, %v3887
    %v3974 = vpack.c.b16 %v3890, %v3888
    %v3975 = vpack.c.b16 %v3893, %v3891
    %v3976 = vpack.c.b16 %v3894, %v3892
    %v3977 = vpack.c.b16 %v3897, %v3895
    %v3978 = vpack.c.b16 %v3898, %v3896
    %v3979 = vpack.c.b16 %v3901, %v3899
    %v3980 = vpack.c.b16 %v3902, %v3900
    %v3981 = vpack.c.b16 %v3905, %v3903
    %v3982 = vpack.c.b16 %v3906, %v3904
    %v3983 = vpack.c.b16 %v3909, %v3907
    %v3984 = vpack.c.b16 %v3910, %v3908
    %v3985 = vpack.c.b16 %v3913, %v3911
    %v3986 = vpack.c.b16 %v3914, %v3912
    %v3987 = vpack.c.b16 %v3917, %v3915
    %v3988 = vpack.c.b16 %v3918, %v3916
    %v3989 = vpack.c.b16 %v3921, %v3919
    %v3990 = vpack.c.b16 %v3922, %v3920
    %v3991 = vpack.c.b16 %v3925, %v3923
    %v3992 = vpack.c.b16 %v3926, %v3924
    %v3993 = vpack.c.b16 %v3929, %v3927
    %v3994 = vpack.c.b16 %v3930, %v3928
    %v3995 = vpack.c.b16 %v3933, %v3931
    %v3996 = vpack.c.b16 %v3934, %v3932
    %v3997 = vpack.c.b16 %v3937, %v3935
    %v3998 = vpack.c.b16 %v3938, %v3936
    %v3999 = vpack.c.b16 %v3941, %v3939
    %v4000 = vpack.c.b16 %v3942, %v3940
    %v4001 = vpack.c.b16 %v3945, %v3943
    %v4002 = vpack.c.b16 %v3946, %v3944
    %v4003 = vpack.c.b16 %v3949, %v3947
    %v4004 = vpack.c.b16 %v3950, %v3948
    %v4005 = vpack.c.b16 %v3953, %v3951
    %v4006 = vpack.c.b16 %v3954, %v3952
    %v4007 = vpack.c.b16 %v3957, %v3955
    %v4008 = vpack.c.b16 %v3958, %v3956
    %v4009 = vpack.c.b16 %v3961, %v3959
    %v4010 = vpack.c.b16 %v3962, %v3960
    %v4011 = vpack.c.b16 %v3965, %v3963
    %v4012 = vpack.c.b16 %v3966, %v3964
    %v4060 = vsel %vm3236, %v3782, 0
    %4062 = vmatprep.subr.bf16.mxu0 %v3968
    %4063 = vmatpush1.bf16.msra.mxu0 %v3967
    %4064 = vmatprep.subr.bf16.mxu0 %v3970
    %4065 = vmatpush1.bf16.msra.mxu0 %v3969
    %4066 = vmatprep.subr.bf16.mxu0 %v3972
    %4067 = vmatpush1.bf16.msra.mxu0 %v3971
    %4068 = vmatprep.subr.bf16.mxu0 %v3974
    %4069 = vmatpush1.bf16.msra.mxu0 %v3973
    %4070 = vmatprep.subr.bf16.mxu0 %v3976
    %4071 = vmatpush1.bf16.msra.mxu0 %v3975
    %4072 = vmatprep.subr.bf16.mxu0 %v3978
    %4073 = vmatpush1.bf16.msra.mxu0 %v3977
    %4074 = vmatprep.subr.bf16.mxu0 %v3980
    %4075 = vmatpush1.bf16.msra.mxu0 %v3979
    %4076 = vmatprep.subr.bf16.mxu0 %v3982
    %4077 = vmatpush1.bf16.msra.mxu0 %v3981
    %4078 = vmatprep.subr.bf16.mxu0 %v3984
    %4079 = vmatpush1.bf16.msra.mxu0 %v3983
    %4080 = vmatprep.subr.bf16.mxu0 %v3986
    %4081 = vmatpush1.bf16.msra.mxu0 %v3985
    %4082 = vmatprep.subr.bf16.mxu0 %v3988
    %4083 = vmatpush1.bf16.msra.mxu0 %v3987
    %4084 = vmatprep.subr.bf16.mxu0 %v3990
    %4085 = vmatpush1.bf16.msra.mxu0 %v3989
    %4086 = vmatprep.subr.bf16.mxu0 %v3992
    %4087 = vmatpush1.bf16.msra.mxu0 %v3991
    %4088 = vmatprep.subr.bf16.mxu0 %v3994
    %4089 = vmatpush1.bf16.msra.mxu0 %v3993
    %4090 = vmatprep.subr.bf16.mxu0 %v3996
    %4091 = vmatpush1.bf16.msra.mxu0 %v3995
    %4092 = vmatprep.subr.bf16.mxu0 %v3998
    %4093 = vmatpush1.bf16.msra.mxu0 %v3997
    %4094 = vmatprep.mubr.bf16.mxu0 %v3781
    %4095 = vmatmul.mubr.bf16.gmra.mrb[0].mxu0 %v3780
    %v4096 = vpop.f32.mrb[0].mxu0
    %v4097 = vadd.f32 0.0, %v4096
    %v4098 = vpop.f32.mrb[0].mxu0
    %v4099 = vadd.f32 0.0, %v4098
    %v4100 = vpop.f32.mrb[0].mxu0
    %v4101 = vadd.f32 0.0, %v4100
    %v4102 = vpop.f32.mrb[0].mxu0
    %v4103 = vadd.f32 0.0, %v4102
    %4104 = vdwg.mxu0
    %4105 = vmatprep.subr.bf16.mxu0 %v4000
    %4106 = vmatpush1.bf16.msra.mxu0 %v3999
    %4107 = vmatprep.subr.bf16.mxu0 %v4002
    %4108 = vmatpush1.bf16.msra.mxu0 %v4001
    %4109 = vmatprep.subr.bf16.mxu0 %v4004
    %4110 = vmatpush1.bf16.msra.mxu0 %v4003
    %4111 = vmatprep.subr.bf16.mxu0 %v4006
    %4112 = vmatpush1.bf16.msra.mxu0 %v4005
    %4113 = vmatprep.subr.bf16.mxu0 %v4008
    %4114 = vmatpush1.bf16.msra.mxu0 %v4007
    %4115 = vmatprep.subr.bf16.mxu0 %v4010
    %4116 = vmatpush1.bf16.msra.mxu0 %v4009
    %4117 = vmatprep.subr.bf16.mxu0 %v4012
    %4118 = vmatpush1.bf16.msra.mxu0 %v4011
    %4119 = vmatprep.subr.bf16.mxu0 0
    %4120 = vmatpush1.bf16.msra.mxu0 0
    %4121 = vmatprep.subr.bf16.mxu0 0
    %4122 = vmatpush1.bf16.msra.mxu0 0
    %4123 = vmatprep.subr.bf16.mxu0 0
    %4124 = vmatpush1.bf16.msra.mxu0 0
    %4125 = vmatprep.subr.bf16.mxu0 0
    %4126 = vmatpush1.bf16.msra.mxu0 0
    %4127 = vmatprep.subr.bf16.mxu0 0
    %4128 = vmatpush1.bf16.msra.mxu0 0
    %4129 = vmatprep.subr.bf16.mxu0 0
    %4130 = vmatpush1.bf16.msra.mxu0 0
    %4131 = vmatprep.subr.bf16.mxu0 0
    %4132 = vmatpush1.bf16.msra.mxu0 0
    %4133 = vmatprep.subr.bf16.mxu0 0
    %4134 = vmatpush1.bf16.msra.mxu0 0
    %4135 = vmatprep.subr.bf16.mxu0 0
    %4136 = vmatpush1.bf16.msra.mxu0 0
    %4137 = vmatprep.mubr.bf16.mxu0 0
    %4138 = vmatmul.mubr.bf16.gmra.mrb[0].mxu0 %v4060
    %v4139 = vpop.f32.mrb[0].mxu0
    %v4140 = vadd.f32 %v4097, %v4139
    %v4141 = vpop.f32.mrb[0].mxu0
    %v4142 = vadd.f32 %v4099, %v4141
    %v4143 = vpop.f32.mrb[0].mxu0
    %v4144 = vadd.f32 %v4101, %v4143
    %v4145 = vpop.f32.mrb[0].mxu0
    %v4146 = vadd.f32 %v4103, %v4145
    %4147 = vdwg.mxu0
    %v4148 = vld [vmem:[%s11] sm:$0xf]
    %v4149 = vld [vmem:[%s11 + $0x4] sm:$0xf]
    %v4150 = vld [vmem:[%s11 + $0x8] sm:$0xf]
    %v4151 = vld [vmem:[%s11 + $0xc] sm:$0xf]
    %v4152 = vld [vmem:[%s11 + $0x10] sm:$0xf]
    %v4153 = vld [vmem:[%s11 + $0x14] sm:$0xf]
    %v4154 = vld [vmem:[%s11 + $0x18] sm:$0xf]
    %v4155 = vld [vmem:[%s11 + $0x1c] sm:$0xf]
    %v4156 = vld [vmem:[%s11 + $0x20] sm:$0xf]
    %v4157 = vld [vmem:[%s11 + $0x24] sm:$0xf]
    %v4158 = vld [vmem:[%s11 + $0x28] sm:$0xf]
    %v4159 = vld [vmem:[%s11 + $0x2c] sm:$0xf]
    %v4160 = vld [vmem:[%s11 + $0x30] sm:$0xf]
    %v4161 = vld [vmem:[%s11 + $0x34] sm:$0xf]
    %v4162 = vld [vmem:[%s11 + $0x38] sm:$0xf]
    %v4163 = vld [vmem:[%s11 + $0x3c] sm:$0xf]
    %v4164 = vld [vmem:[%s11 + $0x40] sm:$0xf]
    %v4165 = vld [vmem:[%s11 + $0x44] sm:$0xf]
    %v4166 = vld [vmem:[%s11 + $0x48] sm:$0xf]
    %v4167 = vld [vmem:[%s11 + $0x4c] sm:$0xf]
    %v4168 = vld [vmem:[%s11 + $0x50] sm:$0xf]
    %v4169 = vld [vmem:[%s11 + $0x54] sm:$0xf]
    %v4170 = vld [vmem:[%s11 + $0x58] sm:$0xf]
    %v4171 = vld [vmem:[%s11 + $0x5c] sm:$0xf]
    %v4172 = vld [vmem:[%s11 + $0x60] sm:$0xf]
    %v4173 = vld [vmem:[%s11 + $0x64] sm:$0xf]
    %v4174 = vld [vmem:[%s11 + $0x68] sm:$0xf]
    %v4175 = vld [vmem:[%s11 + $0x6c] sm:$0xf]
    %v4176 = vld [vmem:[%s11 + $0x70] sm:$0xf]
    %v4177 = vld [vmem:[%s11 + $0x74] sm:$0xf]
    %v4178 = vld [vmem:[%s11 + $0x78] sm:$0xf]
    %v4179 = vld [vmem:[%s11 + $0x7c] sm:$0xf]
    %v4180 = vunpack.c.l.bf16 %v4148
    %v4181 = vunpack.c.l.bf16 %v4149
    %v4182 = vunpack.c.l.bf16 %v4150
    %v4183 = vunpack.c.l.bf16 %v4151
    %v4184 = vunpack.c.l.bf16 %v4152
    %v4185 = vunpack.c.l.bf16 %v4153
    %v4186 = vunpack.c.l.bf16 %v4154
    %v4187 = vunpack.c.l.bf16 %v4155
    %v4188 = vunpack.c.l.bf16 %v4156
    %v4189 = vunpack.c.l.bf16 %v4157
    %v4190 = vunpack.c.l.bf16 %v4158
    %v4191 = vunpack.c.l.bf16 %v4159
    %v4192 = vunpack.c.l.bf16 %v4160
    %v4193 = vunpack.c.l.bf16 %v4161
    %v4194 = vunpack.c.l.bf16 %v4162
    %v4195 = vunpack.c.l.bf16 %v4163
    %v4196 = vunpack.c.l.bf16 %v4164
    %v4197 = vunpack.c.l.bf16 %v4165
    %v4198 = vunpack.c.l.bf16 %v4166
    %v4199 = vunpack.c.l.bf16 %v4167
    %v4200 = vunpack.c.l.bf16 %v4168
    %v4201 = vunpack.c.l.bf16 %v4169
    %v4202 = vunpack.c.l.bf16 %v4170
    %v4203 = vunpack.c.l.bf16 %v4171
    %v4204 = vunpack.c.l.bf16 %v4172
    %v4205 = vunpack.c.l.bf16 %v4173
    %v4206 = vunpack.c.l.bf16 %v4174
    %v4207 = vunpack.c.l.bf16 %v4175
    %v4208 = vunpack.c.l.bf16 %v4176
    %v4209 = vunpack.c.l.bf16 %v4177
    %v4210 = vunpack.c.l.bf16 %v4178
    %v4211 = vunpack.c.l.bf16 %v4179
    %v4212 = vld [vmem:[#allocation4] sm:$0x3]
    %v4213 = vsel %vm455, %v4144, 0.0
    %v4214 = vadd.f32 %v4140, %v4213
    %v4215 = vrot.slane %v4214, 4
    %v4216 = vadd.f32 %v4214, %v4215
    %v4217 = vrot.slane %v4216, 2
    %v4218 = vadd.f32 %v4216, %v4217
    %v4219 = vrot.slane %v4218, 1
    %v4220 = vadd.f32 %v4218, %v4219
    %v4221 = vsel %vm455, %v4146, 0.0
    %v4222 = vadd.f32 %v4142, %v4221
    %v4223 = vrot.slane %v4222, 4
    %v4224 = vadd.f32 %v4222, %v4223
    %v4225 = vrot.slane %v4224, 2
    %v4226 = vadd.f32 %v4224, %v4225
    %v4227 = vrot.slane %v4226, 1
    %v4228 = vadd.f32 %v4226, %v4227
    %v4229 = vmul.f32 %v4140, %v4140
    %v4230 = vmul.f32 %v4142, %v4142
    %v4231 = vmul.f32 %v4144, %v4144
    %v4232 = vmul.f32 %v4146, %v4146
    %v4233 = vsel %vm455, %v4231, 0.0
    %v4234 = vadd.f32 %v4229, %v4233
    %v4235 = vrot.slane %v4234, 4
    %v4236 = vadd.f32 %v4234, %v4235
    %v4237 = vrot.slane %v4236, 2
    %v4238 = vadd.f32 %v4236, %v4237
    %v4239 = vrot.slane %v4238, 1
    %v4240 = vadd.f32 %v4238, %v4239
    %v4241 = vsel %vm455, %v4232, 0.0
    %v4242 = vadd.f32 %v4230, %v4241
    %v4243 = vrot.slane %v4242, 4
    %v4244 = vadd.f32 %v4242, %v4243
    %v4245 = vrot.slane %v4244, 2
    %v4246 = vadd.f32 %v4244, %v4245
    %v4247 = vrot.slane %v4246, 1
    %v4248 = vadd.f32 %v4246, %v4247
    %v4249 = vsel %vm514, 1.0, %v4220
    %v4250 = vsel %vm514, 1.0, %v4228
    %v4251 = vsel %vm455, %v4249, %v4240
    %v4252 = vsel %vm455, %v4250, %v4248
    %4253 = vmatprep.subr.mxu0 0.0
    %4254 = vmatpush1.msra.mxu0 %v4180
    %4255 = vmatprep.subr.mxu0 0.0
    %4256 = vmatpush1.msra.mxu0 %v4181
    %4257 = vmatprep.subr.mxu0 0.0
    %4258 = vmatpush1.msra.mxu0 %v4182
    %4259 = vmatprep.subr.mxu0 0.0
    %4260 = vmatpush1.msra.mxu0 %v4183
    %4261 = vmatprep.subr.mxu0 0.0
    %4262 = vmatpush1.msra.mxu0 %v4184
    %4263 = vmatprep.subr.mxu0 0.0
    %4264 = vmatpush1.msra.mxu0 %v4185
    %4265 = vmatprep.subr.mxu0 0.0
    %4266 = vmatpush1.msra.mxu0 %v4186
    %4267 = vmatprep.subr.mxu0 0.0
    %4268 = vmatpush1.msra.mxu0 %v4187
    %4269 = vmatprep.subr.mxu0 0.0
    %4270 = vmatpush1.msra.mxu0 %v4188
    %4271 = vmatprep.subr.mxu0 0.0
    %4272 = vmatpush1.msra.mxu0 %v4189
    %4273 = vmatprep.subr.mxu0 0.0
    %4274 = vmatpush1.msra.mxu0 %v4190
    %4275 = vmatprep.subr.mxu0 0.0
    %4276 = vmatpush1.msra.mxu0 %v4191
    %4277 = vmatprep.subr.mxu0 0.0
    %4278 = vmatpush1.msra.mxu0 %v4192
    %4279 = vmatprep.subr.mxu0 0.0
    %4280 = vmatpush1.msra.mxu0 %v4193
    %4281 = vmatprep.subr.mxu0 0.0
    %4282 = vmatpush1.msra.mxu0 %v4194
    %4283 = vmatprep.subr.mxu0 0.0
    %4284 = vmatpush1.msra.mxu0 %v4195
    %4285 = vmatprep.subr.mxu0 0.0
    %4286 = vmatpush1.msra.mxu0 %v4196
    %4287 = vmatprep.subr.mxu0 0.0
    %4288 = vmatpush1.msra.mxu0 %v4197
    %4289 = vmatprep.subr.mxu0 0.0
    %4290 = vmatpush1.msra.mxu0 %v4198
    %4291 = vmatprep.subr.mxu0 0.0
    %4292 = vmatpush1.msra.mxu0 %v4199
    %4293 = vmatprep.subr.mxu0 0.0
    %4294 = vmatpush1.msra.mxu0 %v4200
    %4295 = vmatprep.subr.mxu0 0.0
    %4296 = vmatpush1.msra.mxu0 %v4201
    %4297 = vmatprep.subr.mxu0 0.0
    %4298 = vmatpush1.msra.mxu0 %v4202
    %4299 = vmatprep.subr.mxu0 0.0
    %4300 = vmatpush1.msra.mxu0 %v4203
    %4301 = vmatprep.subr.mxu0 0.0
    %4302 = vmatpush1.msra.mxu0 %v4204
    %4303 = vmatprep.subr.mxu0 0.0
    %4304 = vmatpush1.msra.mxu0 %v4205
    %4305 = vmatprep.subr.mxu0 0.0
    %4306 = vmatpush1.msra.mxu0 %v4206
    %4307 = vmatprep.subr.mxu0 0.0
    %4308 = vmatpush1.msra.mxu0 %v4207
    %4309 = vmatprep.subr.mxu0 0.0
    %4310 = vmatpush1.msra.mxu0 %v4208
    %4311 = vmatprep.subr.mxu0 0.0
    %4312 = vmatpush1.msra.mxu0 %v4209
    %4313 = vmatprep.subr.mxu0 0.0
    %4314 = vmatpush1.msra.mxu0 %v4210
    %4315 = vmatprep.subr.mxu0 0.0
    %4316 = vmatpush1.msra.mxu0 %v4211
    %4317 = vmatprep.mubr.f32.mxu0 %v4252
    %4318 = vmatmul.mubr.f32.gmra.mrb[0].mxu0 %v4251
    %v4319 = vpop.f32.mrb[0].mxu0
    %v4320 = vadd.f32 0.0, %v4319
    %v4321 = vpop.f32.mrb[0].mxu0
    %4322 = vdwg.mxu0
    %v4323 = vmul.f32 %v4320, 10.0
    %v4325 = vrot.slane %v4323, 7
    %v4327 = vrcp.pop %v4325
    %v4328 = vmul.f32 %v4320, %v4327
    %v4329 = vrot.slane %v4323, 6
    %v4331 = vrcp.pop %v4329
    %v4332 = vmul.f32 %v4320, %v4331
    %v4333 = vmul.f32 %v4328, %v4328
    %v4335 = vrot.slane %v4333, 7
    %v4337 = vsub.f32 %v4332, %v4335
    %v4338 = vmax.f32 %v4337, 0.0
    %v4339 = vadd.f32 %v4338, 1e-05
    %v4340 = vrsqrt.pop %v4339
    %v4342 = vrot.slane %v4340, 2
    %v4344 = vmul.f32 %v4212, %v4342
    %v4346 = vrot.slane %v4344, 7
    %v4348 = vmul.f32 %v4328, %v4346
    %v4349 = vsub.f32 %v4212, %v4348
    %v4350 = vsel %vm514, %v4344, %v4349
    %vm4351 = vcmask 64512
    %v4353 = vsel %vm4351, %v4350, 0
    %v4356 = vsel %vm4351, %v4180, 0
    %v4359 = vsel %vm4351, %v4181, 0
    %v4362 = vsel %vm4351, %v4182, 0
    %v4365 = vsel %vm4351, %v4183, 0
    %v4368 = vsel %vm4351, %v4184, 0
    %v4371 = vsel %vm4351, %v4185, 0
    %v4374 = vsel %vm4351, %v4186, 0
    %v4377 = vsel %vm4351, %v4187, 0
    %v4380 = vsel %vm4351, %v4188, 0
    %v4383 = vsel %vm4351, %v4189, 0
    %v4386 = vsel %vm4351, %v4190, 0
    %v4389 = vsel %vm4351, %v4191, 0
    %v4392 = vsel %vm4351, %v4192, 0
    %v4395 = vsel %vm4351, %v4193, 0
    %v4398 = vsel %vm4351, %v4194, 0
    %v4401 = vsel %vm4351, %v4195, 0
    %v4404 = vsel %vm4351, %v4196, 0
    %v4407 = vsel %vm4351, %v4197, 0
    %v4410 = vsel %vm4351, %v4198, 0
    %v4413 = vsel %vm4351, %v4199, 0
    %v4416 = vsel %vm4351, %v4200, 0
    %v4419 = vsel %vm4351, %v4201, 0
    %v4422 = vsel %vm4351, %v4202, 0
    %v4425 = vsel %vm4351, %v4203, 0
    %v4428 = vsel %vm4351, %v4204, 0
    %v4431 = vsel %vm4351, %v4205, 0
    %v4434 = vsel %vm4351, %v4206, 0
    %v4437 = vsel %vm4351, %v4207, 0
    %v4440 = vsel %vm4351, %v4208, 0
    %v4443 = vsel %vm4351, %v4209, 0
    %v4446 = vsel %vm4351, %v4210, 0
    %v4449 = vsel %vm4351, %v4211, 0
    %4451 = vmatprep.subr.mxu0 0.0
    %4452 = vmatpush1.xpose.msra.mxu0 %v4356
    %4453 = vmatprep.subr.mxu0 0.0
    %4454 = vmatpush1.xpose.msra.mxu0 %v4359
    %4455 = vmatprep.subr.mxu0 0.0
    %4456 = vmatpush1.xpose.msra.mxu0 %v4362
    %4457 = vmatprep.subr.mxu0 0.0
    %4458 = vmatpush1.xpose.msra.mxu0 %v4365
    %4459 = vmatprep.subr.mxu0 0.0
    %4460 = vmatpush1.xpose.msra.mxu0 %v4368
    %4461 = vmatprep.subr.mxu0 0.0
    %4462 = vmatpush1.xpose.msra.mxu0 %v4371
    %4463 = vmatprep.subr.mxu0 0.0
    %4464 = vmatpush1.xpose.msra.mxu0 %v4374
    %4465 = vmatprep.subr.mxu0 0.0
    %4466 = vmatpush1.xpose.msra.mxu0 %v4377
    %4467 = vmatprep.subr.mxu0 0.0
    %4468 = vmatpush1.xpose.msra.mxu0 %v4380
    %4469 = vmatprep.subr.mxu0 0.0
    %4470 = vmatpush1.xpose.msra.mxu0 %v4383
    %4471 = vmatprep.subr.mxu0 0.0
    %4472 = vmatpush1.xpose.msra.mxu0 %v4386
    %4473 = vmatprep.subr.mxu0 0.0
    %4474 = vmatpush1.xpose.msra.mxu0 %v4389
    %4475 = vmatprep.subr.mxu0 0.0
    %4476 = vmatpush1.xpose.msra.mxu0 %v4392
    %4477 = vmatprep.subr.mxu0 0.0
    %4478 = vmatpush1.xpose.msra.mxu0 %v4395
    %4479 = vmatprep.subr.mxu0 0.0
    %4480 = vmatpush1.xpose.msra.mxu0 %v4398
    %4481 = vmatprep.subr.mxu0 0.0
    %4482 = vmatpush1.xpose.msra.mxu0 %v4401
    %4483 = vmatprep.subr.mxu0 0.0
    %4484 = vmatpush1.xpose.msra.mxu0 %v4404
    %4485 = vmatprep.subr.mxu0 0.0
    %4486 = vmatpush1.xpose.msra.mxu0 %v4407
    %4487 = vmatprep.subr.mxu0 0.0
    %4488 = vmatpush1.xpose.msra.mxu0 %v4410
    %4489 = vmatprep.subr.mxu0 0.0
    %4490 = vmatpush1.xpose.msra.mxu0 %v4413
    %4491 = vmatprep.subr.mxu0 0.0
    %4492 = vmatpush1.xpose.msra.mxu0 %v4416
    %4493 = vmatprep.subr.mxu0 0.0
    %4494 = vmatpush1.xpose.msra.mxu0 %v4419
    %4495 = vmatprep.subr.mxu0 0.0
    %4496 = vmatpush1.xpose.msra.mxu0 %v4422
    %4497 = vmatprep.subr.mxu0 0.0
    %4498 = vmatpush1.xpose.msra.mxu0 %v4425
    %4499 = vmatprep.subr.mxu0 0.0
    %4500 = vmatpush1.xpose.msra.mxu0 %v4428
    %4501 = vmatprep.subr.mxu0 0.0
    %4502 = vmatpush1.xpose.msra.mxu0 %v4431
    %4503 = vmatprep.subr.mxu0 0.0
    %4504 = vmatpush1.xpose.msra.mxu0 %v4434
    %4505 = vmatprep.subr.mxu0 0.0
    %4506 = vmatpush1.xpose.msra.mxu0 %v4437
    %4507 = vmatprep.subr.mxu0 0.0
    %4508 = vmatpush1.xpose.msra.mxu0 %v4440
    %4509 = vmatprep.subr.mxu0 0.0
    %4510 = vmatpush1.xpose.msra.mxu0 %v4443
    %4511 = vmatprep.subr.mxu0 0.0
    %4512 = vmatpush1.xpose.msra.mxu0 %v4446
    %4513 = vmatprep.subr.mxu0 0.0
    %4514 = vmatpush1.xpose.msra.mxu0 %v4449
    %4515 = vmatprep.mubr.f32.mxu0 0.0
    %4516 = vmatmul.mubr.f32.gmra.mrb[0].mxu0 %v4353
    %v4517 = vpop.f32.mrb[0].mxu0
    %v4518 = vadd.f32 0.0, %v4517
    %v4519 = vpop.f32.mrb[0].mxu0
    %v4520 = vadd.f32 0.0, %v4519
    %4521 = vdwg.mxu0
    %v4522 = vlaneseq
    %v4523 = vshrl.u32 %v4522, 7
    %v4524 = vsub.s32 0, %v4523
    %v4525 = vrot.slane %v4518, %v4524
    %v4526 = vlaneseq
    %v4527 = vshrl.u32 %v4526, 7
    %v4528 = vsub.s32 0, %v4527
    %v4529 = vrot.slane %v4520, %v4528
    %v4530 = vmul.f32 %v4140, %v4525
    %v4531 = vmul.f32 %v4142, %v4529
    %v4532 = vmul.f32 %v4144, %v4525
    %v4533 = vmul.f32 %v4146, %v4529
    %v4534 = vlaneseq
    %v4535 = vshrl.u32 %v4534, 7
    %v4536 = vsub.s32 1, %v4535
    %v4537 = vrot.slane %v4518, %v4536
    %v4538 = vlaneseq
    %v4539 = vshrl.u32 %v4538, 7
    %v4540 = vsub.s32 1, %v4539
    %v4541 = vrot.slane %v4520, %v4540
    %v4542 = vadd.f32 %v4530, %v4537
    %v4543 = vadd.f32 %v4531, %v4541
    %v4544 = vadd.f32 %v4532, %v4537
    %v4545 = vadd.f32 %v4533, %v4541
    %v4546 = vmax.f32 %v4542, 0.0
    %v4547 = vmax.f32 %v4543, 0.0
    %v4548 = vmax.f32 %v4544, 0.0
    %v4549 = vmax.f32 %v4545, 0.0
    %v4550 = vpack.c.bf16 %v4548, %v4546
    %v4551 = vpack.c.bf16 %v4549, %v4547
    %v4552 = vld [vmem:[#allocation6] sm:$0xf]
    %v4553 = vld [vmem:[#allocation6 + $0x4] sm:$0xf]
    %v4554 = vld [vmem:[#allocation6 + $0x8] sm:$0xf]
    %v4555 = vld [vmem:[#allocation6 + $0xc] sm:$0xf]
    %v4556 = vld [vmem:[#allocation6 + $0x10] sm:$0xf]
    %v4557 = vld [vmem:[#allocation6 + $0x14] sm:$0xf]
    %v4558 = vld [vmem:[#allocation6 + $0x18] sm:$0xf]
    %v4559 = vld [vmem:[#allocation6 + $0x1c] sm:$0xf]
    %v4560 = vld [vmem:[#allocation6 + $0x20] sm:$0xf]
    %v4561 = vld [vmem:[#allocation6 + $0x24] sm:$0xf]
    %v4562 = vld [vmem:[#allocation6 + $0x28] sm:$0xf]
    %v4563 = vld [vmem:[#allocation6 + $0x2c] sm:$0xf]
    %v4564 = vld [vmem:[#allocation6 + $0x30] sm:$0xf]
    %v4565 = vld [vmem:[#allocation6 + $0x34] sm:$0xf]
    %v4566 = vld [vmem:[#allocation6 + $0x38] sm:$0xf]
    %v4567 = vld [vmem:[#allocation6 + $0x3c] sm:$0xf]
    %v4568 = vld [vmem:[#allocation6 + $0x40] sm:$0xf]
    %v4569 = vld [vmem:[#allocation6 + $0x44] sm:$0xf]
    %v4570 = vld [vmem:[#allocation6 + $0x48] sm:$0xf]
    %v4571 = vld [vmem:[#allocation6 + $0x4c] sm:$0xf]
    %v4572 = vld [vmem:[#allocation6 + $0x50] sm:$0xf]
    %v4573 = vld [vmem:[#allocation6 + $0x54] sm:$0xf]
    %v4574 = vld [vmem:[#allocation6 + $0x58] sm:$0xf]
    %v4575 = vld [vmem:[#allocation6 + $0x5c] sm:$0xf]
    %v4576 = vld [vmem:[#allocation6 + $0x60] sm:$0xf]
    %v4577 = vld [vmem:[#allocation6 + $0x64] sm:$0xf]
    %v4578 = vld [vmem:[#allocation6 + $0x68] sm:$0xf]
    %v4579 = vld [vmem:[#allocation6 + $0x6c] sm:$0xf]
    %v4580 = vld [vmem:[#allocation6 + $0x70] sm:$0xf]
    %v4581 = vld [vmem:[#allocation6 + $0x74] sm:$0xf]
    %v4582 = vld [vmem:[#allocation6 + $0x78] sm:$0xf]
    %v4583 = vld [vmem:[#allocation6 + $0x7c] sm:$0xf]
    %v4616 = vunpack.c.l.b16 %v4552
    %v4617 = vunpack.c.l.b16 %v4553
    %v4618 = vunpack.c.l.b16 %v4554
    %v4619 = vunpack.c.l.b16 %v4555
    %v4620 = vunpack.c.l.b16 %v4556
    %v4621 = vunpack.c.l.b16 %v4557
    %v4622 = vunpack.c.l.b16 %v4558
    %v4623 = vunpack.c.l.b16 %v4559
    %v4624 = vunpack.c.l.b16 %v4560
    %v4625 = vunpack.c.l.b16 %v4561
    %v4626 = vunpack.c.l.b16 %v4562
    %v4627 = vunpack.c.l.b16 %v4563
    %v4628 = vunpack.c.l.b16 %v4564
    %v4629 = vunpack.c.l.b16 %v4565
    %v4630 = vunpack.c.l.b16 %v4566
    %v4631 = vunpack.c.l.b16 %v4567
    %v4632 = vunpack.c.l.b16 %v4568
    %v4633 = vunpack.c.l.b16 %v4569
    %v4634 = vunpack.c.l.b16 %v4570
    %v4635 = vunpack.c.l.b16 %v4571
    %v4636 = vunpack.c.l.b16 %v4572
    %v4637 = vunpack.c.l.b16 %v4573
    %v4638 = vunpack.c.l.b16 %v4574
    %v4639 = vunpack.c.l.b16 %v4575
    %v4640 = vunpack.c.l.b16 %v4576
    %v4641 = vunpack.c.l.b16 %v4577
    %v4642 = vunpack.c.l.b16 %v4578
    %v4643 = vunpack.c.l.b16 %v4579
    %v4644 = vunpack.c.l.b16 %v4580
    %v4645 = vunpack.c.l.b16 %v4581
    %v4646 = vunpack.c.l.b16 %v4582
    %v4647 = vunpack.c.l.b16 %v4583
    %v4648 = vpack.c.b16 %v4617, %v4616
    %v4649 = vpack.c.b16 %v4619, %v4618
    %v4650 = vpack.c.b16 %v4621, %v4620
    %v4651 = vpack.c.b16 %v4623, %v4622
    %v4652 = vpack.c.b16 %v4625, %v4624
    %v4653 = vpack.c.b16 %v4627, %v4626
    %v4654 = vpack.c.b16 %v4629, %v4628
    %v4655 = vpack.c.b16 %v4631, %v4630
    %v4656 = vpack.c.b16 %v4633, %v4632
    %v4657 = vpack.c.b16 %v4635, %v4634
    %v4658 = vpack.c.b16 %v4637, %v4636
    %v4659 = vpack.c.b16 %v4639, %v4638
    %v4660 = vpack.c.b16 %v4641, %v4640
    %v4661 = vpack.c.b16 %v4643, %v4642
    %v4662 = vpack.c.b16 %v4645, %v4644
    %v4663 = vpack.c.b16 %v4647, %v4646
    %4680 = vmatprep.subr.bf16.mxu0 0
    %4681 = vmatpush1.bf16.msra.mxu0 %v4648
    %4682 = vmatprep.subr.bf16.mxu0 0
    %4683 = vmatpush1.bf16.msra.mxu0 %v4649
    %4684 = vmatprep.subr.bf16.mxu0 0
    %4685 = vmatpush1.bf16.msra.mxu0 %v4650
    %4686 = vmatprep.subr.bf16.mxu0 0
    %4687 = vmatpush1.bf16.msra.mxu0 %v4651
    %4688 = vmatprep.subr.bf16.mxu0 0
    %4689 = vmatpush1.bf16.msra.mxu0 %v4652
    %4690 = vmatprep.subr.bf16.mxu0 0
    %4691 = vmatpush1.bf16.msra.mxu0 %v4653
    %4692 = vmatprep.subr.bf16.mxu0 0
    %4693 = vmatpush1.bf16.msra.mxu0 %v4654
    %4694 = vmatprep.subr.bf16.mxu0 0
    %4695 = vmatpush1.bf16.msra.mxu0 %v4655
    %4696 = vmatprep.subr.bf16.mxu0 0
    %4697 = vmatpush1.bf16.msra.mxu0 %v4656
    %4698 = vmatprep.subr.bf16.mxu0 0
    %4699 = vmatpush1.bf16.msra.mxu0 %v4657
    %4700 = vmatprep.subr.bf16.mxu0 0
    %4701 = vmatpush1.bf16.msra.mxu0 %v4658
    %4702 = vmatprep.subr.bf16.mxu0 0
    %4703 = vmatpush1.bf16.msra.mxu0 %v4659
    %4704 = vmatprep.subr.bf16.mxu0 0
    %4705 = vmatpush1.bf16.msra.mxu0 %v4660
    %4706 = vmatprep.subr.bf16.mxu0 0
    %4707 = vmatpush1.bf16.msra.mxu0 %v4661
    %4708 = vmatprep.subr.bf16.mxu0 0
    %4709 = vmatpush1.bf16.msra.mxu0 %v4662
    %4710 = vmatprep.subr.bf16.mxu0 0
    %4711 = vmatpush1.bf16.msra.mxu0 %v4663
    %4712 = vmatprep.mubr.bf16.mxu0 %v4551
    %4713 = vmatmul.mubr.bf16.gmra.mrb[0].mxu0 %v4550
    %v4714 = vpop.f32.mrb[0].mxu0
    %v4715 = vadd.f32 0.0, %v4714
    %v4716 = vpop.f32.mrb[0].mxu0
    %v4717 = vpop.f32.mrb[0].mxu0
    %v4718 = vadd.f32 0.0, %v4717
    %v4719 = vpop.f32.mrb[0].mxu0
    %4720 = vdwg.mxu0
    %v4721 = vld [vmem:[%s14] sm:$0xf]
    %v4722 = vld [vmem:[%s14 + $0x4] sm:$0xf]
    %v4723 = vld [vmem:[%s14 + $0x8] sm:$0xf]
    %v4724 = vld [vmem:[%s14 + $0xc] sm:$0xf]
    %v4725 = vld [vmem:[%s14 + $0x10] sm:$0xf]
    %v4726 = vld [vmem:[%s14 + $0x14] sm:$0xf]
    %v4727 = vld [vmem:[%s14 + $0x18] sm:$0xf]
    %v4728 = vld [vmem:[%s14 + $0x1c] sm:$0xf]
    %v4729 = vld [vmem:[%s14 + $0x20] sm:$0xf]
    %v4730 = vld [vmem:[%s14 + $0x24] sm:$0xf]
    %v4731 = vld [vmem:[%s14 + $0x28] sm:$0xf]
    %v4732 = vld [vmem:[%s14 + $0x2c] sm:$0xf]
    %v4733 = vld [vmem:[%s14 + $0x30] sm:$0xf]
    %v4734 = vld [vmem:[%s14 + $0x34] sm:$0xf]
    %v4735 = vld [vmem:[%s14 + $0x38] sm:$0xf]
    %v4736 = vld [vmem:[%s14 + $0x3c] sm:$0xf]
    %v4737 = vunpack.c.l.bf16 %v4721
    %v4738 = vunpack.c.l.bf16 %v4722
    %v4739 = vunpack.c.l.bf16 %v4723
    %v4740 = vunpack.c.l.bf16 %v4724
    %v4741 = vunpack.c.l.bf16 %v4725
    %v4742 = vunpack.c.l.bf16 %v4726
    %v4743 = vunpack.c.l.bf16 %v4727
    %v4744 = vunpack.c.l.bf16 %v4728
    %v4745 = vunpack.c.l.bf16 %v4729
    %v4746 = vunpack.c.l.bf16 %v4730
    %v4747 = vunpack.c.l.bf16 %v4731
    %v4748 = vunpack.c.l.bf16 %v4732
    %v4749 = vunpack.c.l.bf16 %v4733
    %v4750 = vunpack.c.l.bf16 %v4734
    %v4751 = vunpack.c.l.bf16 %v4735
    %v4752 = vunpack.c.l.bf16 %v4736
    %v4753 = vld [vmem:[%s15] sm:$0x3]
    %v4754 = vsel %vm455, %v4718, 0.0
    %v4755 = vadd.f32 %v4715, %v4754
    %v4756 = vrot.slane %v4755, 4
    %v4757 = vadd.f32 %v4755, %v4756
    %v4758 = vrot.slane %v4757, 2
    %v4759 = vadd.f32 %v4757, %v4758
    %v4760 = vrot.slane %v4759, 1
    %v4761 = vadd.f32 %v4759, %v4760
    %v4762 = vmul.f32 %v4715, %v4715
    %v4763 = vmul.f32 %v4718, %v4718
    %v4764 = vsel %vm455, %v4763, 0.0
    %v4765 = vadd.f32 %v4762, %v4764
    %v4766 = vrot.slane %v4765, 4
    %v4767 = vadd.f32 %v4765, %v4766
    %v4768 = vrot.slane %v4767, 2
    %v4769 = vadd.f32 %v4767, %v4768
    %v4770 = vrot.slane %v4769, 1
    %v4771 = vadd.f32 %v4769, %v4770
    %v4772 = vsel %vm514, 1.0, %v4761
    %v4773 = vsel %vm455, %v4772, %v4771
    %4774 = vmatprep.subr.mxu0 0.0
    %4775 = vmatpush1.msra.mxu0 %v4737
    %4776 = vmatprep.subr.mxu0 0.0
    %4777 = vmatpush1.msra.mxu0 %v4738
    %4778 = vmatprep.subr.mxu0 0.0
    %4779 = vmatpush1.msra.mxu0 %v4739
    %4780 = vmatprep.subr.mxu0 0.0
    %4781 = vmatpush1.msra.mxu0 %v4740
    %4782 = vmatprep.subr.mxu0 0.0
    %4783 = vmatpush1.msra.mxu0 %v4741
    %4784 = vmatprep.subr.mxu0 0.0
    %4785 = vmatpush1.msra.mxu0 %v4742
    %4786 = vmatprep.subr.mxu0 0.0
    %4787 = vmatpush1.msra.mxu0 %v4743
    %4788 = vmatprep.subr.mxu0 0.0
    %4789 = vmatpush1.msra.mxu0 %v4744
    %4790 = vmatprep.subr.mxu0 0.0
    %4791 = vmatpush1.msra.mxu0 %v4745
    %4792 = vmatprep.subr.mxu0 0.0
    %4793 = vmatpush1.msra.mxu0 %v4746
    %4794 = vmatprep.subr.mxu0 0.0
    %4795 = vmatpush1.msra.mxu0 %v4747
    %4796 = vmatprep.subr.mxu0 0.0
    %4797 = vmatpush1.msra.mxu0 %v4748
    %4798 = vmatprep.subr.mxu0 0.0
    %4799 = vmatpush1.msra.mxu0 %v4749
    %4800 = vmatprep.subr.mxu0 0.0
    %4801 = vmatpush1.msra.mxu0 %v4750
    %4802 = vmatprep.subr.mxu0 0.0
    %4803 = vmatpush1.msra.mxu0 %v4751
    %4804 = vmatprep.subr.mxu0 0.0
    %4805 = vmatpush1.msra.mxu0 %v4752
    %4806 = vmatprep.subr.mxu0 0.0
    %4807 = vmatpush1.msra.mxu0 0.0
    %4808 = vmatprep.subr.mxu0 0.0
    %4809 = vmatpush1.msra.mxu0 0.0
    %4810 = vmatprep.subr.mxu0 0.0
    %4811 = vmatpush1.msra.mxu0 0.0
    %4812 = vmatprep.subr.mxu0 0.0
    %4813 = vmatpush1.msra.mxu0 0.0
    %4814 = vmatprep.subr.mxu0 0.0
    %4815 = vmatpush1.msra.mxu0 0.0
    %4816 = vmatprep.subr.mxu0 0.0
    %4817 = vmatpush1.msra.mxu0 0.0
    %4818 = vmatprep.subr.mxu0 0.0
    %4819 = vmatpush1.msra.mxu0 0.0
    %4820 = vmatprep.subr.mxu0 0.0
    %4821 = vmatpush1.msra.mxu0 0.0
    %4822 = vmatprep.subr.mxu0 0.0
    %4823 = vmatpush1.msra.mxu0 0.0
    %4824 = vmatprep.subr.mxu0 0.0
    %4825 = vmatpush1.msra.mxu0 0.0
    %4826 = vmatprep.subr.mxu0 0.0
    %4827 = vmatpush1.msra.mxu0 0.0
    %4828 = vmatprep.subr.mxu0 0.0
    %4829 = vmatpush1.msra.mxu0 0.0
    %4830 = vmatprep.subr.mxu0 0.0
    %4831 = vmatpush1.msra.mxu0 0.0
    %4832 = vmatprep.subr.mxu0 0.0
    %4833 = vmatpush1.msra.mxu0 0.0
    %4834 = vmatprep.subr.mxu0 0.0
    %4835 = vmatpush1.msra.mxu0 0.0
    %4836 = vmatprep.subr.mxu0 0.0
    %4837 = vmatpush1.msra.mxu0 0.0
    %4838 = vmatprep.mubr.f32.mxu0 0.0
    %4839 = vmatmul.mubr.f32.gmra.mrb[0].mxu0 %v4773
    %v4840 = vpop.f32.mrb[0].mxu0
    %v4841 = vadd.f32 0.0, %v4840
    %v4842 = vpop.f32.mrb[0].mxu0
    %4843 = vdwg.mxu0
    %v4844 = vmul.f32 %v4841, 10.0
    %v4846 = vrot.slane %v4844, 7
    %v4848 = vrcp.pop %v4846
    %v4849 = vmul.f32 %v4841, %v4848
    %v4850 = vrot.slane %v4844, 6
    %v4852 = vrcp.pop %v4850
    %v4853 = vmul.f32 %v4841, %v4852
    %v4854 = vmul.f32 %v4849, %v4849
    %v4856 = vrot.slane %v4854, 7
    %v4858 = vsub.f32 %v4853, %v4856
    %v4859 = vmax.f32 %v4858, 0.0
    %v4860 = vadd.f32 %v4859, 1e-05
    %v4861 = vrsqrt.pop %v4860
    %v4863 = vrot.slane %v4861, 2
    %v4865 = vmul.f32 %v4753, %v4863
    %v4867 = vrot.slane %v4865, 7
    %v4869 = vmul.f32 %v4849, %v4867
    %v4870 = vsub.f32 %v4753, %v4869
    %v4871 = vsel %vm514, %v4865, %v4870
    %vm4872 = vcmask 7168
    %v4874 = vsel %vm4872, %v4871, 0
    %v4877 = vsel %vm4872, %v4737, 0
    %v4880 = vsel %vm4872, %v4738, 0
    %v4883 = vsel %vm4872, %v4739, 0
    %v4886 = vsel %vm4872, %v4740, 0
    %v4889 = vsel %vm4872, %v4741, 0
    %v4892 = vsel %vm4872, %v4742, 0
    %v4895 = vsel %vm4872, %v4743, 0
    %v4898 = vsel %vm4872, %v4744, 0
    %v4901 = vsel %vm4872, %v4745, 0
    %v4904 = vsel %vm4872, %v4746, 0
    %v4907 = vsel %vm4872, %v4747, 0
    %v4910 = vsel %vm4872, %v4748, 0
    %v4913 = vsel %vm4872, %v4749, 0
    %v4916 = vsel %vm4872, %v4750, 0
    %v4919 = vsel %vm4872, %v4751, 0
    %v4922 = vsel %vm4872, %v4752, 0
    %4924 = vmatprep.subr.mxu0 0.0
    %4925 = vmatpush1.xpose.msra.mxu0 %v4877
    %4926 = vmatprep.subr.mxu0 0.0
    %4927 = vmatpush1.xpose.msra.mxu0 %v4880
    %4928 = vmatprep.subr.mxu0 0.0
    %4929 = vmatpush1.xpose.msra.mxu0 %v4883
    %4930 = vmatprep.subr.mxu0 0.0
    %4931 = vmatpush1.xpose.msra.mxu0 %v4886
    %4932 = vmatprep.subr.mxu0 0.0
    %4933 = vmatpush1.xpose.msra.mxu0 %v4889
    %4934 = vmatprep.subr.mxu0 0.0
    %4935 = vmatpush1.xpose.msra.mxu0 %v4892
    %4936 = vmatprep.subr.mxu0 0.0
    %4937 = vmatpush1.xpose.msra.mxu0 %v4895
    %4938 = vmatprep.subr.mxu0 0.0
    %4939 = vmatpush1.xpose.msra.mxu0 %v4898
    %4940 = vmatprep.subr.mxu0 0.0
    %4941 = vmatpush1.xpose.msra.mxu0 %v4901
    %4942 = vmatprep.subr.mxu0 0.0
    %4943 = vmatpush1.xpose.msra.mxu0 %v4904
    %4944 = vmatprep.subr.mxu0 0.0
    %4945 = vmatpush1.xpose.msra.mxu0 %v4907
    %4946 = vmatprep.subr.mxu0 0.0
    %4947 = vmatpush1.xpose.msra.mxu0 %v4910
    %4948 = vmatprep.subr.mxu0 0.0
    %4949 = vmatpush1.xpose.msra.mxu0 %v4913
    %4950 = vmatprep.subr.mxu0 0.0
    %4951 = vmatpush1.xpose.msra.mxu0 %v4916
    %4952 = vmatprep.subr.mxu0 0.0
    %4953 = vmatpush1.xpose.msra.mxu0 %v4919
    %4954 = vmatprep.subr.mxu0 0.0
    %4955 = vmatpush1.xpose.msra.mxu0 %v4922
    %4956 = vmatprep.subr.mxu0 0.0
    %4957 = vmatpush1.xpose.msra.mxu0 0.0
    %4958 = vmatprep.subr.mxu0 0.0
    %4959 = vmatpush1.xpose.msra.mxu0 0.0
    %4960 = vmatprep.subr.mxu0 0.0
    %4961 = vmatpush1.xpose.msra.mxu0 0.0
    %4962 = vmatprep.subr.mxu0 0.0
    %4963 = vmatpush1.xpose.msra.mxu0 0.0
    %4964 = vmatprep.subr.mxu0 0.0
    %4965 = vmatpush1.xpose.msra.mxu0 0.0
    %4966 = vmatprep.subr.mxu0 0.0
    %4967 = vmatpush1.xpose.msra.mxu0 0.0
    %4968 = vmatprep.subr.mxu0 0.0
    %4969 = vmatpush1.xpose.msra.mxu0 0.0
    %4970 = vmatprep.subr.mxu0 0.0
    %4971 = vmatpush1.xpose.msra.mxu0 0.0
    %4972 = vmatprep.subr.mxu0 0.0
    %4973 = vmatpush1.xpose.msra.mxu0 0.0
    %4974 = vmatprep.subr.mxu0 0.0
    %4975 = vmatpush1.xpose.msra.mxu0 0.0
    %4976 = vmatprep.subr.mxu0 0.0
    %4977 = vmatpush1.xpose.msra.mxu0 0.0
    %4978 = vmatprep.subr.mxu0 0.0
    %4979 = vmatpush1.xpose.msra.mxu0 0.0
    %4980 = vmatprep.subr.mxu0 0.0
    %4981 = vmatpush1.xpose.msra.mxu0 0.0
    %4982 = vmatprep.subr.mxu0 0.0
    %4983 = vmatpush1.xpose.msra.mxu0 0.0
    %4984 = vmatprep.subr.mxu0 0.0
    %4985 = vmatpush1.xpose.msra.mxu0 0.0
    %4986 = vmatprep.subr.mxu0 0.0
    %4987 = vmatpush1.xpose.msra.mxu0 0.0
    %4988 = vmatprep.mubr.f32.mxu0 0.0
    %4989 = vmatmul.mubr.f32.gmra.mrb[0].mxu0 %v4874
    %v4990 = vpop.f32.mrb[0].mxu0
    %v4991 = vadd.f32 0.0, %v4990
    %v4992 = vpop.f32.mrb[0].mxu0
    %4993 = vdwg.mxu0
    %v4994 = vlaneseq
    %v4995 = vshrl.u32 %v4994, 7
    %v4996 = vsub.s32 0, %v4995
    %v4997 = vrot.slane %v4991, %v4996
    %v4998 = vmul.f32 %v4715, %v4997
    %v4999 = vmul.f32 %v4718, %v4997
    %v5000 = vlaneseq
    %v5001 = vshrl.u32 %v5000, 7
    %v5002 = vsub.s32 1, %v5001
    %v5003 = vrot.slane %v4991, %v5002
    %v5004 = vadd.f32 %v4998, %v5003
    %v5005 = vadd.f32 %v4999, %v5003
    %v5006 = vmax.f32 %v5004, 0.0
    %v5007 = vmax.f32 %v5005, 0.0
    %v5008 = vtanh.pop %v5006
    %v5009 = vtanh.pop %v5007
    %5010 = vst [vmem:[%s16] sm:$0xff] %v5008
    %5011 = vst [vmem:[%s16 + $0x8] sm:$0x3] %v5009
    // Predicated region
    $region78: #{generator_forward.1} parent=1 // pred_check
      _
    $region79: #{generator_forward.1} parent=1 // pred_check_branch
      %5013 = sbr.rel (0) target = $region81
    $region80: #{generator_forward.1} parent=1 // pred_region
      _
    $region81: #{generator_forward.1} parent=1 // pred_fallthru
      _
    // Predicated region
    $region82: #{generator_forward.1} parent=1 // pred_check
      _
    $region83: #{generator_forward.1} parent=1 // pred_check_branch
      %5015 = sbr.rel (0) target = $region85
    $region84: #{generator_forward.1} parent=1 // pred_region
      _
    $region85: #{generator_forward.1} parent=1 // pred_fallthru
      _
    %5016 = vsyncpa [#allocation3], 1
    %5017 = vsyncpa [#allocation5], 1

</llo_original>
